<compile_context>
chip_gen: v7x
topology: tpu7x:2x2x1
jax: 0.10.0
libtpu: 0.0.40
codegen_flags: <defaults>
</compile_context>

<pallas_src>
import math
import functools

import jax
import jax.numpy as jnp
from jax.experimental import pallas as pl
from jax.experimental.pallas import tpu as pltpu


# ------------------------------- kernel helpers -------------------------------

def _standardize(x, eps=1e-5):
    # PyTorch nn.LayerNorm statistics: biased variance over last dim, eps=1e-5.
    mu = jnp.mean(x, axis=-1, keepdims=True)
    xc = x - mu
    var = jnp.mean(xc * xc, axis=-1, keepdims=True)
    return xc * jax.lax.rsqrt(var + eps)


def _erf(x):
    # Abramowitz & Stegun 7.1.26 rational approximation (max abs err ~1.5e-7).
    # The fp32 divide is replaced by an EUP approx reciprocal + one Newton step.
    # TODO(synk): switch to lax.erf once erf_p has a guaranteed Mosaic lowering.
    p = 0.3275911
    a1, a2, a3, a4, a5 = (0.254829592, -0.284496736, 1.421413741,
                          -1.453152027, 1.061405429)
    ax = jnp.abs(x)
    d = 1.0 + p * ax
    t = pl.reciprocal(d, approx=True)
    t = t * (2.0 - d * t)                       # Newton step -> ~fp32 accurate
    poly = ((((a5 * t + a4) * t + a3) * t + a2) * t + a1) * t
    y = 1.0 - poly * jnp.exp(-ax * ax)
    return jnp.where(x >= 0, y, -y)


def _gelu_exact(x):
    # nn.GELU() default ("none"): 0.5 * x * (1 + erf(x / sqrt(2)))
    return 0.5 * x * (1.0 + _erf(x * (1.0 / math.sqrt(2.0))))


# ------------------------------- Tmixer kernel --------------------------------

def _tmixer_kernel(xq_ref, xk_ref, xv_ref,
                   wq, wk, wv, bq, bk, bv, wo, bo, fc1, b1, fc2, b2,
                   out_ref,
                   x_acc, xkh_ref, xvh_ref,
                   *, num_heads, kv_chunk):
    """One Block (pre-LN cross-attention + MLP) for one batch item / one layer.

    grid = (B, num_layers): `x_acc` carries the query stream across the layer
    axis; `xkh_ref` / `xvh_ref` hold the layer-invariant standardized keys /
    values (bf16), computed once per batch item at layer 0.  Both LayerNorm
    affines and the 1/sqrt(hd) attention scale are pre-folded into the
    projection weights (prepare_stacked_params).
    """
    f32 = jnp.float32
    bf16 = jnp.bfloat16

    layer = pl.program_id(1)
    num_layers = pl.num_programs(1)

    Lq, C = x_acc.shape
    Lk = xkh_ref.shape[0]
    hd = C // num_heads

    # static Lk chunking (flash-style online softmax): the fp32 score matrix
    # and the projected K/V exist only per chunk -> VMEM bounded in Lk.
    chunks = []
    start = 0
    while start < Lk:
        chunks.append((start, min(start + kv_chunk, Lk)))
        start += kv_chunk

    # ---- per-batch-item prologue (layer 0 only) -------------------------------
    @pl.when(layer == 0)
    def _():
        x_acc[...] = xq_ref[0].astype(f32)
        # norm1 statistics of xk / xv are layer-invariant; cache bf16 copies.
        for (c0, c1) in chunks:
            xkh_ref[c0:c1, :] = _standardize(
                xk_ref[0, c0:c1, :].astype(f32)).astype(bf16)
            xvh_ref[c0:c1, :] = _standardize(
                xv_ref[0, c0:c1, :].astype(f32)).astype(bf16)

    x = x_acc[...]                                           # (Lq, C) fp32

    # ---- attention branch -----------------------------------------------------
    # ln1 affine + 1/sqrt(hd) are folded into wq/bq, so the projection input is
    # just the standardized query; full-width (C x C) bf16 dots feed the MXU.
    q_in = _standardize(x).astype(bf16)
    q = jnp.dot(q_in, wq[0], preferred_element_type=f32) + bq[0]
    q = q.astype(bf16)
    q_heads = [q[:, h * hd:(h + 1) * hd] for h in range(num_heads)]

    m = [jnp.full((Lq, 1), -1e30, f32) for _ in range(num_heads)]
    l_sum = [jnp.zeros((Lq, 1), f32) for _ in range(num_heads)]
    acc = [jnp.zeros((Lq, hd), f32) for _ in range(num_heads)]

    for (c0, c1) in chunks:
        # project the K/V chunk with full-width dots (bf16 MXU, fp32 acc)
        k_p = (jnp.dot(xkh_ref[c0:c1, :], wk[0],
                       preferred_element_type=f32) + bk[0]).astype(bf16)
        v_p = (jnp.dot(xvh_ref[c0:c1, :], wv[0],
                       preferred_element_type=f32) + bv[0]).astype(bf16)
        for h in range(num_heads):
            # contract last dims (no explicit K transpose); scale is in wq/bq
            s = jax.lax.dot_general(
                q_heads[h], k_p[:, h * hd:(h + 1) * hd],
                (((1,), (1,)), ((), ())),
                preferred_element_type=f32)                  # (Lq, chunk) fp32
            m_new = jnp.maximum(m[h], jnp.max(s, axis=-1, keepdims=True))
            alpha = jnp.exp(m[h] - m_new)
            p = jnp.exp(s - m_new)
            l_sum[h] = alpha * l_sum[h] + jnp.sum(p, axis=-1, keepdims=True)
            acc[h] = alpha * acc[h] + jnp.dot(
                p.astype(bf16), v_p[:, h * hd:(h + 1) * hd],
                preferred_element_type=f32)
            m[h] = m_new

    ctx = [acc[h] * pl.reciprocal(l_sum[h], approx=True)
           for h in range(num_heads)]
    ctx = ctx[0] if num_heads == 1 else jnp.concatenate(ctx, axis=-1)  # (Lq, C)
    attn = jnp.dot(ctx.astype(bf16), wo[0], preferred_element_type=f32) + bo[0]
    x = x + attn                                             # residual 1

    # ---- MLP branch -------------------------------------------------------------
    h1_in = _standardize(x).astype(bf16)                     # ln2 affine folded in fc1
    h1 = jnp.dot(h1_in, fc1[0], preferred_element_type=f32) + b1[0]
    h1 = _gelu_exact(h1)                                     # fp32 exact GELU
    h2 = jnp.dot(h1.astype(bf16), fc2[0], preferred_element_type=f32) + b2[0]
    x = x + h2                                               # residual 2

    x_acc[...] = x

    @pl.when(layer == num_layers - 1)
    def _():
        # TODO(synk): for C % 128 != 0 a lane-dense (Lq*C/128, 128) output view
        # would avoid masked vst stores; negligible here (one small store).
        out_ref[0] = x.astype(out_ref.dtype)


# ---------------------------- parameter preparation ----------------------------

_PARAM_ORDER = ("wq", "wk", "wv", "bq", "bk", "bv",
                "wo", "bo", "fc1", "b1", "fc2", "b2")


def prepare_stacked_params(block_params_list, num_heads):
    """Stack per-layer params along a leading layer axis, fold the LayerNorm
    affines (ln1 -> Q/K/V, ln2 -> fc1) and the 1/sqrt(hd) attention scale
    (-> Q) into the weights, and store all matmul weights in bf16."""
    C = block_params_list[0]["wq_t"].shape[0]
    hd = C // num_heads
    scale = 1.0 / math.sqrt(hd)
    bf16 = jnp.bfloat16

    def stack(name):
        return jnp.stack([p[name] for p in block_params_list], axis=0)

    ln1_w, ln1_b = stack("ln1_w"), stack("ln1_b")            # (L, 1, C)
    ln2_w, ln2_b = stack("ln2_w"), stack("ln2_b")

    def fold(ln_w, ln_b, w_t, b):
        # (xhat*g + b0) @ W^T + b  ==  xhat @ (g[:,None] * W^T) + (b0 @ W^T + b)
        w_f = ln_w.transpose(0, 2, 1) * w_t                  # (L,C,1)*(L,C,D)
        b_f = jnp.matmul(ln_b, w_t) + b                      # (L,1,D)
        return w_f, b_f

    wq_f, bq_f = fold(ln1_w, ln1_b, stack("wq_t"), stack("bq"))
    wk_f, bk_f = fold(ln1_w, ln1_b, stack("wk_t"), stack("bk"))
    wv_f, bv_f = fold(ln1_w, ln1_b, stack("wv_t"), stack("bv"))
    fc1_f, b1_f = fold(ln2_w, ln2_b, stack("fc1_t"), stack("b1"))

    params = {
        "wq": (wq_f * scale).astype(bf16), "bq": bq_f * scale,
        "wk": wk_f.astype(bf16),           "bk": bk_f,
        "wv": wv_f.astype(bf16),           "bv": bv_f,
        "wo": stack("wo_t").astype(bf16),  "bo": stack("bo"),
        "fc1": fc1_f.astype(bf16),         "b1": b1_f,
        "fc2": stack("fc2_t").astype(bf16), "b2": stack("b2"),
    }
    return [params[n] for n in _PARAM_ORDER]


# ------------------------------ wrapper / glue ---------------------------------

def _pick_vmem_limit(Lq, Lk, C, hidden, kv_chunk):
    f32, bf16 = 4, 2
    inputs = 2 * (Lq * C * f32 + 2 * Lk * C * bf16)      # double-buffered inputs
    output = 2 * Lq * C * f32
    scratch = Lq * C * f32 + 2 * Lk * C * bf16
    layer_w = (4 * C * C + 2 * C * hidden) * bf16 + (4 * C + hidden) * f32
    params = 2 * layer_w                                 # next layer prefetched
    work = (8 * Lq * C + 3 * Lq * hidden + 2 * Lq * kv_chunk
            + 4 * kv_chunk * C) * f32
    est = inputs + output + scratch + params + work + (8 << 20)

    phys = 64 << 20                                      # conservative (v7x)
    try:
        info = pltpu.get_tpu_info()
        phys = int(getattr(info, "vmem_capacity_bytes", phys) or phys)
    except Exception:
        pass
    ceiling = int(phys * 0.85)          # leave headroom for compiler scratch
    return max(32 << 20, min(int(est), ceiling))


def tmixer_apply(xq, xk, xv, stacked_params, *, num_heads, num_layers,
                 kv_chunk=128):
    """All Blocks via one pallas_call with grid=(B, num_layers)."""
    B, Lq, C = xq.shape
    Lk = xk.shape[1]
    hidden = stacked_params[_PARAM_ORDER.index("fc1")].shape[-1]
    assert C % num_heads == 0

    # bf16 K/V inputs: halves HBM->VMEM DMA bytes and VMEM residency of the two
    # largest tensors; LayerNorm statistics are still taken in fp32.
    xk = xk.astype(jnp.bfloat16)
    xv = xv.astype(jnp.bfloat16)

    def batch_spec(shape):
        return pl.BlockSpec(shape, lambda bi, li: (bi, 0, 0))

    def layer_spec(a):
        return pl.BlockSpec((1,) + a.shape[1:], lambda bi, li: (li, 0, 0))

    in_specs = [batch_spec((1, Lq, C)),
                batch_spec((1, Lk, C)),
                batch_spec((1, Lk, C))]
    in_specs += [layer_spec(a) for a in stacked_params]

    return pl.pallas_call(
        functools.partial(_tmixer_kernel,
                          num_heads=num_heads, kv_chunk=kv_chunk),
        out_shape=jax.ShapeDtypeStruct((B, Lq, C), jnp.float32),
        grid=(B, num_layers),
        in_specs=in_specs,
        out_specs=pl.BlockSpec((1, Lq, C), lambda bi, li: (bi, 0, 0)),
        scratch_shapes=[pltpu.VMEM((Lq, C), jnp.float32),    # x carried across layers
                        pltpu.VMEM((Lk, C), jnp.bfloat16),   # standardized keys
                        pltpu.VMEM((Lk, C), jnp.bfloat16)],  # standardized values
        compiler_params=pltpu.CompilerParams(
            # layer axis is sequential (carry in scratch); batch axis feeds both
            # v7x TensorCores.  TODO(synk): for B==1 also split Lq row blocks
            # across an extra parallel grid axis so the second TC is not idle.
            dimension_semantics=("parallel", "arbitrary"),
            vmem_limit_bytes=_pick_vmem_limit(Lq, Lk, C, hidden, kv_chunk)),
    )(xq, xk, xv, *stacked_params)


def sinusoidal_pos_emb(pos, dim, M=10000):
    half = dim // 2
    emb = math.log(M) / half
    freqs = jnp.exp(jnp.arange(half, dtype=jnp.float32) * -emb)
    e = pos.astype(jnp.float32)[:, None] * freqs[None, :]
    return jnp.concatenate([jnp.sin(e), jnp.cos(e)], axis=-1)   # (N, dim)


def init_block_params(key, C, hidden):
    ks = jax.random.split(key, 16)
    s = 0.02
    f32 = jnp.float32
    n = lambda k, shape, sc: sc * jax.random.normal(k, shape, f32)
    return {
        # non-trivial LayerNorm affines so the weight-folding path is exercised
        "ln1_w": 1.0 + n(ks[0], (1, C), 0.1), "ln1_b": n(ks[1], (1, C), 0.1),
        "ln2_w": 1.0 + n(ks[2], (1, C), 0.1), "ln2_b": n(ks[3], (1, C), 0.1),
        # nn.MultiheadAttention in_proj split into Q/K/V, stored transposed so
        # the kernel computes x @ W^T as x @ w*_t.
        "wq_t": n(ks[4], (C, C), s), "wk_t": n(ks[5], (C, C), s),
        "wv_t": n(ks[6], (C, C), s),
        "bq": n(ks[7], (1, C), s), "bk": n(ks[8], (1, C), s),
        "bv": n(ks[9], (1, C), s),
        "wo_t": n(ks[10], (C, C), s), "bo": n(ks[11], (1, C), s),
        "fc1_t": n(ks[12], (C, hidden), s), "b1": n(ks[13], (1, hidden), s),
        "fc2_t": n(ks[14], (hidden, C), s), "b2": n(ks[15], (1, C), s),
    }


def tmixer_forward(x, block_params_list, num_heads, kv_chunk=128):
    """x: (B, N, C, H, W) float32 -> (B, C, H, W), matching Tmixer.forward."""
    B, N, C, H, W = x.shape
    # flatten(-2,-1).permute(0,1,3,2): (B, N, H*W, C)
    xt = x.reshape(B, N, C, H * W).transpose(0, 1, 3, 2)
    enc = sinusoidal_pos_emb(jnp.arange(N), C)                  # (N, C)
    xq = xt[:, -1] + enc[-1][None, None, :]                     # (B, H*W, C)
    xk = (xt + enc[None, :, None, :]).reshape(B, N * H * W, C)  # (B, N*H*W, C)
    xv = xt.reshape(B, N * H * W, C)

    params = prepare_stacked_params(block_params_list, num_heads)
    out = tmixer_apply(xq, xk, xv, params, num_heads=num_heads,
                       num_layers=len(block_params_list), kv_chunk=kv_chunk)
    # view(B, H, W, C).permute(0, 3, 1, 2)
    return out.reshape(B, H, W, C).transpose(0, 3, 1, 2)


def tmixer_reference(x, block_params_list, num_heads):
    """Pure-JAX fp32 reference with PyTorch Tmixer semantics (validation only)."""
    B, N, C, H, W = x.shape
    xt = x.reshape(B, N, C, H * W).transpose(0, 1, 3, 2)
    enc = sinusoidal_pos_emb(jnp.arange(N), C)
    xq = xt[:, -1] + enc[-1][None, None, :]
    xk = (xt + enc[None, :, None, :]).reshape(B, N * H * W, C)
    xv = xt.reshape(B, N * H * W, C)
    hd = C // num_heads
    scale = 1.0 / math.sqrt(hd)

    def layer_norm(z, w, b):
        mu = z.mean(-1, keepdims=True)
        var = ((z - mu) ** 2).mean(-1, keepdims=True)
        return (z - mu) / jnp.sqrt(var + 1e-5) * w + b

    def heads(z):
        return z.reshape(B, z.shape[1], num_heads, hd).transpose(0, 2, 1, 3)

    for p in block_params_list:
        q = layer_norm(xq, p["ln1_w"][0], p["ln1_b"][0]) @ p["wq_t"] + p["bq"][0]
        k = layer_norm(xk, p["ln1_w"][0], p["ln1_b"][0]) @ p["wk_t"] + p["bk"][0]
        v = layer_norm(xv, p["ln1_w"][0], p["ln1_b"][0]) @ p["wv_t"] + p["bv"][0]
        s = jnp.einsum("bhqd,bhkd->bhqk", heads(q), heads(k)) * scale
        a = jax.nn.softmax(s, axis=-1)
        ctx = jnp.einsum("bhqk,bhkd->bhqd", a, heads(v))
        ctx = ctx.transpose(0, 2, 1, 3).reshape(B, -1, C)
        xq = xq + ctx @ p["wo_t"] + p["bo"][0]
        h1 = layer_norm(xq, p["ln2_w"][0], p["ln2_b"][0]) @ p["fc1_t"] + p["b1"][0]
        h1 = jax.nn.gelu(h1, approximate=False)
        xq = xq + h1 @ p["fc2_t"] + p["b2"][0]
    return xq.reshape(B, H, W, C).transpose(0, 3, 1, 2)


# ----------------------------------- main --------------------------------------

if __name__ == "__main__":
    # Tmixer(n=C): num_heads = C // 64, so C must be a multiple of 64.
    B, N, C, H, W = 2, 4, 64, 8, 8
    num_layers = 2
    num_heads = C // 64          # = 1
    hidden = 4 * C               # Mlp hidden (mlp_ratio = 4.0)

    key = jax.random.PRNGKey(0)
    kx, kp = jax.random.split(key)
    x = jax.random.normal(kx, (B, N, C, H, W), jnp.float32)
    block_params_list = [init_block_params(k, C, hidden)
                         for k in jax.random.split(kp, num_layers)]

    fwd = jax.jit(functools.partial(tmixer_forward, num_heads=num_heads,
                                    kv_chunk=128))   # Lk = 256 -> 2 KV chunks
    out = jax.block_until_ready(fwd(x, block_params_list))

    assert out.shape == (B, C, H, W), out.shape
    assert out.dtype == jnp.float32

    # sanity check vs. a pure-JAX fp32 reference (bf16 weights/activations and
    # the approx reciprocal in the kernel give ~1e-3-level differences)
    ref = tmixer_reference(x, block_params_list, num_heads)
    err = float(jnp.max(jnp.abs(out - ref)))
    assert err < 5e-2, f"max |kernel - reference| = {err}"
    print("KERNEL_OK")
</pallas_src>

<mosaic_0001>
module attributes {stable_mosaic.version = 11 : i64} {
  func.func @_tmixer_kernel(%arg0: i32, %arg1: i32, %arg2: memref<1x64x64xf32, #tpu.memory_space<vmem>>, %arg3: memref<1x256x64xbf16, #tpu.memory_space<vmem>>, %arg4: memref<1x256x64xbf16, #tpu.memory_space<vmem>>, %arg5: memref<1x64x64xbf16, #tpu.memory_space<vmem>>, %arg6: memref<1x64x64xbf16, #tpu.memory_space<vmem>>, %arg7: memref<1x64x64xbf16, #tpu.memory_space<vmem>>, %arg8: memref<1x1x64xf32, #tpu.memory_space<vmem>>, %arg9: memref<1x1x64xf32, #tpu.memory_space<vmem>>, %arg10: memref<1x1x64xf32, #tpu.memory_space<vmem>>, %arg11: memref<1x64x64xbf16, #tpu.memory_space<vmem>>, %arg12: memref<1x1x64xf32, #tpu.memory_space<vmem>>, %arg13: memref<1x64x256xbf16, #tpu.memory_space<vmem>>, %arg14: memref<1x1x256xf32, #tpu.memory_space<vmem>>, %arg15: memref<1x256x64xbf16, #tpu.memory_space<vmem>>, %arg16: memref<1x1x64xf32, #tpu.memory_space<vmem>>, %arg17: memref<1x64x64xf32, #tpu.memory_space<vmem>>, %arg18: memref<64x64xf32, #tpu.memory_space<vmem>>, %arg19: memref<256x64xbf16, #tpu.memory_space<vmem>>, %arg20: memref<256x64xbf16, #tpu.memory_space<vmem>>) attributes {dimension_semantics = [#tpu.dimension_semantics<parallel>, #tpu.dimension_semantics<arbitrary>], iteration_bounds = array<i64: 2, 2>, scalar_prefetch = 0 : i64, scratch_operands = 3 : i64, tpu.core_type = #tpu.core_type<tc>, window_params = [{transform_indices = @transform_0, window_bounds = array<i64: 1, 64, 64>}, {transform_indices = @transform_1, window_bounds = array<i64: 1, 256, 64>}, {transform_indices = @transform_2, window_bounds = array<i64: 1, 256, 64>}, {transform_indices = @transform_3, window_bounds = array<i64: 1, 64, 64>}, {transform_indices = @transform_4, window_bounds = array<i64: 1, 64, 64>}, {transform_indices = @transform_5, window_bounds = array<i64: 1, 64, 64>}, {transform_indices = @transform_6, window_bounds = array<i64: 1, 1, 64>}, {transform_indices = @transform_7, window_bounds = array<i64: 1, 1, 64>}, {transform_indices = @transform_8, window_bounds = array<i64: 1, 1, 64>}, {transform_indices = @transform_9, window_bounds = array<i64: 1, 64, 64>}, {transform_indices = @transform_10, window_bounds = array<i64: 1, 1, 64>}, {transform_indices = @transform_11, window_bounds = array<i64: 1, 64, 256>}, {transform_indices = @transform_12, window_bounds = array<i64: 1, 1, 256>}, {transform_indices = @transform_13, window_bounds = array<i64: 1, 256, 64>}, {transform_indices = @transform_14, window_bounds = array<i64: 1, 1, 64>}, {transform_indices = @transform_15, window_bounds = array<i64: 1, 64, 64>}]} {
    %c0_i32 = arith.constant 0 : i32
    %0 = arith.cmpi eq, %arg1, %c0_i32 : i32
    %1 = arith.extui %0 : i1 to i32
    %c0_i32_0 = arith.constant 0 : i32
    %2 = arith.cmpi ne, %1, %c0_i32_0 : i32
    scf.if %2 {
      %c0_103 = arith.constant 0 : index
      %c0_104 = arith.constant 0 : index
      %c0_105 = arith.constant 0 : index
      %196 = vector.load %arg2[%c0_103, %c0_104, %c0_105] : memref<1x64x64xf32, #tpu.memory_space<vmem>>, vector<1x64x64xf32>
      %197 = vector.shape_cast %196 : vector<1x64x64xf32> to vector<64x64xf32>
      %c0_106 = arith.constant 0 : index
      %c0_107 = arith.constant 0 : index
      %198 = vector.load %arg18[%c0_106, %c0_107] : memref<64x64xf32, #tpu.memory_space<vmem>>, vector<64x64xf32>
      tpu.vector_store %arg18[%c0_106, %c0_107], %197 {strides = array<i32>} : memref<64x64xf32, #tpu.memory_space<vmem>>, vector<64x64xf32>,
      %c0_108 = arith.constant 0 : index
      %c0_109 = arith.constant 0 : index
      %c0_110 = arith.constant 0 : index
      %199 = vector.load %arg3[%c0_108, %c0_109, %c0_110] : memref<1x256x64xbf16, #tpu.memory_space<vmem>>, vector<1x128x64xbf16>
      %200 = vector.shape_cast %199 : vector<1x128x64xbf16> to vector<128x64xbf16>
      %201 = arith.extf %200 : vector<128x64xbf16> to vector<128x64xf32>
      %cst_111 = arith.constant dense<0.000000e+00> : vector<128xf32>
      %202 = vector.multi_reduction <add>, %201, %cst_111 [1] : vector<128x64xf32> to vector<128xf32>
      %203 = vector.shape_cast %202 : vector<128xf32> to vector<128x1xf32>
      %cst_112 = arith.constant 6.400000e+01 : f32
      %204 = vector.broadcast %cst_112 : f32 to vector<128x1xf32>
      %205 = arith.divf %203, %204 : vector<128x1xf32>
      %206 = vector.broadcast %205 : vector<128x1xf32> to vector<128x64xf32>
      %207 = arith.subf %201, %206 : vector<128x64xf32>
      %208 = arith.mulf %207, %207 : vector<128x64xf32>
      %cst_113 = arith.constant dense<0.000000e+00> : vector<128xf32>
      %209 = vector.multi_reduction <add>, %208, %cst_113 [1] : vector<128x64xf32> to vector<128xf32>
      %210 = vector.shape_cast %209 : vector<128xf32> to vector<128x1xf32>
      %cst_114 = arith.constant 6.400000e+01 : f32
      %211 = vector.broadcast %cst_114 : f32 to vector<128x1xf32>
      %212 = arith.divf %210, %211 : vector<128x1xf32>
      %cst_115 = arith.constant 9.99999974E-6 : f32
      %213 = vector.broadcast %cst_115 : f32 to vector<128x1xf32>
      %214 = arith.addf %212, %213 : vector<128x1xf32>
      %215 = math.rsqrt %214 : vector<128x1xf32>
      %216 = vector.broadcast %215 : vector<128x1xf32> to vector<128x64xf32>
      %217 = arith.mulf %207, %216 : vector<128x64xf32>
      %218 = arith.truncf %217 : vector<128x64xf32> to vector<128x64xbf16>
      %c0_116 = arith.constant 0 : index
      %c0_117 = arith.constant 0 : index
      %219 = vector.load %arg19[%c0_116, %c0_117] : memref<256x64xbf16, #tpu.memory_space<vmem>>, vector<128x64xbf16>
      tpu.vector_store %arg19[%c0_116, %c0_117], %218 {strides = array<i32>} : memref<256x64xbf16, #tpu.memory_space<vmem>>, vector<128x64xbf16>,
      %c0_118 = arith.constant 0 : index
      %c0_119 = arith.constant 0 : index
      %c0_120 = arith.constant 0 : index
      %220 = vector.load %arg4[%c0_118, %c0_119, %c0_120] : memref<1x256x64xbf16, #tpu.memory_space<vmem>>, vector<1x128x64xbf16>
      %221 = vector.shape_cast %220 : vector<1x128x64xbf16> to vector<128x64xbf16>
      %222 = arith.extf %221 : vector<128x64xbf16> to vector<128x64xf32>
      %cst_121 = arith.constant dense<0.000000e+00> : vector<128xf32>
      %223 = vector.multi_reduction <add>, %222, %cst_121 [1] : vector<128x64xf32> to vector<128xf32>
      %224 = vector.shape_cast %223 : vector<128xf32> to vector<128x1xf32>
      %cst_122 = arith.constant 6.400000e+01 : f32
      %225 = vector.broadcast %cst_122 : f32 to vector<128x1xf32>
      %226 = arith.divf %224, %225 : vector<128x1xf32>
      %227 = vector.broadcast %226 : vector<128x1xf32> to vector<128x64xf32>
      %228 = arith.subf %222, %227 : vector<128x64xf32>
      %229 = arith.mulf %228, %228 : vector<128x64xf32>
      %cst_123 = arith.constant dense<0.000000e+00> : vector<128xf32>
      %230 = vector.multi_reduction <add>, %229, %cst_123 [1] : vector<128x64xf32> to vector<128xf32>
      %231 = vector.shape_cast %230 : vector<128xf32> to vector<128x1xf32>
      %cst_124 = arith.constant 6.400000e+01 : f32
      %232 = vector.broadcast %cst_124 : f32 to vector<128x1xf32>
      %233 = arith.divf %231, %232 : vector<128x1xf32>
      %cst_125 = arith.constant 9.99999974E-6 : f32
      %234 = vector.broadcast %cst_125 : f32 to vector<128x1xf32>
      %235 = arith.addf %233, %234 : vector<128x1xf32>
      %236 = math.rsqrt %235 : vector<128x1xf32>
      %237 = vector.broadcast %236 : vector<128x1xf32> to vector<128x64xf32>
      %238 = arith.mulf %228, %237 : vector<128x64xf32>
      %239 = arith.truncf %238 : vector<128x64xf32> to vector<128x64xbf16>
      %c0_126 = arith.constant 0 : index
      %c0_127 = arith.constant 0 : index
      %240 = vector.load %arg20[%c0_126, %c0_127] : memref<256x64xbf16, #tpu.memory_space<vmem>>, vector<128x64xbf16>
      tpu.vector_store %arg20[%c0_126, %c0_127], %239 {strides = array<i32>} : memref<256x64xbf16, #tpu.memory_space<vmem>>, vector<128x64xbf16>,
      %c0_128 = arith.constant 0 : index
      %c128_129 = arith.constant 128 : index
      %c0_130 = arith.constant 0 : index
      %241 = vector.load %arg3[%c0_128, %c128_129, %c0_130] : memref<1x256x64xbf16, #tpu.memory_space<vmem>>, vector<1x128x64xbf16>
      %242 = vector.shape_cast %241 : vector<1x128x64xbf16> to vector<128x64xbf16>
      %243 = arith.extf %242 : vector<128x64xbf16> to vector<128x64xf32>
      %cst_131 = arith.constant dense<0.000000e+00> : vector<128xf32>
      %244 = vector.multi_reduction <add>, %243, %cst_131 [1] : vector<128x64xf32> to vector<128xf32>
      %245 = vector.shape_cast %244 : vector<128xf32> to vector<128x1xf32>
      %cst_132 = arith.constant 6.400000e+01 : f32
      %246 = vector.broadcast %cst_132 : f32 to vector<128x1xf32>
      %247 = arith.divf %245, %246 : vector<128x1xf32>
      %248 = vector.broadcast %247 : vector<128x1xf32> to vector<128x64xf32>
      %249 = arith.subf %243, %248 : vector<128x64xf32>
      %250 = arith.mulf %249, %249 : vector<128x64xf32>
      %cst_133 = arith.constant dense<0.000000e+00> : vector<128xf32>
      %251 = vector.multi_reduction <add>, %250, %cst_133 [1] : vector<128x64xf32> to vector<128xf32>
      %252 = vector.shape_cast %251 : vector<128xf32> to vector<128x1xf32>
      %cst_134 = arith.constant 6.400000e+01 : f32
      %253 = vector.broadcast %cst_134 : f32 to vector<128x1xf32>
      %254 = arith.divf %252, %253 : vector<128x1xf32>
      %cst_135 = arith.constant 9.99999974E-6 : f32
      %255 = vector.broadcast %cst_135 : f32 to vector<128x1xf32>
      %256 = arith.addf %254, %255 : vector<128x1xf32>
      %257 = math.rsqrt %256 : vector<128x1xf32>
      %258 = vector.broadcast %257 : vector<128x1xf32> to vector<128x64xf32>
      %259 = arith.mulf %249, %258 : vector<128x64xf32>
      %260 = arith.truncf %259 : vector<128x64xf32> to vector<128x64xbf16>
      %c128_136 = arith.constant 128 : index
      %c0_137 = arith.constant 0 : index
      %261 = vector.load %arg19[%c128_136, %c0_137] : memref<256x64xbf16, #tpu.memory_space<vmem>>, vector<128x64xbf16>
      tpu.vector_store %arg19[%c128_136, %c0_137], %260 {strides = array<i32>} : memref<256x64xbf16, #tpu.memory_space<vmem>>, vector<128x64xbf16>,
      %c0_138 = arith.constant 0 : index
      %c128_139 = arith.constant 128 : index
      %c0_140 = arith.constant 0 : index
      %262 = vector.load %arg4[%c0_138, %c128_139, %c0_140] : memref<1x256x64xbf16, #tpu.memory_space<vmem>>, vector<1x128x64xbf16>
      %263 = vector.shape_cast %262 : vector<1x128x64xbf16> to vector<128x64xbf16>
      %264 = arith.extf %263 : vector<128x64xbf16> to vector<128x64xf32>
      %cst_141 = arith.constant dense<0.000000e+00> : vector<128xf32>
      %265 = vector.multi_reduction <add>, %264, %cst_141 [1] : vector<128x64xf32> to vector<128xf32>
      %266 = vector.shape_cast %265 : vector<128xf32> to vector<128x1xf32>
      %cst_142 = arith.constant 6.400000e+01 : f32
      %267 = vector.broadcast %cst_142 : f32 to vector<128x1xf32>
      %268 = arith.divf %266, %267 : vector<128x1xf32>
      %269 = vector.broadcast %268 : vector<128x1xf32> to vector<128x64xf32>
      %270 = arith.subf %264, %269 : vector<128x64xf32>
      %271 = arith.mulf %270, %270 : vector<128x64xf32>
      %cst_143 = arith.constant dense<0.000000e+00> : vector<128xf32>
      %272 = vector.multi_reduction <add>, %271, %cst_143 [1] : vector<128x64xf32> to vector<128xf32>
      %273 = vector.shape_cast %272 : vector<128xf32> to vector<128x1xf32>
      %cst_144 = arith.constant 6.400000e+01 : f32
      %274 = vector.broadcast %cst_144 : f32 to vector<128x1xf32>
      %275 = arith.divf %273, %274 : vector<128x1xf32>
      %cst_145 = arith.constant 9.99999974E-6 : f32
      %276 = vector.broadcast %cst_145 : f32 to vector<128x1xf32>
      %277 = arith.addf %275, %276 : vector<128x1xf32>
      %278 = math.rsqrt %277 : vector<128x1xf32>
      %279 = vector.broadcast %278 : vector<128x1xf32> to vector<128x64xf32>
      %280 = arith.mulf %270, %279 : vector<128x64xf32>
      %281 = arith.truncf %280 : vector<128x64xf32> to vector<128x64xbf16>
      %c128_146 = arith.constant 128 : index
      %c0_147 = arith.constant 0 : index
      %282 = vector.load %arg20[%c128_146, %c0_147] : memref<256x64xbf16, #tpu.memory_space<vmem>>, vector<128x64xbf16>
      tpu.vector_store %arg20[%c128_146, %c0_147], %281 {strides = array<i32>} : memref<256x64xbf16, #tpu.memory_space<vmem>>, vector<128x64xbf16>,
    } else {
    }
    %c0 = arith.constant 0 : index
    %c0_1 = arith.constant 0 : index
    %3 = vector.load %arg18[%c0, %c0_1] : memref<64x64xf32, #tpu.memory_space<vmem>>, vector<64x64xf32>
    %cst = arith.constant dense<0.000000e+00> : vector<64xf32>
    %4 = vector.multi_reduction <add>, %3, %cst [1] : vector<64x64xf32> to vector<64xf32>
    %5 = vector.shape_cast %4 : vector<64xf32> to vector<64x1xf32>
    %cst_2 = arith.constant 6.400000e+01 : f32
    %6 = vector.broadcast %cst_2 : f32 to vector<64x1xf32>
    %7 = arith.divf %5, %6 : vector<64x1xf32>
    %8 = vector.broadcast %7 : vector<64x1xf32> to vector<64x64xf32>
    %9 = arith.subf %3, %8 : vector<64x64xf32>
    %10 = arith.mulf %9, %9 : vector<64x64xf32>
    %cst_3 = arith.constant dense<0.000000e+00> : vector<64xf32>
    %11 = vector.multi_reduction <add>, %10, %cst_3 [1] : vector<64x64xf32> to vector<64xf32>
    %12 = vector.shape_cast %11 : vector<64xf32> to vector<64x1xf32>
    %cst_4 = arith.constant 6.400000e+01 : f32
    %13 = vector.broadcast %cst_4 : f32 to vector<64x1xf32>
    %14 = arith.divf %12, %13 : vector<64x1xf32>
    %cst_5 = arith.constant 9.99999974E-6 : f32
    %15 = vector.broadcast %cst_5 : f32 to vector<64x1xf32>
    %16 = arith.addf %14, %15 : vector<64x1xf32>
    %17 = math.rsqrt %16 : vector<64x1xf32>
    %18 = vector.broadcast %17 : vector<64x1xf32> to vector<64x64xf32>
    %19 = arith.mulf %9, %18 : vector<64x64xf32>
    %20 = arith.truncf %19 : vector<64x64xf32> to vector<64x64xbf16>
    %c0_6 = arith.constant 0 : index
    %c0_7 = arith.constant 0 : index
    %c0_8 = arith.constant 0 : index
    %21 = vector.load %arg5[%c0_6, %c0_7, %c0_8] : memref<1x64x64xbf16, #tpu.memory_space<vmem>>, vector<1x64x64xbf16>
    %22 = vector.shape_cast %21 : vector<1x64x64xbf16> to vector<64x64xbf16>
    %cst_9 = arith.constant dense<0.000000e+00> : vector<64x64xf32>
    %23 = tpu.matmul %20, %22, %cst_9 {dimension_numbers = #tpu.dot_dimension_numbers<[1], [0], [0], [1], [0, 0, 1, 1], [], []>} : vector<64x64xbf16>, vector<64x64xbf16>, vector<64x64xf32> -> vector<64x64xf32>
    %c0_10 = arith.constant 0 : index
    %c0_11 = arith.constant 0 : index
    %c0_12 = arith.constant 0 : index
    %24 = vector.load %arg8[%c0_10, %c0_11, %c0_12] : memref<1x1x64xf32, #tpu.memory_space<vmem>>, vector<1x1x64xf32>
    %25 = vector.shape_cast %24 : vector<1x1x64xf32> to vector<1x64xf32>
    %26 = vector.broadcast %25 : vector<1x64xf32> to vector<64x64xf32>
    %27 = arith.addf %23, %26 : vector<64x64xf32>
    %28 = arith.truncf %27 : vector<64x64xf32> to vector<64x64xbf16>
    %cst_13 = arith.constant -1.000000e+30 : f32
    %29 = vector.broadcast %cst_13 : f32 to vector<64x1xf32>
    %cst_14 = arith.constant 0.000000e+00 : f32
    %30 = vector.broadcast %cst_14 : f32 to vector<64x1xf32>
    %cst_15 = arith.constant 0.000000e+00 : f32
    %31 = vector.broadcast %cst_15 : f32 to vector<64x64xf32>
    %c0_16 = arith.constant 0 : index
    %c0_17 = arith.constant 0 : index
    %32 = vector.load %arg19[%c0_16, %c0_17] : memref<256x64xbf16, #tpu.memory_space<vmem>>, vector<128x64xbf16>
    %c0_18 = arith.constant 0 : index
    %c0_19 = arith.constant 0 : index
    %c0_20 = arith.constant 0 : index
    %33 = vector.load %arg6[%c0_18, %c0_19, %c0_20] : memref<1x64x64xbf16, #tpu.memory_space<vmem>>, vector<1x64x64xbf16>
    %34 = vector.shape_cast %33 : vector<1x64x64xbf16> to vector<64x64xbf16>
    %cst_21 = arith.constant dense<0.000000e+00> : vector<128x64xf32>
    %35 = tpu.matmul %32, %34, %cst_21 {dimension_numbers = #tpu.dot_dimension_numbers<[1], [0], [0], [1], [0, 0, 1, 1], [], []>} : vector<128x64xbf16>, vector<64x64xbf16>, vector<128x64xf32> -> vector<128x64xf32>
    %c0_22 = arith.constant 0 : index
    %c0_23 = arith.constant 0 : index
    %c0_24 = arith.constant 0 : index
    %36 = vector.load %arg9[%c0_22, %c0_23, %c0_24] : memref<1x1x64xf32, #tpu.memory_space<vmem>>, vector<1x1x64xf32>
    %37 = vector.shape_cast %36 : vector<1x1x64xf32> to vector<1x64xf32>
    %38 = vector.broadcast %37 : vector<1x64xf32> to vector<128x64xf32>
    %39 = arith.addf %35, %38 : vector<128x64xf32>
    %40 = arith.truncf %39 : vector<128x64xf32> to vector<128x64xbf16>
    %c0_25 = arith.constant 0 : index
    %c0_26 = arith.constant 0 : index
    %41 = vector.load %arg20[%c0_25, %c0_26] : memref<256x64xbf16, #tpu.memory_space<vmem>>, vector<128x64xbf16>
    %c0_27 = arith.constant 0 : index
    %c0_28 = arith.constant 0 : index
    %c0_29 = arith.constant 0 : index
    %42 = vector.load %arg7[%c0_27, %c0_28, %c0_29] : memref<1x64x64xbf16, #tpu.memory_space<vmem>>, vector<1x64x64xbf16>
    %43 = vector.shape_cast %42 : vector<1x64x64xbf16> to vector<64x64xbf16>
    %cst_30 = arith.constant dense<0.000000e+00> : vector<128x64xf32>
    %44 = tpu.matmul %41, %43, %cst_30 {dimension_numbers = #tpu.dot_dimension_numbers<[1], [0], [0], [1], [0, 0, 1, 1], [], []>} : vector<128x64xbf16>, vector<64x64xbf16>, vector<128x64xf32> -> vector<128x64xf32>
    %c0_31 = arith.constant 0 : index
    %c0_32 = arith.constant 0 : index
    %c0_33 = arith.constant 0 : index
    %45 = vector.load %arg10[%c0_31, %c0_32, %c0_33] : memref<1x1x64xf32, #tpu.memory_space<vmem>>, vector<1x1x64xf32>
    %46 = vector.shape_cast %45 : vector<1x1x64xf32> to vector<1x64xf32>
    %47 = vector.broadcast %46 : vector<1x64xf32> to vector<128x64xf32>
    %48 = arith.addf %44, %47 : vector<128x64xf32>
    %49 = arith.truncf %48 : vector<128x64xf32> to vector<128x64xbf16>
    %cst_34 = arith.constant dense<0.000000e+00> : vector<64x128xf32>
    %50 = tpu.matmul %28, %40, %cst_34 {dimension_numbers = #tpu.dot_dimension_numbers<[1], [1], [0], [0], [0, 0, 1, 0], [], []>} : vector<64x64xbf16>, vector<128x64xbf16>, vector<64x128xf32> -> vector<64x128xf32>
    %cst_35 = arith.constant dense<0xFF800000> : vector<64xf32>
    %51 = vector.multi_reduction <maximumf>, %50, %cst_35 [1] : vector<64x128xf32> to vector<64xf32>
    %52 = vector.shape_cast %51 : vector<64xf32> to vector<64x1xf32>
    %53 = arith.maximumf %29, %52 : vector<64x1xf32>
    %54 = arith.subf %29, %53 : vector<64x1xf32>
    %55 = math.exp %54 : vector<64x1xf32>
    %56 = vector.broadcast %53 : vector<64x1xf32> to vector<64x128xf32>
    %57 = arith.subf %50, %56 : vector<64x128xf32>
    %58 = math.exp %57 : vector<64x128xf32>
    %59 = arith.mulf %55, %30 : vector<64x1xf32>
    %cst_36 = arith.constant dense<0.000000e+00> : vector<64xf32>
    %60 = vector.multi_reduction <add>, %58, %cst_36 [1] : vector<64x128xf32> to vector<64xf32>
    %61 = vector.shape_cast %60 : vector<64xf32> to vector<64x1xf32>
    %62 = arith.addf %59, %61 : vector<64x1xf32>
    %63 = vector.broadcast %55 : vector<64x1xf32> to vector<64x64xf32>
    %64 = arith.mulf %63, %31 : vector<64x64xf32>
    %65 = arith.truncf %58 : vector<64x128xf32> to vector<64x128xbf16>
    %cst_37 = arith.constant dense<0.000000e+00> : vector<64x64xf32>
    %66 = tpu.matmul %65, %49, %cst_37 {dimension_numbers = #tpu.dot_dimension_numbers<[1], [0], [0], [1], [0, 0, 1, 1], [], []>} : vector<64x128xbf16>, vector<128x64xbf16>, vector<64x64xf32> -> vector<64x64xf32>
    %67 = arith.addf %64, %66 : vector<64x64xf32>
    %c128 = arith.constant 128 : index
    %c0_38 = arith.constant 0 : index
    %68 = vector.load %arg19[%c128, %c0_38] : memref<256x64xbf16, #tpu.memory_space<vmem>>, vector<128x64xbf16>
    %c0_39 = arith.constant 0 : index
    %c0_40 = arith.constant 0 : index
    %c0_41 = arith.constant 0 : index
    %69 = vector.load %arg6[%c0_39, %c0_40, %c0_41] : memref<1x64x64xbf16, #tpu.memory_space<vmem>>, vector<1x64x64xbf16>
    %70 = vector.shape_cast %69 : vector<1x64x64xbf16> to vector<64x64xbf16>
    %cst_42 = arith.constant dense<0.000000e+00> : vector<128x64xf32>
    %71 = tpu.matmul %68, %70, %cst_42 {dimension_numbers = #tpu.dot_dimension_numbers<[1], [0], [0], [1], [0, 0, 1, 1], [], []>} : vector<128x64xbf16>, vector<64x64xbf16>, vector<128x64xf32> -> vector<128x64xf32>
    %c0_43 = arith.constant 0 : index
    %c0_44 = arith.constant 0 : index
    %c0_45 = arith.constant 0 : index
    %72 = vector.load %arg9[%c0_43, %c0_44, %c0_45] : memref<1x1x64xf32, #tpu.memory_space<vmem>>, vector<1x1x64xf32>
    %73 = vector.shape_cast %72 : vector<1x1x64xf32> to vector<1x64xf32>
    %74 = vector.broadcast %73 : vector<1x64xf32> to vector<128x64xf32>
    %75 = arith.addf %71, %74 : vector<128x64xf32>
    %76 = arith.truncf %75 : vector<128x64xf32> to vector<128x64xbf16>
    %c128_46 = arith.constant 128 : index
    %c0_47 = arith.constant 0 : index
    %77 = vector.load %arg20[%c128_46, %c0_47] : memref<256x64xbf16, #tpu.memory_space<vmem>>, vector<128x64xbf16>
    %c0_48 = arith.constant 0 : index
    %c0_49 = arith.constant 0 : index
    %c0_50 = arith.constant 0 : index
    %78 = vector.load %arg7[%c0_48, %c0_49, %c0_50] : memref<1x64x64xbf16, #tpu.memory_space<vmem>>, vector<1x64x64xbf16>
    %79 = vector.shape_cast %78 : vector<1x64x64xbf16> to vector<64x64xbf16>
    %cst_51 = arith.constant dense<0.000000e+00> : vector<128x64xf32>
    %80 = tpu.matmul %77, %79, %cst_51 {dimension_numbers = #tpu.dot_dimension_numbers<[1], [0], [0], [1], [0, 0, 1, 1], [], []>} : vector<128x64xbf16>, vector<64x64xbf16>, vector<128x64xf32> -> vector<128x64xf32>
    %c0_52 = arith.constant 0 : index
    %c0_53 = arith.constant 0 : index
    %c0_54 = arith.constant 0 : index
    %81 = vector.load %arg10[%c0_52, %c0_53, %c0_54] : memref<1x1x64xf32, #tpu.memory_space<vmem>>, vector<1x1x64xf32>
    %82 = vector.shape_cast %81 : vector<1x1x64xf32> to vector<1x64xf32>
    %83 = vector.broadcast %82 : vector<1x64xf32> to vector<128x64xf32>
    %84 = arith.addf %80, %83 : vector<128x64xf32>
    %85 = arith.truncf %84 : vector<128x64xf32> to vector<128x64xbf16>
    %cst_55 = arith.constant dense<0.000000e+00> : vector<64x128xf32>
    %86 = tpu.matmul %28, %76, %cst_55 {dimension_numbers = #tpu.dot_dimension_numbers<[1], [1], [0], [0], [0, 0, 1, 0], [], []>} : vector<64x64xbf16>, vector<128x64xbf16>, vector<64x128xf32> -> vector<64x128xf32>
    %cst_56 = arith.constant dense<0xFF800000> : vector<64xf32>
    %87 = vector.multi_reduction <maximumf>, %86, %cst_56 [1] : vector<64x128xf32> to vector<64xf32>
    %88 = vector.shape_cast %87 : vector<64xf32> to vector<64x1xf32>
    %89 = arith.maximumf %53, %88 : vector<64x1xf32>
    %90 = arith.subf %53, %89 : vector<64x1xf32>
    %91 = math.exp %90 : vector<64x1xf32>
    %92 = vector.broadcast %89 : vector<64x1xf32> to vector<64x128xf32>
    %93 = arith.subf %86, %92 : vector<64x128xf32>
    %94 = math.exp %93 : vector<64x128xf32>
    %95 = arith.mulf %91, %62 : vector<64x1xf32>
    %cst_57 = arith.constant dense<0.000000e+00> : vector<64xf32>
    %96 = vector.multi_reduction <add>, %94, %cst_57 [1] : vector<64x128xf32> to vector<64xf32>
    %97 = vector.shape_cast %96 : vector<64xf32> to vector<64x1xf32>
    %98 = arith.addf %95, %97 : vector<64x1xf32>
    %99 = vector.broadcast %91 : vector<64x1xf32> to vector<64x64xf32>
    %100 = arith.mulf %99, %67 : vector<64x64xf32>
    %101 = arith.truncf %94 : vector<64x128xf32> to vector<64x128xbf16>
    %cst_58 = arith.constant dense<0.000000e+00> : vector<64x64xf32>
    %102 = tpu.matmul %101, %85, %cst_58 {dimension_numbers = #tpu.dot_dimension_numbers<[1], [0], [0], [1], [0, 0, 1, 1], [], []>} : vector<64x128xbf16>, vector<128x64xbf16>, vector<64x64xf32> -> vector<64x64xf32>
    %103 = arith.addf %100, %102 : vector<64x64xf32>
    %104 = tpu.reciprocal %98 {approx = true} : vector<64x1xf32> -> vector<64x1xf32>
    %105 = vector.broadcast %104 : vector<64x1xf32> to vector<64x64xf32>
    %106 = arith.mulf %103, %105 : vector<64x64xf32>
    %107 = arith.truncf %106 : vector<64x64xf32> to vector<64x64xbf16>
    %c0_59 = arith.constant 0 : index
    %c0_60 = arith.constant 0 : index
    %c0_61 = arith.constant 0 : index
    %108 = vector.load %arg11[%c0_59, %c0_60, %c0_61] : memref<1x64x64xbf16, #tpu.memory_space<vmem>>, vector<1x64x64xbf16>
    %109 = vector.shape_cast %108 : vector<1x64x64xbf16> to vector<64x64xbf16>
    %cst_62 = arith.constant dense<0.000000e+00> : vector<64x64xf32>
    %110 = tpu.matmul %107, %109, %cst_62 {dimension_numbers = #tpu.dot_dimension_numbers<[1], [0], [0], [1], [0, 0, 1, 1], [], []>} : vector<64x64xbf16>, vector<64x64xbf16>, vector<64x64xf32> -> vector<64x64xf32>
    %c0_63 = arith.constant 0 : index
    %c0_64 = arith.constant 0 : index
    %c0_65 = arith.constant 0 : index
    %111 = vector.load %arg12[%c0_63, %c0_64, %c0_65] : memref<1x1x64xf32, #tpu.memory_space<vmem>>, vector<1x1x64xf32>
    %112 = vector.shape_cast %111 : vector<1x1x64xf32> to vector<1x64xf32>
    %113 = vector.broadcast %112 : vector<1x64xf32> to vector<64x64xf32>
    %114 = arith.addf %110, %113 : vector<64x64xf32>
    %115 = arith.addf %3, %114 : vector<64x64xf32>
    %cst_66 = arith.constant dense<0.000000e+00> : vector<64xf32>
    %116 = vector.multi_reduction <add>, %115, %cst_66 [1] : vector<64x64xf32> to vector<64xf32>
    %117 = vector.shape_cast %116 : vector<64xf32> to vector<64x1xf32>
    %cst_67 = arith.constant 6.400000e+01 : f32
    %118 = vector.broadcast %cst_67 : f32 to vector<64x1xf32>
    %119 = arith.divf %117, %118 : vector<64x1xf32>
    %120 = vector.broadcast %119 : vector<64x1xf32> to vector<64x64xf32>
    %121 = arith.subf %115, %120 : vector<64x64xf32>
    %122 = arith.mulf %121, %121 : vector<64x64xf32>
    %cst_68 = arith.constant dense<0.000000e+00> : vector<64xf32>
    %123 = vector.multi_reduction <add>, %122, %cst_68 [1] : vector<64x64xf32> to vector<64xf32>
    %124 = vector.shape_cast %123 : vector<64xf32> to vector<64x1xf32>
    %cst_69 = arith.constant 6.400000e+01 : f32
    %125 = vector.broadcast %cst_69 : f32 to vector<64x1xf32>
    %126 = arith.divf %124, %125 : vector<64x1xf32>
    %cst_70 = arith.constant 9.99999974E-6 : f32
    %127 = vector.broadcast %cst_70 : f32 to vector<64x1xf32>
    %128 = arith.addf %126, %127 : vector<64x1xf32>
    %129 = math.rsqrt %128 : vector<64x1xf32>
    %130 = vector.broadcast %129 : vector<64x1xf32> to vector<64x64xf32>
    %131 = arith.mulf %121, %130 : vector<64x64xf32>
    %132 = arith.truncf %131 : vector<64x64xf32> to vector<64x64xbf16>
    %c0_71 = arith.constant 0 : index
    %c0_72 = arith.constant 0 : index
    %c0_73 = arith.constant 0 : index
    %133 = vector.load %arg13[%c0_71, %c0_72, %c0_73] : memref<1x64x256xbf16, #tpu.memory_space<vmem>>, vector<1x64x256xbf16>
    %134 = vector.shape_cast %133 : vector<1x64x256xbf16> to vector<64x256xbf16>
    %cst_74 = arith.constant dense<0.000000e+00> : vector<64x256xf32>
    %135 = tpu.matmul %132, %134, %cst_74 {dimension_numbers = #tpu.dot_dimension_numbers<[1], [0], [0], [1], [0, 0, 1, 1], [], []>} : vector<64x64xbf16>, vector<64x256xbf16>, vector<64x256xf32> -> vector<64x256xf32>
    %c0_75 = arith.constant 0 : index
    %c0_76 = arith.constant 0 : index
    %c0_77 = arith.constant 0 : index
    %136 = vector.load %arg14[%c0_75, %c0_76, %c0_77] : memref<1x1x256xf32, #tpu.memory_space<vmem>>, vector<1x1x256xf32>
    %137 = vector.shape_cast %136 : vector<1x1x256xf32> to vector<1x256xf32>
    %138 = vector.broadcast %137 : vector<1x256xf32> to vector<64x256xf32>
    %139 = arith.addf %135, %138 : vector<64x256xf32>
    %cst_78 = arith.constant 5.000000e-01 : f32
    %140 = vector.broadcast %cst_78 : f32 to vector<64x256xf32>
    %141 = arith.mulf %140, %139 : vector<64x256xf32>
    %cst_79 = arith.constant 0.707106769 : f32
    %142 = vector.broadcast %cst_79 : f32 to vector<64x256xf32>
    %143 = arith.mulf %139, %142 : vector<64x256xf32>
    %144 = math.absf %143 : vector<64x256xf32>
    %cst_80 = arith.constant 0.327591091 : f32
    %145 = vector.broadcast %cst_80 : f32 to vector<64x256xf32>
    %146 = arith.mulf %145, %144 : vector<64x256xf32>
    %cst_81 = arith.constant 1.000000e+00 : f32
    %147 = vector.broadcast %cst_81 : f32 to vector<64x256xf32>
    %148 = arith.addf %147, %146 : vector<64x256xf32>
    %149 = tpu.reciprocal %148 {approx = true} : vector<64x256xf32> -> vector<64x256xf32>
    %150 = arith.mulf %148, %149 : vector<64x256xf32>
    %cst_82 = arith.constant 2.000000e+00 : f32
    %151 = vector.broadcast %cst_82 : f32 to vector<64x256xf32>
    %152 = arith.subf %151, %150 : vector<64x256xf32>
    %153 = arith.mulf %149, %152 : vector<64x256xf32>
    %cst_83 = arith.constant 1.06140542 : f32
    %154 = vector.broadcast %cst_83 : f32 to vector<64x256xf32>
    %155 = arith.mulf %154, %153 : vector<64x256xf32>
    %cst_84 = arith.constant -1.45315206 : f32
    %156 = vector.broadcast %cst_84 : f32 to vector<64x256xf32>
    %157 = arith.addf %155, %156 : vector<64x256xf32>
    %158 = arith.mulf %157, %153 : vector<64x256xf32>
    %cst_85 = arith.constant 1.42141378 : f32
    %159 = vector.broadcast %cst_85 : f32 to vector<64x256xf32>
    %160 = arith.addf %158, %159 : vector<64x256xf32>
    %161 = arith.mulf %160, %153 : vector<64x256xf32>
    %cst_86 = arith.constant -0.284496725 : f32
    %162 = vector.broadcast %cst_86 : f32 to vector<64x256xf32>
    %163 = arith.addf %161, %162 : vector<64x256xf32>
    %164 = arith.mulf %163, %153 : vector<64x256xf32>
    %cst_87 = arith.constant 0.254829586 : f32
    %165 = vector.broadcast %cst_87 : f32 to vector<64x256xf32>
    %166 = arith.addf %164, %165 : vector<64x256xf32>
    %167 = arith.mulf %166, %153 : vector<64x256xf32>
    %cst_88 = arith.constant 0.000000e+00 : f32
    %168 = vector.broadcast %cst_88 : f32 to vector<64x256xf32>
    %169 = arith.subf %168, %144 : vector<64x256xf32>
    %170 = arith.mulf %169, %144 : vector<64x256xf32>
    %171 = math.exp %170 : vector<64x256xf32>
    %172 = arith.mulf %167, %171 : vector<64x256xf32>
    %cst_89 = arith.constant 1.000000e+00 : f32
    %173 = vector.broadcast %cst_89 : f32 to vector<64x256xf32>
    %174 = arith.subf %173, %172 : vector<64x256xf32>
    %cst_90 = arith.constant 0.000000e+00 : f32
    %175 = vector.broadcast %cst_90 : f32 to vector<64x256xf32>
    %176 = arith.cmpf oge, %143, %175 : vector<64x256xf32>
    %cst_91 = arith.constant 0.000000e+00 : f32
    %177 = vector.broadcast %cst_91 : f32 to vector<64x256xf32>
    %178 = arith.subf %177, %174 : vector<64x256xf32>
    %179 = arith.select %176, %174, %178 : vector<64x256xi1>, vector<64x256xf32>
    %cst_92 = arith.constant 1.000000e+00 : f32
    %180 = vector.broadcast %cst_92 : f32 to vector<64x256xf32>
    %181 = arith.addf %180, %179 : vector<64x256xf32>
    %182 = arith.mulf %141, %181 : vector<64x256xf32>
    %183 = arith.truncf %182 : vector<64x256xf32> to vector<64x256xbf16>
    %c0_93 = arith.constant 0 : index
    %c0_94 = arith.constant 0 : index
    %c0_95 = arith.constant 0 : index
    %184 = vector.load %arg15[%c0_93, %c0_94, %c0_95] : memref<1x256x64xbf16, #tpu.memory_space<vmem>>, vector<1x256x64xbf16>
    %185 = vector.shape_cast %184 : vector<1x256x64xbf16> to vector<256x64xbf16>
    %cst_96 = arith.constant dense<0.000000e+00> : vector<64x64xf32>
    %186 = tpu.matmul %183, %185, %cst_96 {dimension_numbers = #tpu.dot_dimension_numbers<[1], [0], [0], [1], [0, 0, 1, 1], [], []>} : vector<64x256xbf16>, vector<256x64xbf16>, vector<64x64xf32> -> vector<64x64xf32>
    %c0_97 = arith.constant 0 : index
    %c0_98 = arith.constant 0 : index
    %c0_99 = arith.constant 0 : index
    %187 = vector.load %arg16[%c0_97, %c0_98, %c0_99] : memref<1x1x64xf32, #tpu.memory_space<vmem>>, vector<1x1x64xf32>
    %188 = vector.shape_cast %187 : vector<1x1x64xf32> to vector<1x64xf32>
    %189 = vector.broadcast %188 : vector<1x64xf32> to vector<64x64xf32>
    %190 = arith.addf %186, %189 : vector<64x64xf32>
    %191 = arith.addf %115, %190 : vector<64x64xf32>
    %c0_100 = arith.constant 0 : index
    %c0_101 = arith.constant 0 : index
    %192 = vector.load %arg18[%c0_100, %c0_101] : memref<64x64xf32, #tpu.memory_space<vmem>>, vector<64x64xf32>
    tpu.vector_store %arg18[%c0_100, %c0_101], %191 {strides = array<i32>} : memref<64x64xf32, #tpu.memory_space<vmem>>, vector<64x64xf32>,
    %c1_i32 = arith.constant 1 : i32
    %193 = arith.cmpi eq, %arg1, %c1_i32 : i32
    %194 = arith.extui %193 : i1 to i32
    %c0_i32_102 = arith.constant 0 : i32
    %195 = arith.cmpi ne, %194, %c0_i32_102 : i32
    scf.if %195 {
      %c0_103 = arith.constant 0 : index
      %c0_104 = arith.constant 0 : index
      %c0_105 = arith.constant 0 : index
      %196 = vector.load %arg17[%c0_103, %c0_104, %c0_105] : memref<1x64x64xf32, #tpu.memory_space<vmem>>, vector<1x64x64xf32>
      %197 = vector.shape_cast %196 : vector<1x64x64xf32> to vector<64x64xf32>
      %198 = vector.shape_cast %191 : vector<64x64xf32> to vector<1x64x64xf32>
      tpu.vector_store %arg17[%c0_103, %c0_104, %c0_105], %198 {strides = array<i32>} : memref<1x64x64xf32, #tpu.memory_space<vmem>>, vector<1x64x64xf32>,
    } else {
    }
    return
  }
  func.func @transform_0(%arg0: i32, %arg1: i32) -> (i32, i32, i32) {
    %c0_i32 = arith.constant 0 : i32
    %c0_i32_0 = arith.constant 0 : i32
    %c0_i32_1 = arith.constant 0 : i32
    return %arg0, %c0_i32, %c0_i32_0 : i32, i32, i32
  }
  func.func @transform_1(%arg0: i32, %arg1: i32) -> (i32, i32, i32) {
    %c0_i32 = arith.constant 0 : i32
    %c0_i32_0 = arith.constant 0 : i32
    %c0_i32_1 = arith.constant 0 : i32
    return %arg0, %c0_i32, %c0_i32_0 : i32, i32, i32
  }
  func.func @transform_2(%arg0: i32, %arg1: i32) -> (i32, i32, i32) {
    %c0_i32 = arith.constant 0 : i32
    %c0_i32_0 = arith.constant 0 : i32
    %c0_i32_1 = arith.constant 0 : i32
    return %arg0, %c0_i32, %c0_i32_0 : i32, i32, i32
  }
  func.func @transform_3(%arg0: i32, %arg1: i32) -> (i32, i32, i32) {
    %c0_i32 = arith.constant 0 : i32
    %c0_i32_0 = arith.constant 0 : i32
    %c0_i32_1 = arith.constant 0 : i32
    return %arg1, %c0_i32, %c0_i32_0 : i32, i32, i32
  }
  func.func @transform_4(%arg0: i32, %arg1: i32) -> (i32, i32, i32) {
    %c0_i32 = arith.constant 0 : i32
    %c0_i32_0 = arith.constant 0 : i32
    %c0_i32_1 = arith.constant 0 : i32
    return %arg1, %c0_i32, %c0_i32_0 : i32, i32, i32
  }
  func.func @transform_5(%arg0: i32, %arg1: i32) -> (i32, i32, i32) {
    %c0_i32 = arith.constant 0 : i32
    %c0_i32_0 = arith.constant 0 : i32
    %c0_i32_1 = arith.constant 0 : i32
    return %arg1, %c0_i32, %c0_i32_0 : i32, i32, i32
  }
  func.func @transform_6(%arg0: i32, %arg1: i32) -> (i32, i32, i32) {
    %c0_i32 = arith.constant 0 : i32
    %c0_i32_0 = arith.constant 0 : i32
    %c0_i32_1 = arith.constant 0 : i32
    return %arg1, %c0_i32, %c0_i32_0 : i32, i32, i32
  }
  func.func @transform_7(%arg0: i32, %arg1: i32) -> (i32, i32, i32) {
    %c0_i32 = arith.constant 0 : i32
    %c0_i32_0 = arith.constant 0 : i32
    %c0_i32_1 = arith.constant 0 : i32
    return %arg1, %c0_i32, %c0_i32_0 : i32, i32, i32
  }
  func.func @transform_8(%arg0: i32, %arg1: i32) -> (i32, i32, i32) {
    %c0_i32 = arith.constant 0 : i32
    %c0_i32_0 = arith.constant 0 : i32
    %c0_i32_1 = arith.constant 0 : i32
    return %arg1, %c0_i32, %c0_i32_0 : i32, i32, i32
  }
  func.func @transform_9(%arg0: i32, %arg1: i32) -> (i32, i32, i32) {
    %c0_i32 = arith.constant 0 : i32
    %c0_i32_0 = arith.constant 0 : i32
    %c0_i32_1 = arith.constant 0 : i32
    return %arg1, %c0_i32, %c0_i32_0 : i32, i32, i32
  }
  func.func @transform_10(%arg0: i32, %arg1: i32) -> (i32, i32, i32) {
    %c0_i32 = arith.constant 0 : i32
    %c0_i32_0 = arith.constant 0 : i32
    %c0_i32_1 = arith.constant 0 : i32
    return %arg1, %c0_i32, %c0_i32_0 : i32, i32, i32
  }
  func.func @transform_11(%arg0: i32, %arg1: i32) -> (i32, i32, i32) {
    %c0_i32 = arith.constant 0 : i32
    %c0_i32_0 = arith.constant 0 : i32
    %c0_i32_1 = arith.constant 0 : i32
    return %arg1, %c0_i32, %c0_i32_0 : i32, i32, i32
  }
  func.func @transform_12(%arg0: i32, %arg1: i32) -> (i32, i32, i32) {
    %c0_i32 = arith.constant 0 : i32
    %c0_i32_0 = arith.constant 0 : i32
    %c0_i32_1 = arith.constant 0 : i32
    return %arg1, %c0_i32, %c0_i32_0 : i32, i32, i32
  }
  func.func @transform_13(%arg0: i32, %arg1: i32) -> (i32, i32, i32) {
    %c0_i32 = arith.constant 0 : i32
    %c0_i32_0 = arith.constant 0 : i32
    %c0_i32_1 = arith.constant 0 : i32
    return %arg1, %c0_i32, %c0_i32_0 : i32, i32, i32
  }
  func.func @transform_14(%arg0: i32, %arg1: i32) -> (i32, i32, i32) {
    %c0_i32 = arith.constant 0 : i32
    %c0_i32_0 = arith.constant 0 : i32
    %c0_i32_1 = arith.constant 0 : i32
    return %arg1, %c0_i32, %c0_i32_0 : i32, i32, i32
  }
  func.func @transform_15(%arg0: i32, %arg1: i32) -> (i32, i32, i32) {
    %c0_i32 = arith.constant 0 : i32
    %c0_i32_0 = arith.constant 0 : i32
    %c0_i32_1 = arith.constant 0 : i32
    return %arg0, %c0_i32, %c0_i32_0 : i32, i32, i32
  }
}

</mosaic_0001>

<llo_original>
// kernel: tmixer_forward.1
$region0: #{tmixer_forward.1}
  #allocation0 [shape = 'u32[]', space=smem, size = 0x4, offset = 0x4, fixed_abs, tag = 'smem constant byte address 0x4 - core index']
  #allocation1 [shape = 'u32[144,128]{1,0:T(1,128)}', space=vmem, size = 0x12000, scoped, tag = 'internal scratch']
  #allocation2 [shape = 'f32[64,64]{1,0:T(8,128)}', space=vmem, size = 0x8000, scoped, tag = 'scratch operand']
  #allocation3 [shape = 'bf16[256,64]{1,0:T(16,128)(2,1)}', space=vmem, size = 0x10000, scoped, tag = 'scratch operand']
  #allocation4 [shape = 'bf16[256,64]{1,0:T(16,128)(2,1)}', space=vmem, size = 0x10000, scoped, tag = 'scratch operand']
  %s0 = inlined_call_operand.vmem [shape: f32[2,64,64], index: 0, kind: input, shape index: {}]
  %s1 = inlined_call_operand.vmem [shape: bf16[2,256,64], index: 1, kind: input, shape index: {}]
  %s2 = inlined_call_operand.vmem [shape: bf16[2,256,64], index: 2, kind: input, shape index: {}]
  %s3 = inlined_call_operand.vmem [shape: bf16[2,64,64], index: 3, kind: input, shape index: {}]
  %s4 = inlined_call_operand.vmem [shape: bf16[2,64,64], index: 4, kind: input, shape index: {}]
  %s5 = inlined_call_operand.vmem [shape: bf16[2,64,64], index: 5, kind: input, shape index: {}]
  %s6 = inlined_call_operand.vmem [shape: f32[2,1,64], index: 6, kind: input, shape index: {}]
  %s7 = inlined_call_operand.vmem [shape: f32[2,1,64], index: 7, kind: input, shape index: {}]
  %s8 = inlined_call_operand.vmem [shape: f32[2,1,64], index: 8, kind: input, shape index: {}]
  %s9 = inlined_call_operand.vmem [shape: bf16[2,64,64], index: 9, kind: input, shape index: {}]
  %s10 = inlined_call_operand.vmem [shape: f32[2,1,64], index: 10, kind: input, shape index: {}]
  %s11 = inlined_call_operand.vmem [shape: bf16[2,64,256], index: 11, kind: input, shape index: {}]
  %s12 = inlined_call_operand.vmem [shape: f32[2,1,256], index: 12, kind: input, shape index: {}]
  %s13 = inlined_call_operand.vmem [shape: bf16[2,256,64], index: 13, kind: input, shape index: {}]
  %s14 = inlined_call_operand.vmem [shape: f32[2,1,64], index: 14, kind: input, shape index: {}]
  %s15 = inlined_call_operand.hbm [shape: f32[2,64,64], index: 15, kind: output, shape index: {}]
  %s16 = sld [smem:[#allocation0]]
  $region101: #{tmixer_forward.1} parent=0
    _
  %s18 = ssub.s32 1, %s16
  %s19 = scalar_select 0, %s18, %s16
  $region1: #{tmixer_forward.1} parent=0
    #allocation5 [shape = 'u8[65536]{0}', space=vmem, size = 0x10000, scoped, tag = 'output window, operand 0']
    #allocation6 [shape = 's32[2]{0}', space=sflag, size = 0x8, scoped, tag = 'scoped memory for tmixer_forward.1']
    %20 = vsyncpa [#allocation6], 0
    %s21 = scalar_lea.sflag [#allocation6], 1
    %22 = vsyncpa %s21, 0
    loop: start=0, step=1, limit=6
    $region2: #{tmixer_forward.1} parent=1 // loop_pre_header
      _
    $region3: #{tmixer_forward.1} parent=1 // loop_header
      %s24 = sphi 0, %s28
      %p25 = scmp.ge.s32.totalorder %s24, 6
      %s31 = sphi 0, %s43
      %s32 = sphi 0, %s39
      %s33 = sphi 0, %s31
      %s34 = sphi 0, %s32
      %s35 = sphi 0, %s33
      %s36 = sphi 0, %s34
      %s46 = sphi 0, %s48
      %s49 = sphi 0, %s46
      %s50 = sphi 0, %s49
      %s66 = sphi 0, %s50
      %s72 = sphi 0, %s74
      %s75 = sphi 0, %s72
      %s76 = sphi 0, %s75
      %s92 = sphi 0, %s76
      %s98 = sphi 0, %s100
      %s101 = sphi 0, %s98
      %s102 = sphi 0, %s101
      %s118 = sphi 0, %s102
      %s124 = sphi 0, %s126
      %s127 = sphi 0, %s124
      %s128 = sphi 0, %s127
      %s144 = sphi 0, %s128
      %s150 = sphi 0, %s152
      %s153 = sphi 0, %s150
      %s154 = sphi 0, %s153
      %s170 = sphi 0, %s154
      %s176 = sphi 0, %s178
      %s179 = sphi 0, %s176
      %s180 = sphi 0, %s179
      %s196 = sphi 0, %s180
      %s202 = sphi 0, %s204
      %s205 = sphi 0, %s202
      %s206 = sphi 0, %s205
      %s222 = sphi 0, %s206
      %s228 = sphi 0, %s230
      %s231 = sphi 0, %s228
      %s232 = sphi 0, %s231
      %s248 = sphi 0, %s232
      %s254 = sphi 0, %s256
      %s257 = sphi 0, %s254
      %s258 = sphi 0, %s257
      %s274 = sphi 0, %s258
      %s280 = sphi 0, %s282
      %s283 = sphi 0, %s280
      %s284 = sphi 0, %s283
      %s300 = sphi 0, %s284
      %s306 = sphi 0, %s308
      %s309 = sphi 0, %s306
      %s310 = sphi 0, %s309
      %s326 = sphi 0, %s310
      %s332 = sphi 0, %s334
      %s335 = sphi 0, %s332
      %s336 = sphi 0, %s335
      %s352 = sphi 0, %s336
      %s358 = sphi 0, %s360
      %s361 = sphi 0, %s358
      %s362 = sphi 0, %s361
      %s378 = sphi 0, %s362
      %s384 = sphi 0, %s386
      %s387 = sphi 0, %s384
      %s388 = sphi 0, %s387
      %s404 = sphi 0, %s388
      %s410 = sphi 0, %s412
      %s413 = sphi 0, %s410
      %s414 = sphi 0, %s413
      %s430 = sphi 0, %s414
      %s436 = sphi 0, %s438
      %s439 = sphi 0, %s436
      %s440 = sphi 0, %s439
      %s456 = sphi 0, %s440
    $region4: #{tmixer_forward.1} parent=1 // loop_header_branch
      %27 = sbr.rel (%p25) target = $region8
    $region5: #{tmixer_forward.1} parent=1 // loop_body
      %s29 = ssub.s32 %s24, 1
      %s30 = ssub.s32 %s24, 2
      %s37 = sadd.s32 1, %s32
      %p38 = scmp.ge.s32.totalorder %s37, 2
      %s39 = scalar_select %p38, 0, %s37
      %s40 = sadd.s32 1, %s31
      %s41 = scalar_select %p38, %s40, %s31
      %p42 = scmp.ge.s32.totalorder %s41, 2
      %s43 = scalar_select %p42, 0, %s41
      %s44 = ssub.s32 %s31, %s43
      %p45 = scmp.eq.s32.totalorder %s44, 0
      %s47 = sadd.s32 %s46, 1
      %s48 = scalar_select %p45, %s46, %s47
      %p51 = pneg %p45
      %p52 = scmp.eq.s32.totalorder %s24, 3
      %p53 = por %p51, %p52
      %p54 = scmp.ne.s32.totalorder %s46, %s49
      %p55 = scmp.eq.s32.totalorder %s24, 0
      %p56 = por %p54, %p55
      %p57 = scmp.ne.s32.totalorder %s46, %s49
      %p58 = scmp.eq.s32.totalorder %s29, 3
      %p59 = por %p57, %p58
      %p60 = scmp.ne.s32.totalorder %s49, %s50
      %p61 = scmp.eq.s32.totalorder %s29, 0
      %p62 = por %p60, %p61
      %p63 = scmp.ne.s32.totalorder %s49, %s50
      %p64 = scmp.eq.s32.totalorder %s30, 3
      %p65 = por %p63, %p64
      %p67 = scmp.ne.s32.totalorder %s50, %s66
      %p68 = scmp.eq.s32.totalorder %s30, 0
      %p69 = por %p67, %p68
      %s70 = ssub.s32 %s31, %s43
      %p71 = scmp.eq.s32.totalorder %s70, 0
      %s73 = sadd.s32 %s72, 1
      %s74 = scalar_select %p71, %s72, %s73
      %p77 = pneg %p71
      %p78 = scmp.eq.s32.totalorder %s24, 3
      %p79 = por %p77, %p78
      %p80 = scmp.ne.s32.totalorder %s72, %s75
      %p81 = scmp.eq.s32.totalorder %s24, 0
      %p82 = por %p80, %p81
      %p83 = scmp.ne.s32.totalorder %s72, %s75
      %p84 = scmp.eq.s32.totalorder %s29, 3
      %p85 = por %p83, %p84
      %p86 = scmp.ne.s32.totalorder %s75, %s76
      %p87 = scmp.eq.s32.totalorder %s29, 0
      %p88 = por %p86, %p87
      %p89 = scmp.ne.s32.totalorder %s75, %s76
      %p90 = scmp.eq.s32.totalorder %s30, 3
      %p91 = por %p89, %p90
      %p93 = scmp.ne.s32.totalorder %s76, %s92
      %p94 = scmp.eq.s32.totalorder %s30, 0
      %p95 = por %p93, %p94
      %s96 = ssub.s32 %s31, %s43
      %p97 = scmp.eq.s32.totalorder %s96, 0
      %s99 = sadd.s32 %s98, 1
      %s100 = scalar_select %p97, %s98, %s99
      %p103 = pneg %p97
      %p104 = scmp.eq.s32.totalorder %s24, 3
      %p105 = por %p103, %p104
      %p106 = scmp.ne.s32.totalorder %s98, %s101
      %p107 = scmp.eq.s32.totalorder %s24, 0
      %p108 = por %p106, %p107
      %p109 = scmp.ne.s32.totalorder %s98, %s101
      %p110 = scmp.eq.s32.totalorder %s29, 3
      %p111 = por %p109, %p110
      %p112 = scmp.ne.s32.totalorder %s101, %s102
      %p113 = scmp.eq.s32.totalorder %s29, 0
      %p114 = por %p112, %p113
      %p115 = scmp.ne.s32.totalorder %s101, %s102
      %p116 = scmp.eq.s32.totalorder %s30, 3
      %p117 = por %p115, %p116
      %p119 = scmp.ne.s32.totalorder %s102, %s118
      %p120 = scmp.eq.s32.totalorder %s30, 0
      %p121 = por %p119, %p120
      %s122 = ssub.s32 %s32, %s39
      %p123 = scmp.eq.s32.totalorder %s122, 0
      %s125 = sadd.s32 %s124, 1
      %s126 = scalar_select %p123, %s124, %s125
      %p129 = pneg %p123
      %p130 = scmp.eq.s32.totalorder %s24, 3
      %p131 = por %p129, %p130
      %p132 = scmp.ne.s32.totalorder %s124, %s127
      %p133 = scmp.eq.s32.totalorder %s24, 0
      %p134 = por %p132, %p133
      %p135 = scmp.ne.s32.totalorder %s124, %s127
      %p136 = scmp.eq.s32.totalorder %s29, 3
      %p137 = por %p135, %p136
      %p138 = scmp.ne.s32.totalorder %s127, %s128
      %p139 = scmp.eq.s32.totalorder %s29, 0
      %p140 = por %p138, %p139
      %p141 = scmp.ne.s32.totalorder %s127, %s128
      %p142 = scmp.eq.s32.totalorder %s30, 3
      %p143 = por %p141, %p142
      %p145 = scmp.ne.s32.totalorder %s128, %s144
      %p146 = scmp.eq.s32.totalorder %s30, 0
      %p147 = por %p145, %p146
      %s148 = ssub.s32 %s32, %s39
      %p149 = scmp.eq.s32.totalorder %s148, 0
      %s151 = sadd.s32 %s150, 1
      %s152 = scalar_select %p149, %s150, %s151
      %p155 = pneg %p149
      %p156 = scmp.eq.s32.totalorder %s24, 3
      %p157 = por %p155, %p156
      %p158 = scmp.ne.s32.totalorder %s150, %s153
      %p159 = scmp.eq.s32.totalorder %s24, 0
      %p160 = por %p158, %p159
      %p161 = scmp.ne.s32.totalorder %s150, %s153
      %p162 = scmp.eq.s32.totalorder %s29, 3
      %p163 = por %p161, %p162
      %p164 = scmp.ne.s32.totalorder %s153, %s154
      %p165 = scmp.eq.s32.totalorder %s29, 0
      %p166 = por %p164, %p165
      %p167 = scmp.ne.s32.totalorder %s153, %s154
      %p168 = scmp.eq.s32.totalorder %s30, 3
      %p169 = por %p167, %p168
      %p171 = scmp.ne.s32.totalorder %s154, %s170
      %p172 = scmp.eq.s32.totalorder %s30, 0
      %p173 = por %p171, %p172
      %s174 = ssub.s32 %s32, %s39
      %p175 = scmp.eq.s32.totalorder %s174, 0
      %s177 = sadd.s32 %s176, 1
      %s178 = scalar_select %p175, %s176, %s177
      %p181 = pneg %p175
      %p182 = scmp.eq.s32.totalorder %s24, 3
      %p183 = por %p181, %p182
      %p184 = scmp.ne.s32.totalorder %s176, %s179
      %p185 = scmp.eq.s32.totalorder %s24, 0
      %p186 = por %p184, %p185
      %p187 = scmp.ne.s32.totalorder %s176, %s179
      %p188 = scmp.eq.s32.totalorder %s29, 3
      %p189 = por %p187, %p188
      %p190 = scmp.ne.s32.totalorder %s179, %s180
      %p191 = scmp.eq.s32.totalorder %s29, 0
      %p192 = por %p190, %p191
      %p193 = scmp.ne.s32.totalorder %s179, %s180
      %p194 = scmp.eq.s32.totalorder %s30, 3
      %p195 = por %p193, %p194
      %p197 = scmp.ne.s32.totalorder %s180, %s196
      %p198 = scmp.eq.s32.totalorder %s30, 0
      %p199 = por %p197, %p198
      %s200 = ssub.s32 %s32, %s39
      %p201 = scmp.eq.s32.totalorder %s200, 0
      %s203 = sadd.s32 %s202, 1
      %s204 = scalar_select %p201, %s202, %s203
      %p207 = pneg %p201
      %p208 = scmp.eq.s32.totalorder %s24, 3
      %p209 = por %p207, %p208
      %p210 = scmp.ne.s32.totalorder %s202, %s205
      %p211 = scmp.eq.s32.totalorder %s24, 0
      %p212 = por %p210, %p211
      %p213 = scmp.ne.s32.totalorder %s202, %s205
      %p214 = scmp.eq.s32.totalorder %s29, 3
      %p215 = por %p213, %p214
      %p216 = scmp.ne.s32.totalorder %s205, %s206
      %p217 = scmp.eq.s32.totalorder %s29, 0
      %p218 = por %p216, %p217
      %p219 = scmp.ne.s32.totalorder %s205, %s206
      %p220 = scmp.eq.s32.totalorder %s30, 3
      %p221 = por %p219, %p220
      %p223 = scmp.ne.s32.totalorder %s206, %s222
      %p224 = scmp.eq.s32.totalorder %s30, 0
      %p225 = por %p223, %p224
      %s226 = ssub.s32 %s32, %s39
      %p227 = scmp.eq.s32.totalorder %s226, 0
      %s229 = sadd.s32 %s228, 1
      %s230 = scalar_select %p227, %s228, %s229
      %p233 = pneg %p227
      %p234 = scmp.eq.s32.totalorder %s24, 3
      %p235 = por %p233, %p234
      %p236 = scmp.ne.s32.totalorder %s228, %s231
      %p237 = scmp.eq.s32.totalorder %s24, 0
      %p238 = por %p236, %p237
      %p239 = scmp.ne.s32.totalorder %s228, %s231
      %p240 = scmp.eq.s32.totalorder %s29, 3
      %p241 = por %p239, %p240
      %p242 = scmp.ne.s32.totalorder %s231, %s232
      %p243 = scmp.eq.s32.totalorder %s29, 0
      %p244 = por %p242, %p243
      %p245 = scmp.ne.s32.totalorder %s231, %s232
      %p246 = scmp.eq.s32.totalorder %s30, 3
      %p247 = por %p245, %p246
      %p249 = scmp.ne.s32.totalorder %s232, %s248
      %p250 = scmp.eq.s32.totalorder %s30, 0
      %p251 = por %p249, %p250
      %s252 = ssub.s32 %s32, %s39
      %p253 = scmp.eq.s32.totalorder %s252, 0
      %s255 = sadd.s32 %s254, 1
      %s256 = scalar_select %p253, %s254, %s255
      %p259 = pneg %p253
      %p260 = scmp.eq.s32.totalorder %s24, 3
      %p261 = por %p259, %p260
      %p262 = scmp.ne.s32.totalorder %s254, %s257
      %p263 = scmp.eq.s32.totalorder %s24, 0
      %p264 = por %p262, %p263
      %p265 = scmp.ne.s32.totalorder %s254, %s257
      %p266 = scmp.eq.s32.totalorder %s29, 3
      %p267 = por %p265, %p266
      %p268 = scmp.ne.s32.totalorder %s257, %s258
      %p269 = scmp.eq.s32.totalorder %s29, 0
      %p270 = por %p268, %p269
      %p271 = scmp.ne.s32.totalorder %s257, %s258
      %p272 = scmp.eq.s32.totalorder %s30, 3
      %p273 = por %p271, %p272
      %p275 = scmp.ne.s32.totalorder %s258, %s274
      %p276 = scmp.eq.s32.totalorder %s30, 0
      %p277 = por %p275, %p276
      %s278 = ssub.s32 %s32, %s39
      %p279 = scmp.eq.s32.totalorder %s278, 0
      %s281 = sadd.s32 %s280, 1
      %s282 = scalar_select %p279, %s280, %s281
      %p285 = pneg %p279
      %p286 = scmp.eq.s32.totalorder %s24, 3
      %p287 = por %p285, %p286
      %p288 = scmp.ne.s32.totalorder %s280, %s283
      %p289 = scmp.eq.s32.totalorder %s24, 0
      %p290 = por %p288, %p289
      %p291 = scmp.ne.s32.totalorder %s280, %s283
      %p292 = scmp.eq.s32.totalorder %s29, 3
      %p293 = por %p291, %p292
      %p294 = scmp.ne.s32.totalorder %s283, %s284
      %p295 = scmp.eq.s32.totalorder %s29, 0
      %p296 = por %p294, %p295
      %p297 = scmp.ne.s32.totalorder %s283, %s284
      %p298 = scmp.eq.s32.totalorder %s30, 3
      %p299 = por %p297, %p298
      %p301 = scmp.ne.s32.totalorder %s284, %s300
      %p302 = scmp.eq.s32.totalorder %s30, 0
      %p303 = por %p301, %p302
      %s304 = ssub.s32 %s32, %s39
      %p305 = scmp.eq.s32.totalorder %s304, 0
      %s307 = sadd.s32 %s306, 1
      %s308 = scalar_select %p305, %s306, %s307
      %p311 = pneg %p305
      %p312 = scmp.eq.s32.totalorder %s24, 3
      %p313 = por %p311, %p312
      %p314 = scmp.ne.s32.totalorder %s306, %s309
      %p315 = scmp.eq.s32.totalorder %s24, 0
      %p316 = por %p314, %p315
      %p317 = scmp.ne.s32.totalorder %s306, %s309
      %p318 = scmp.eq.s32.totalorder %s29, 3
      %p319 = por %p317, %p318
      %p320 = scmp.ne.s32.totalorder %s309, %s310
      %p321 = scmp.eq.s32.totalorder %s29, 0
      %p322 = por %p320, %p321
      %p323 = scmp.ne.s32.totalorder %s309, %s310
      %p324 = scmp.eq.s32.totalorder %s30, 3
      %p325 = por %p323, %p324
      %p327 = scmp.ne.s32.totalorder %s310, %s326
      %p328 = scmp.eq.s32.totalorder %s30, 0
      %p329 = por %p327, %p328
      %s330 = ssub.s32 %s32, %s39
      %p331 = scmp.eq.s32.totalorder %s330, 0
      %s333 = sadd.s32 %s332, 1
      %s334 = scalar_select %p331, %s332, %s333
      %p337 = pneg %p331
      %p338 = scmp.eq.s32.totalorder %s24, 3
      %p339 = por %p337, %p338
      %p340 = scmp.ne.s32.totalorder %s332, %s335
      %p341 = scmp.eq.s32.totalorder %s24, 0
      %p342 = por %p340, %p341
      %p343 = scmp.ne.s32.totalorder %s332, %s335
      %p344 = scmp.eq.s32.totalorder %s29, 3
      %p345 = por %p343, %p344
      %p346 = scmp.ne.s32.totalorder %s335, %s336
      %p347 = scmp.eq.s32.totalorder %s29, 0
      %p348 = por %p346, %p347
      %p349 = scmp.ne.s32.totalorder %s335, %s336
      %p350 = scmp.eq.s32.totalorder %s30, 3
      %p351 = por %p349, %p350
      %p353 = scmp.ne.s32.totalorder %s336, %s352
      %p354 = scmp.eq.s32.totalorder %s30, 0
      %p355 = por %p353, %p354
      %s356 = ssub.s32 %s32, %s39
      %p357 = scmp.eq.s32.totalorder %s356, 0
      %s359 = sadd.s32 %s358, 1
      %s360 = scalar_select %p357, %s358, %s359
      %p363 = pneg %p357
      %p364 = scmp.eq.s32.totalorder %s24, 3
      %p365 = por %p363, %p364
      %p366 = scmp.ne.s32.totalorder %s358, %s361
      %p367 = scmp.eq.s32.totalorder %s24, 0
      %p368 = por %p366, %p367
      %p369 = scmp.ne.s32.totalorder %s358, %s361
      %p370 = scmp.eq.s32.totalorder %s29, 3
      %p371 = por %p369, %p370
      %p372 = scmp.ne.s32.totalorder %s361, %s362
      %p373 = scmp.eq.s32.totalorder %s29, 0
      %p374 = por %p372, %p373
      %p375 = scmp.ne.s32.totalorder %s361, %s362
      %p376 = scmp.eq.s32.totalorder %s30, 3
      %p377 = por %p375, %p376
      %p379 = scmp.ne.s32.totalorder %s362, %s378
      %p380 = scmp.eq.s32.totalorder %s30, 0
      %p381 = por %p379, %p380
      %s382 = ssub.s32 %s32, %s39
      %p383 = scmp.eq.s32.totalorder %s382, 0
      %s385 = sadd.s32 %s384, 1
      %s386 = scalar_select %p383, %s384, %s385
      %p389 = pneg %p383
      %p390 = scmp.eq.s32.totalorder %s24, 3
      %p391 = por %p389, %p390
      %p392 = scmp.ne.s32.totalorder %s384, %s387
      %p393 = scmp.eq.s32.totalorder %s24, 0
      %p394 = por %p392, %p393
      %p395 = scmp.ne.s32.totalorder %s384, %s387
      %p396 = scmp.eq.s32.totalorder %s29, 3
      %p397 = por %p395, %p396
      %p398 = scmp.ne.s32.totalorder %s387, %s388
      %p399 = scmp.eq.s32.totalorder %s29, 0
      %p400 = por %p398, %p399
      %p401 = scmp.ne.s32.totalorder %s387, %s388
      %p402 = scmp.eq.s32.totalorder %s30, 3
      %p403 = por %p401, %p402
      %p405 = scmp.ne.s32.totalorder %s388, %s404
      %p406 = scmp.eq.s32.totalorder %s30, 0
      %p407 = por %p405, %p406
      %s408 = ssub.s32 %s32, %s39
      %p409 = scmp.eq.s32.totalorder %s408, 0
      %s411 = sadd.s32 %s410, 1
      %s412 = scalar_select %p409, %s410, %s411
      %p415 = pneg %p409
      %p416 = scmp.eq.s32.totalorder %s24, 3
      %p417 = por %p415, %p416
      %p418 = scmp.ne.s32.totalorder %s410, %s413
      %p419 = scmp.eq.s32.totalorder %s24, 0
      %p420 = por %p418, %p419
      %p421 = scmp.ne.s32.totalorder %s410, %s413
      %p422 = scmp.eq.s32.totalorder %s29, 3
      %p423 = por %p421, %p422
      %p424 = scmp.ne.s32.totalorder %s413, %s414
      %p425 = scmp.eq.s32.totalorder %s29, 0
      %p426 = por %p424, %p425
      %p427 = scmp.ne.s32.totalorder %s413, %s414
      %p428 = scmp.eq.s32.totalorder %s30, 3
      %p429 = por %p427, %p428
      %p431 = scmp.ne.s32.totalorder %s414, %s430
      %p432 = scmp.eq.s32.totalorder %s30, 0
      %p433 = por %p431, %p432
      %s434 = ssub.s32 %s31, %s43
      %p435 = scmp.eq.s32.totalorder %s434, 0
      %s437 = sadd.s32 %s436, 1
      %s438 = scalar_select %p435, %s436, %s437
      %p441 = pneg %p435
      %p442 = scmp.eq.s32.totalorder %s24, 3
      %p443 = por %p441, %p442
      %p444 = scmp.ne.s32.totalorder %s436, %s439
      %p445 = scmp.eq.s32.totalorder %s24, 0
      %p446 = por %p444, %p445
      %p447 = scmp.ne.s32.totalorder %s436, %s439
      %p448 = scmp.eq.s32.totalorder %s29, 3
      %p449 = por %p447, %p448
      %p450 = scmp.ne.s32.totalorder %s439, %s440
      %p451 = scmp.eq.s32.totalorder %s29, 0
      %p452 = por %p450, %p451
      %p453 = scmp.ne.s32.totalorder %s439, %s440
      %p454 = scmp.eq.s32.totalorder %s30, 3
      %p455 = por %p453, %p454
      %p457 = scmp.ne.s32.totalorder %s440, %s456
      %p458 = scmp.eq.s32.totalorder %s30, 0
      %p459 = por %p457, %p458
      %p460 = scmp.le.s32.totalorder 1, %s24
      %p461 = scmp.lt.s32.totalorder %s24, 5
      %p462 = pnand %p460, %p461
      %p463 = pneg %p462
      // Predicated region
      $region9: #{tmixer_forward.1} parent=5 // pred_check
        _
      $region10: #{tmixer_forward.1} parent=5 // pred_check_branch
        %465 = sbr.rel (%p462) target = $region12
      $region11: #{tmixer_forward.1} parent=5 // pred_region
        %s466 = ssub.s32 %s24, 1
      $region12: #{tmixer_forward.1} parent=5 // pred_fallthru
        _
      %p467 = scmp.lt.s32.totalorder %s24, 4
      // Predicated region
      $region13: #{tmixer_forward.1} parent=5 // pred_check
        %p468 = pneg %p467
      $region14: #{tmixer_forward.1} parent=5 // pred_check_branch
        %470 = sbr.rel (%p468) target = $region16
      $region15: #{tmixer_forward.1} parent=5 // pred_region
        // Predicated region
        $region17: #{tmixer_forward.1} parent=15 // pred_check
          %p471 = pneg %p56
        $region18: #{tmixer_forward.1} parent=15 // pred_check_branch
          %473 = sbr.rel (%p471) target = $region20
        $region19: #{tmixer_forward.1} parent=15 // pred_region
          %p474 = scmp.lt.s32.totalorder %s31, 1
          %s475 = scalar_select %p474, %s31, 1
          %s476 = smul.addr %s475, 8
          %s477 = smul.addr %s476, 8
          %s478 = scalar_lea.vmem %s0, %s477
        $region20: #{tmixer_forward.1} parent=15 // pred_fallthru
          _
        // Predicated region
        $region21: #{tmixer_forward.1} parent=15 // pred_check
          %p479 = pneg %p82
        $region22: #{tmixer_forward.1} parent=15 // pred_check_branch
          %481 = sbr.rel (%p479) target = $region24
        $region23: #{tmixer_forward.1} parent=15 // pred_region
          %p482 = scmp.lt.s32.totalorder %s31, 1
          %s483 = scalar_select %p482, %s31, 1
          %s484 = smul.addr %s483, 32
          %s485 = smul.addr %s484, 4
          %s486 = scalar_lea.vmem %s1, %s485
        $region24: #{tmixer_forward.1} parent=15 // pred_fallthru
          _
        // Predicated region
        $region25: #{tmixer_forward.1} parent=15 // pred_check
          %p487 = pneg %p108
        $region26: #{tmixer_forward.1} parent=15 // pred_check_branch
          %489 = sbr.rel (%p487) target = $region28
        $region27: #{tmixer_forward.1} parent=15 // pred_region
          %p490 = scmp.lt.s32.totalorder %s31, 1
          %s491 = scalar_select %p490, %s31, 1
          %s492 = smul.addr %s491, 32
          %s493 = smul.addr %s492, 4
          %s494 = scalar_lea.vmem %s2, %s493
        $region28: #{tmixer_forward.1} parent=15 // pred_fallthru
          _
        // Predicated region
        $region29: #{tmixer_forward.1} parent=15 // pred_check
          %p495 = pneg %p134
        $region30: #{tmixer_forward.1} parent=15 // pred_check_branch
          %497 = sbr.rel (%p495) target = $region32
        $region31: #{tmixer_forward.1} parent=15 // pred_region
          %p498 = scmp.lt.s32.totalorder %s32, 1
          %s499 = scalar_select %p498, %s32, 1
          %s500 = smul.addr %s499, 8
          %s501 = smul.addr %s500, 4
          %s502 = scalar_lea.vmem %s3, %s501
        $region32: #{tmixer_forward.1} parent=15 // pred_fallthru
          _
        // Predicated region
        $region33: #{tmixer_forward.1} parent=15 // pred_check
          %p503 = pneg %p160
        $region34: #{tmixer_forward.1} parent=15 // pred_check_branch
          %505 = sbr.rel (%p503) target = $region36
        $region35: #{tmixer_forward.1} parent=15 // pred_region
          %p506 = scmp.lt.s32.totalorder %s32, 1
          %s507 = scalar_select %p506, %s32, 1
          %s508 = smul.addr %s507, 8
          %s509 = smul.addr %s508, 4
          %s510 = scalar_lea.vmem %s4, %s509
        $region36: #{tmixer_forward.1} parent=15 // pred_fallthru
          _
        // Predicated region
        $region37: #{tmixer_forward.1} parent=15 // pred_check
          %p511 = pneg %p186
        $region38: #{tmixer_forward.1} parent=15 // pred_check_branch
          %513 = sbr.rel (%p511) target = $region40
        $region39: #{tmixer_forward.1} parent=15 // pred_region
          %p514 = scmp.lt.s32.totalorder %s32, 1
          %s515 = scalar_select %p514, %s32, 1
          %s516 = smul.addr %s515, 8
          %s517 = smul.addr %s516, 4
          %s518 = scalar_lea.vmem %s5, %s517
        $region40: #{tmixer_forward.1} parent=15 // pred_fallthru
          _
        // Predicated region
        $region41: #{tmixer_forward.1} parent=15 // pred_check
          %p519 = pneg %p212
        $region42: #{tmixer_forward.1} parent=15 // pred_check_branch
          %521 = sbr.rel (%p519) target = $region44
        $region43: #{tmixer_forward.1} parent=15 // pred_region
          %p522 = scmp.lt.s32.totalorder %s32, 1
          %s523 = scalar_select %p522, %s32, 1
          %s524 = scalar_lea.vmem %s6, %s523
        $region44: #{tmixer_forward.1} parent=15 // pred_fallthru
          _
        // Predicated region
        $region45: #{tmixer_forward.1} parent=15 // pred_check
          %p525 = pneg %p238
        $region46: #{tmixer_forward.1} parent=15 // pred_check_branch
          %527 = sbr.rel (%p525) target = $region48
        $region47: #{tmixer_forward.1} parent=15 // pred_region
          %p528 = scmp.lt.s32.totalorder %s32, 1
          %s529 = scalar_select %p528, %s32, 1
          %s530 = scalar_lea.vmem %s7, %s529
        $region48: #{tmixer_forward.1} parent=15 // pred_fallthru
          _
        // Predicated region
        $region49: #{tmixer_forward.1} parent=15 // pred_check
          %p531 = pneg %p264
        $region50: #{tmixer_forward.1} parent=15 // pred_check_branch
          %533 = sbr.rel (%p531) target = $region52
        $region51: #{tmixer_forward.1} parent=15 // pred_region
          %p534 = scmp.lt.s32.totalorder %s32, 1
          %s535 = scalar_select %p534, %s32, 1
          %s536 = scalar_lea.vmem %s8, %s535
        $region52: #{tmixer_forward.1} parent=15 // pred_fallthru
          _
        // Predicated region
        $region53: #{tmixer_forward.1} parent=15 // pred_check
          %p537 = pneg %p290
        $region54: #{tmixer_forward.1} parent=15 // pred_check_branch
          %539 = sbr.rel (%p537) target = $region56
        $region55: #{tmixer_forward.1} parent=15 // pred_region
          %p540 = scmp.lt.s32.totalorder %s32, 1
          %s541 = scalar_select %p540, %s32, 1
          %s542 = smul.addr %s541, 8
          %s543 = smul.addr %s542, 4
          %s544 = scalar_lea.vmem %s9, %s543
        $region56: #{tmixer_forward.1} parent=15 // pred_fallthru
          _
        // Predicated region
        $region57: #{tmixer_forward.1} parent=15 // pred_check
          %p545 = pneg %p316
        $region58: #{tmixer_forward.1} parent=15 // pred_check_branch
          %547 = sbr.rel (%p545) target = $region60
        $region59: #{tmixer_forward.1} parent=15 // pred_region
          %p548 = scmp.lt.s32.totalorder %s32, 1
          %s549 = scalar_select %p548, %s32, 1
          %s550 = scalar_lea.vmem %s10, %s549
        $region60: #{tmixer_forward.1} parent=15 // pred_fallthru
          _
        // Predicated region
        $region61: #{tmixer_forward.1} parent=15 // pred_check
          %p551 = pneg %p342
        $region62: #{tmixer_forward.1} parent=15 // pred_check_branch
          %553 = sbr.rel (%p551) target = $region64
        $region63: #{tmixer_forward.1} parent=15 // pred_region
          %p554 = scmp.lt.s32.totalorder %s32, 1
          %s555 = scalar_select %p554, %s32, 1
          %s556 = smul.addr %s555, 16
          %s557 = smul.addr %s556, 4
          %s558 = scalar_lea.vmem %s11, %s557
        $region64: #{tmixer_forward.1} parent=15 // pred_fallthru
          _
        // Predicated region
        $region65: #{tmixer_forward.1} parent=15 // pred_check
          %p559 = pneg %p368
        $region66: #{tmixer_forward.1} parent=15 // pred_check_branch
          %561 = sbr.rel (%p559) target = $region68
        $region67: #{tmixer_forward.1} parent=15 // pred_region
          %p562 = scmp.lt.s32.totalorder %s32, 1
          %s563 = scalar_select %p562, %s32, 1
          %s564 = smul.addr %s563, 2
          %s565 = scalar_lea.vmem %s12, %s564
        $region68: #{tmixer_forward.1} parent=15 // pred_fallthru
          _
        // Predicated region
        $region69: #{tmixer_forward.1} parent=15 // pred_check
          %p566 = pneg %p394
        $region70: #{tmixer_forward.1} parent=15 // pred_check_branch
          %568 = sbr.rel (%p566) target = $region72
        $region71: #{tmixer_forward.1} parent=15 // pred_region
          %p569 = scmp.lt.s32.totalorder %s32, 1
          %s570 = scalar_select %p569, %s32, 1
          %s571 = smul.addr %s570, 32
          %s572 = smul.addr %s571, 4
          %s573 = scalar_lea.vmem %s13, %s572
        $region72: #{tmixer_forward.1} parent=15 // pred_fallthru
          _
        // Predicated region
        $region73: #{tmixer_forward.1} parent=15 // pred_check
          %p574 = pneg %p420
        $region74: #{tmixer_forward.1} parent=15 // pred_check_branch
          %576 = sbr.rel (%p574) target = $region76
        $region75: #{tmixer_forward.1} parent=15 // pred_region
          %p577 = scmp.lt.s32.totalorder %s32, 1
          %s578 = scalar_select %p577, %s32, 1
          %s579 = scalar_lea.vmem %s14, %s578
        $region76: #{tmixer_forward.1} parent=15 // pred_fallthru
          _
      $region16: #{tmixer_forward.1} parent=5 // pred_fallthru
        _
      %p580 = scmp.le.s32.totalorder 1, %s24
      %p581 = scmp.lt.s32.totalorder %s24, 5
      %p582 = pnand %p580, %p581
      %p583 = pneg %p582
      // Predicated region
      $region77: #{tmixer_forward.1} parent=5 // pred_check
        _
      $region78: #{tmixer_forward.1} parent=5 // pred_check_branch
        %585 = sbr.rel (%p582) target = $region80
      $region79: #{tmixer_forward.1} parent=5 // pred_region
        %s586 = ssub.s32 %s24, 1
        %p587 = scmp.lt.s32.totalorder %s33, 1
        %s588 = scalar_select %p587, %s33, 1
        %s589 = smul.addr %s588, 8
        %s590 = smul.addr %s589, 8
        %s591 = scalar_lea.vmem %s0, %s590
        %p592 = pneg %p62
        %p593 = pneg %p59
        %p594 = scmp.lt.s32.totalorder %s33, 1
        %s595 = scalar_select %p594, %s33, 1
        %s596 = smul.addr %s595, 32
        %s597 = smul.addr %s596, 4
        %s598 = scalar_lea.vmem %s1, %s597
        %p599 = pneg %p88
        %p600 = pneg %p85
        %p601 = scmp.lt.s32.totalorder %s33, 1
        %s602 = scalar_select %p601, %s33, 1
        %s603 = smul.addr %s602, 32
        %s604 = smul.addr %s603, 4
        %s605 = scalar_lea.vmem %s2, %s604
        %p606 = pneg %p114
        %p607 = pneg %p111
        %p608 = scmp.lt.s32.totalorder %s34, 1
        %s609 = scalar_select %p608, %s34, 1
        %s610 = smul.addr %s609, 8
        %s611 = smul.addr %s610, 4
        %s612 = scalar_lea.vmem %s3, %s611
        %p613 = pneg %p140
        %p614 = pneg %p137
        %p615 = scmp.lt.s32.totalorder %s34, 1
        %s616 = scalar_select %p615, %s34, 1
        %s617 = smul.addr %s616, 8
        %s618 = smul.addr %s617, 4
        %s619 = scalar_lea.vmem %s4, %s618
        %p620 = pneg %p166
        %p621 = pneg %p163
        %p622 = scmp.lt.s32.totalorder %s34, 1
        %s623 = scalar_select %p622, %s34, 1
        %s624 = smul.addr %s623, 8
        %s625 = smul.addr %s624, 4
        %s626 = scalar_lea.vmem %s5, %s625
        %p627 = pneg %p192
        %p628 = pneg %p189
        %p629 = scmp.lt.s32.totalorder %s34, 1
        %s630 = scalar_select %p629, %s34, 1
        %s631 = scalar_lea.vmem %s6, %s630
        %p632 = pneg %p218
        %p633 = pneg %p215
        %p634 = scmp.lt.s32.totalorder %s34, 1
        %s635 = scalar_select %p634, %s34, 1
        %s636 = scalar_lea.vmem %s7, %s635
        %p637 = pneg %p244
        %p638 = pneg %p241
        %p639 = scmp.lt.s32.totalorder %s34, 1
        %s640 = scalar_select %p639, %s34, 1
        %s641 = scalar_lea.vmem %s8, %s640
        %p642 = pneg %p270
        %p643 = pneg %p267
        %p644 = scmp.lt.s32.totalorder %s34, 1
        %s645 = scalar_select %p644, %s34, 1
        %s646 = smul.addr %s645, 8
        %s647 = smul.addr %s646, 4
        %s648 = scalar_lea.vmem %s9, %s647
        %p649 = pneg %p296
        %p650 = pneg %p293
        %p651 = scmp.lt.s32.totalorder %s34, 1
        %s652 = scalar_select %p651, %s34, 1
        %s653 = scalar_lea.vmem %s10, %s652
        %p654 = pneg %p322
        %p655 = pneg %p319
        %p656 = scmp.lt.s32.totalorder %s34, 1
        %s657 = scalar_select %p656, %s34, 1
        %s658 = smul.addr %s657, 16
        %s659 = smul.addr %s658, 4
        %s660 = scalar_lea.vmem %s11, %s659
        %p661 = pneg %p348
        %p662 = pneg %p345
        %p663 = scmp.lt.s32.totalorder %s34, 1
        %s664 = scalar_select %p663, %s34, 1
        %s665 = smul.addr %s664, 2
        %s666 = scalar_lea.vmem %s12, %s665
        %p667 = pneg %p374
        %p668 = pneg %p371
        %p669 = scmp.lt.s32.totalorder %s34, 1
        %s670 = scalar_select %p669, %s34, 1
        %s671 = smul.addr %s670, 32
        %s672 = smul.addr %s671, 4
        %s673 = scalar_lea.vmem %s13, %s672
        %p674 = pneg %p400
        %p675 = pneg %p397
        %p676 = scmp.lt.s32.totalorder %s34, 1
        %s677 = scalar_select %p676, %s34, 1
        %s678 = scalar_lea.vmem %s14, %s677
        %p679 = pneg %p426
        %p680 = pneg %p423
        %p681 = pneg %p452
        %p682 = pneg %p449
        %s683 = sand.u32 %s439, 1
        %s684 = scalar_lea.sflag [#allocation6], %s683
        %s685 = sand.u32 %s439, 1
        %s686 = smul.addr %s685, 64
        %s687 = scalar_lea.vmem [#allocation5], %s686
        %p688 = scmp.lt.s32.totalorder %s33, 1
        %s689 = scalar_select %p688, %s33, 1
        %s690 = smul.addr %s689, 8
        %s691 = smul.addr %s690, 8
        %s692 = scalar_lea.vmem %s0, %s691
        %p693 = scmp.lt.s32.totalorder %s33, 1
        %s694 = scalar_select %p693, %s33, 1
        %s695 = smul.addr %s694, 32
        %s696 = smul.addr %s695, 4
        %s697 = scalar_lea.vmem %s1, %s696
        %p698 = scmp.lt.s32.totalorder %s33, 1
        %s699 = scalar_select %p698, %s33, 1
        %s700 = smul.addr %s699, 32
        %s701 = smul.addr %s700, 4
        %s702 = scalar_lea.vmem %s2, %s701
        %p703 = scmp.lt.s32.totalorder %s34, 1
        %s704 = scalar_select %p703, %s34, 1
        %s705 = smul.addr %s704, 8
        %s706 = smul.addr %s705, 4
        %s707 = scalar_lea.vmem %s3, %s706
        %p708 = scmp.lt.s32.totalorder %s34, 1
        %s709 = scalar_select %p708, %s34, 1
        %s710 = smul.addr %s709, 8
        %s711 = smul.addr %s710, 4
        %s712 = scalar_lea.vmem %s4, %s711
        %p713 = scmp.lt.s32.totalorder %s34, 1
        %s714 = scalar_select %p713, %s34, 1
        %s715 = smul.addr %s714, 8
        %s716 = smul.addr %s715, 4
        %s717 = scalar_lea.vmem %s5, %s716
        %p718 = scmp.lt.s32.totalorder %s34, 1
        %s719 = scalar_select %p718, %s34, 1
        %s720 = scalar_lea.vmem %s6, %s719
        %p721 = scmp.lt.s32.totalorder %s34, 1
        %s722 = scalar_select %p721, %s34, 1
        %s723 = scalar_lea.vmem %s7, %s722
        %p724 = scmp.lt.s32.totalorder %s34, 1
        %s725 = scalar_select %p724, %s34, 1
        %s726 = scalar_lea.vmem %s8, %s725
        %p727 = scmp.lt.s32.totalorder %s34, 1
        %s728 = scalar_select %p727, %s34, 1
        %s729 = smul.addr %s728, 8
        %s730 = smul.addr %s729, 4
        %s731 = scalar_lea.vmem %s9, %s730
        %p732 = scmp.lt.s32.totalorder %s34, 1
        %s733 = scalar_select %p732, %s34, 1
        %s734 = scalar_lea.vmem %s10, %s733
        %p735 = scmp.lt.s32.totalorder %s34, 1
        %s736 = scalar_select %p735, %s34, 1
        %s737 = smul.addr %s736, 16
        %s738 = smul.addr %s737, 4
        %s739 = scalar_lea.vmem %s11, %s738
        %p740 = scmp.lt.s32.totalorder %s34, 1
        %s741 = scalar_select %p740, %s34, 1
        %s742 = smul.addr %s741, 2
        %s743 = scalar_lea.vmem %s12, %s742
        %p744 = scmp.lt.s32.totalorder %s34, 1
        %s745 = scalar_select %p744, %s34, 1
        %s746 = smul.addr %s745, 32
        %s747 = smul.addr %s746, 4
        %s748 = scalar_lea.vmem %s13, %s747
        %p749 = scmp.lt.s32.totalorder %s34, 1
        %s750 = scalar_select %p749, %s34, 1
        %s751 = scalar_lea.vmem %s14, %s750
        %p753 = scmp.eq.s32.totalorder %s34, 0
        // Predicated region
        $region81: #{tmixer_forward.1} parent=79 // pred_check
          %p754 = pneg %p753
        $region82: #{tmixer_forward.1} parent=79 // pred_check_branch
          %756 = sbr.rel (%p754) target = $region84
        $region83: #{tmixer_forward.1} parent=79 // pred_region
          %v757 = vld [vmem:[%s692] sm:$0xff]
          %v758 = vld [vmem:[%s692 + $0x8] sm:$0xff]
          %v759 = vld [vmem:[%s692 + $0x10] sm:$0xff]
          %v760 = vld [vmem:[%s692 + $0x18] sm:$0xff]
          %v761 = vld [vmem:[%s692 + $0x20] sm:$0xff]
          %v762 = vld [vmem:[%s692 + $0x28] sm:$0xff]
          %v763 = vld [vmem:[%s692 + $0x30] sm:$0xff]
          %v764 = vld [vmem:[%s692 + $0x38] sm:$0xff]
          %vm765 = vcmask 523264
          %766 = vst.msk [vmem:[#allocation2] sm:$0xff] %vm765, %v757
          %767 = vst.msk [vmem:[#allocation2 + $0x8] sm:$0xff] %vm765, %v758
          %768 = vst.msk [vmem:[#allocation2 + $0x10] sm:$0xff] %vm765, %v759
          %769 = vst.msk [vmem:[#allocation2 + $0x18] sm:$0xff] %vm765, %v760
          %770 = vst.msk [vmem:[#allocation2 + $0x20] sm:$0xff] %vm765, %v761
          %771 = vst.msk [vmem:[#allocation2 + $0x28] sm:$0xff] %vm765, %v762
          %772 = vst.msk [vmem:[#allocation2 + $0x30] sm:$0xff] %vm765, %v763
          %773 = vst.msk [vmem:[#allocation2 + $0x38] sm:$0xff] %vm765, %v764
          %v774 = vld [vmem:[%s697] sm:$0xf]
          %v775 = vld [vmem:[%s697 + $0x4] sm:$0xf]
          %v776 = vld [vmem:[%s697 + $0x8] sm:$0xf]
          %v777 = vld [vmem:[%s697 + $0xc] sm:$0xf]
          %v778 = vld [vmem:[%s697 + $0x10] sm:$0xf]
          %v779 = vld [vmem:[%s697 + $0x14] sm:$0xf]
          %v780 = vld [vmem:[%s697 + $0x18] sm:$0xf]
          %v781 = vld [vmem:[%s697 + $0x1c] sm:$0xf]
          %v782 = vld [vmem:[%s697 + $0x20] sm:$0xf]
          %v783 = vld [vmem:[%s697 + $0x24] sm:$0xf]
          %v784 = vld [vmem:[%s697 + $0x28] sm:$0xf]
          %v785 = vld [vmem:[%s697 + $0x2c] sm:$0xf]
          %v786 = vld [vmem:[%s697 + $0x30] sm:$0xf]
          %v787 = vld [vmem:[%s697 + $0x34] sm:$0xf]
          %v788 = vld [vmem:[%s697 + $0x38] sm:$0xf]
          %v789 = vld [vmem:[%s697 + $0x3c] sm:$0xf]
          %v790 = vunpack.c.l.bf16 %v774
          %v791 = vunpack.c.l.bf16 %v775
          %v792 = vunpack.c.l.bf16 %v776
          %v793 = vunpack.c.l.bf16 %v777
          %v794 = vunpack.c.l.bf16 %v778
          %v795 = vunpack.c.l.bf16 %v779
          %v796 = vunpack.c.l.bf16 %v780
          %v797 = vunpack.c.l.bf16 %v781
          %v798 = vunpack.c.l.bf16 %v782
          %v799 = vunpack.c.l.bf16 %v783
          %v800 = vunpack.c.l.bf16 %v784
          %v801 = vunpack.c.l.bf16 %v785
          %v802 = vunpack.c.l.bf16 %v786
          %v803 = vunpack.c.l.bf16 %v787
          %v804 = vunpack.c.l.bf16 %v788
          %v805 = vunpack.c.l.bf16 %v789
          %v806 = vsel %vm765, %v790, 0.0
          %807 = vadd.xlane.f32.xlu0 %v806
          %v808 = vpop.xlane.xlu0 %807
          %v809 = vsel %vm765, %v791, 0.0
          %810 = vadd.xlane.f32.xlu0 %v809
          %v811 = vpop.xlane.xlu0 %810
          %v812 = vsel %vm765, %v792, 0.0
          %813 = vadd.xlane.f32.xlu0 %v812
          %v814 = vpop.xlane.xlu0 %813
          %v815 = vsel %vm765, %v793, 0.0
          %816 = vadd.xlane.f32.xlu0 %v815
          %v817 = vpop.xlane.xlu0 %816
          %v818 = vsel %vm765, %v794, 0.0
          %819 = vadd.xlane.f32.xlu0 %v818
          %v820 = vpop.xlane.xlu0 %819
          %v821 = vsel %vm765, %v795, 0.0
          %822 = vadd.xlane.f32.xlu0 %v821
          %v823 = vpop.xlane.xlu0 %822
          %v824 = vsel %vm765, %v796, 0.0
          %825 = vadd.xlane.f32.xlu0 %v824
          %v826 = vpop.xlane.xlu0 %825
          %v827 = vsel %vm765, %v797, 0.0
          %828 = vadd.xlane.f32.xlu0 %v827
          %v829 = vpop.xlane.xlu0 %828
          %v830 = vsel %vm765, %v798, 0.0
          %831 = vadd.xlane.f32.xlu0 %v830
          %v832 = vpop.xlane.xlu0 %831
          %v833 = vsel %vm765, %v799, 0.0
          %834 = vadd.xlane.f32.xlu0 %v833
          %v835 = vpop.xlane.xlu0 %834
          %v836 = vsel %vm765, %v800, 0.0
          %837 = vadd.xlane.f32.xlu0 %v836
          %v838 = vpop.xlane.xlu0 %837
          %v839 = vsel %vm765, %v801, 0.0
          %840 = vadd.xlane.f32.xlu0 %v839
          %v841 = vpop.xlane.xlu0 %840
          %v842 = vsel %vm765, %v802, 0.0
          %843 = vadd.xlane.f32.xlu0 %v842
          %v844 = vpop.xlane.xlu0 %843
          %v845 = vsel %vm765, %v803, 0.0
          %846 = vadd.xlane.f32.xlu0 %v845
          %v847 = vpop.xlane.xlu0 %846
          %v848 = vsel %vm765, %v804, 0.0
          %849 = vadd.xlane.f32.xlu0 %v848
          %v850 = vpop.xlane.xlu0 %849
          %v851 = vsel %vm765, %v805, 0.0
          %852 = vadd.xlane.f32.xlu0 %v851
          %v853 = vpop.xlane.xlu0 %852
          %v854 = vrcp.pop 64.0
          %v855 = vmul.f32 %v808, %v854
          %v856 = vmul.f32 %v811, %v854
          %v857 = vmul.f32 %v814, %v854
          %v858 = vmul.f32 %v817, %v854
          %v859 = vmul.f32 %v820, %v854
          %v860 = vmul.f32 %v823, %v854
          %v861 = vmul.f32 %v826, %v854
          %v862 = vmul.f32 %v829, %v854
          %v863 = vmul.f32 %v832, %v854
          %v864 = vmul.f32 %v835, %v854
          %v865 = vmul.f32 %v838, %v854
          %v866 = vmul.f32 %v841, %v854
          %v867 = vmul.f32 %v844, %v854
          %v868 = vmul.f32 %v847, %v854
          %v869 = vmul.f32 %v850, %v854
          %v870 = vmul.f32 %v853, %v854
          %v871 = vsub.f32 %v790, %v855
          %v872 = vsub.f32 %v791, %v856
          %v873 = vsub.f32 %v792, %v857
          %v874 = vsub.f32 %v793, %v858
          %v875 = vsub.f32 %v794, %v859
          %v876 = vsub.f32 %v795, %v860
          %v877 = vsub.f32 %v796, %v861
          %v878 = vsub.f32 %v797, %v862
          %v879 = vsub.f32 %v798, %v863
          %v880 = vsub.f32 %v799, %v864
          %v881 = vsub.f32 %v800, %v865
          %v882 = vsub.f32 %v801, %v866
          %v883 = vsub.f32 %v802, %v867
          %v884 = vsub.f32 %v803, %v868
          %v885 = vsub.f32 %v804, %v869
          %v886 = vsub.f32 %v805, %v870
          %v887 = vmul.f32 %v871, %v871
          %v888 = vmul.f32 %v872, %v872
          %v889 = vmul.f32 %v873, %v873
          %v890 = vmul.f32 %v874, %v874
          %v891 = vmul.f32 %v875, %v875
          %v892 = vmul.f32 %v876, %v876
          %v893 = vmul.f32 %v877, %v877
          %v894 = vmul.f32 %v878, %v878
          %v895 = vmul.f32 %v879, %v879
          %v896 = vmul.f32 %v880, %v880
          %v897 = vmul.f32 %v881, %v881
          %v898 = vmul.f32 %v882, %v882
          %v899 = vmul.f32 %v883, %v883
          %v900 = vmul.f32 %v884, %v884
          %v901 = vmul.f32 %v885, %v885
          %v902 = vmul.f32 %v886, %v886
          %v903 = vsel %vm765, %v887, 0.0
          %904 = vadd.xlane.f32.xlu0 %v903
          %v905 = vpop.xlane.xlu0 %904
          %v906 = vsel %vm765, %v888, 0.0
          %907 = vadd.xlane.f32.xlu0 %v906
          %v908 = vpop.xlane.xlu0 %907
          %v909 = vsel %vm765, %v889, 0.0
          %910 = vadd.xlane.f32.xlu0 %v909
          %v911 = vpop.xlane.xlu0 %910
          %v912 = vsel %vm765, %v890, 0.0
          %913 = vadd.xlane.f32.xlu0 %v912
          %v914 = vpop.xlane.xlu0 %913
          %v915 = vsel %vm765, %v891, 0.0
          %916 = vadd.xlane.f32.xlu0 %v915
          %v917 = vpop.xlane.xlu0 %916
          %v918 = vsel %vm765, %v892, 0.0
          %919 = vadd.xlane.f32.xlu0 %v918
          %v920 = vpop.xlane.xlu0 %919
          %v921 = vsel %vm765, %v893, 0.0
          %922 = vadd.xlane.f32.xlu0 %v921
          %v923 = vpop.xlane.xlu0 %922
          %v924 = vsel %vm765, %v894, 0.0
          %925 = vadd.xlane.f32.xlu0 %v924
          %v926 = vpop.xlane.xlu0 %925
          %v927 = vsel %vm765, %v895, 0.0
          %928 = vadd.xlane.f32.xlu0 %v927
          %v929 = vpop.xlane.xlu0 %928
          %v930 = vsel %vm765, %v896, 0.0
          %931 = vadd.xlane.f32.xlu0 %v930
          %v932 = vpop.xlane.xlu0 %931
          %v933 = vsel %vm765, %v897, 0.0
          %934 = vadd.xlane.f32.xlu0 %v933
          %v935 = vpop.xlane.xlu0 %934
          %v936 = vsel %vm765, %v898, 0.0
          %937 = vadd.xlane.f32.xlu0 %v936
          %v938 = vpop.xlane.xlu0 %937
          %v939 = vsel %vm765, %v899, 0.0
          %940 = vadd.xlane.f32.xlu0 %v939
          %v941 = vpop.xlane.xlu0 %940
          %v942 = vsel %vm765, %v900, 0.0
          %943 = vadd.xlane.f32.xlu0 %v942
          %v944 = vpop.xlane.xlu0 %943
          %v945 = vsel %vm765, %v901, 0.0
          %946 = vadd.xlane.f32.xlu0 %v945
          %v947 = vpop.xlane.xlu0 %946
          %v948 = vsel %vm765, %v902, 0.0
          %949 = vadd.xlane.f32.xlu0 %v948
          %v950 = vpop.xlane.xlu0 %949
          %v951 = vmul.f32 %v905, %v854
          %v952 = vmul.f32 %v908, %v854
          %v953 = vmul.f32 %v911, %v854
          %v954 = vmul.f32 %v914, %v854
          %v955 = vmul.f32 %v917, %v854
          %v956 = vmul.f32 %v920, %v854
          %v957 = vmul.f32 %v923, %v854
          %v958 = vmul.f32 %v926, %v854
          %v959 = vmul.f32 %v929, %v854
          %v960 = vmul.f32 %v932, %v854
          %v961 = vmul.f32 %v935, %v854
          %v962 = vmul.f32 %v938, %v854
          %v963 = vmul.f32 %v941, %v854
          %v964 = vmul.f32 %v944, %v854
          %v965 = vmul.f32 %v947, %v854
          %v966 = vmul.f32 %v950, %v854
          %v967 = vadd.f32 %v951, 1e-05
          %v968 = vadd.f32 %v952, 1e-05
          %v969 = vadd.f32 %v953, 1e-05
          %v970 = vadd.f32 %v954, 1e-05
          %v971 = vadd.f32 %v955, 1e-05
          %v972 = vadd.f32 %v956, 1e-05
          %v973 = vadd.f32 %v957, 1e-05
          %v974 = vadd.f32 %v958, 1e-05
          %v975 = vadd.f32 %v959, 1e-05
          %v976 = vadd.f32 %v960, 1e-05
          %v977 = vadd.f32 %v961, 1e-05
          %v978 = vadd.f32 %v962, 1e-05
          %v979 = vadd.f32 %v963, 1e-05
          %v980 = vadd.f32 %v964, 1e-05
          %v981 = vadd.f32 %v965, 1e-05
          %v982 = vadd.f32 %v966, 1e-05
          %v983 = vrsqrt.pop %v967
          %v984 = vrsqrt.pop %v968
          %v985 = vrsqrt.pop %v969
          %v986 = vrsqrt.pop %v970
          %v987 = vrsqrt.pop %v971
          %v988 = vrsqrt.pop %v972
          %v989 = vrsqrt.pop %v973
          %v990 = vrsqrt.pop %v974
          %v991 = vrsqrt.pop %v975
          %v992 = vrsqrt.pop %v976
          %v993 = vrsqrt.pop %v977
          %v994 = vrsqrt.pop %v978
          %v995 = vrsqrt.pop %v979
          %v996 = vrsqrt.pop %v980
          %v997 = vrsqrt.pop %v981
          %v998 = vrsqrt.pop %v982
          %v999 = vmul.f32 %v871, %v983
          %v1000 = vmul.f32 %v872, %v984
          %v1001 = vmul.f32 %v873, %v985
          %v1002 = vmul.f32 %v874, %v986
          %v1003 = vmul.f32 %v875, %v987
          %v1004 = vmul.f32 %v876, %v988
          %v1005 = vmul.f32 %v877, %v989
          %v1006 = vmul.f32 %v878, %v990
          %v1007 = vmul.f32 %v879, %v991
          %v1008 = vmul.f32 %v880, %v992
          %v1009 = vmul.f32 %v881, %v993
          %v1010 = vmul.f32 %v882, %v994
          %v1011 = vmul.f32 %v883, %v995
          %v1012 = vmul.f32 %v884, %v996
          %v1013 = vmul.f32 %v885, %v997
          %v1014 = vmul.f32 %v886, %v998
          %v1015 = vpack.c.bf16 %v1000, %v999
          %v1016 = vpack.c.bf16 %v1002, %v1001
          %v1017 = vpack.c.bf16 %v1004, %v1003
          %v1018 = vpack.c.bf16 %v1006, %v1005
          %v1019 = vpack.c.bf16 %v1008, %v1007
          %v1020 = vpack.c.bf16 %v1010, %v1009
          %v1021 = vpack.c.bf16 %v1012, %v1011
          %v1022 = vpack.c.bf16 %v1014, %v1013
          %1023 = vst.msk [vmem:[#allocation3] sm:$0xff] %vm765, %v1015
          %1024 = vst.msk [vmem:[#allocation3 + $0x8] sm:$0xff] %vm765, %v1016
          %1025 = vst.msk [vmem:[#allocation3 + $0x10] sm:$0xff] %vm765, %v1017
          %1026 = vst.msk [vmem:[#allocation3 + $0x18] sm:$0xff] %vm765, %v1018
          %1027 = vst.msk [vmem:[#allocation3 + $0x20] sm:$0xff] %vm765, %v1019
          %1028 = vst.msk [vmem:[#allocation3 + $0x28] sm:$0xff] %vm765, %v1020
          %1029 = vst.msk [vmem:[#allocation3 + $0x30] sm:$0xff] %vm765, %v1021
          %1030 = vst.msk [vmem:[#allocation3 + $0x38] sm:$0xff] %vm765, %v1022
          %v1031 = vld [vmem:[%s702] sm:$0xf]
          %v1032 = vld [vmem:[%s702 + $0x4] sm:$0xf]
          %v1033 = vld [vmem:[%s702 + $0x8] sm:$0xf]
          %v1034 = vld [vmem:[%s702 + $0xc] sm:$0xf]
          %v1035 = vld [vmem:[%s702 + $0x10] sm:$0xf]
          %v1036 = vld [vmem:[%s702 + $0x14] sm:$0xf]
          %v1037 = vld [vmem:[%s702 + $0x18] sm:$0xf]
          %v1038 = vld [vmem:[%s702 + $0x1c] sm:$0xf]
          %v1039 = vld [vmem:[%s702 + $0x20] sm:$0xf]
          %v1040 = vld [vmem:[%s702 + $0x24] sm:$0xf]
          %v1041 = vld [vmem:[%s702 + $0x28] sm:$0xf]
          %v1042 = vld [vmem:[%s702 + $0x2c] sm:$0xf]
          %v1043 = vld [vmem:[%s702 + $0x30] sm:$0xf]
          %v1044 = vld [vmem:[%s702 + $0x34] sm:$0xf]
          %v1045 = vld [vmem:[%s702 + $0x38] sm:$0xf]
          %v1046 = vld [vmem:[%s702 + $0x3c] sm:$0xf]
          %v1047 = vunpack.c.l.bf16 %v1031
          %v1048 = vunpack.c.l.bf16 %v1032
          %v1049 = vunpack.c.l.bf16 %v1033
          %v1050 = vunpack.c.l.bf16 %v1034
          %v1051 = vunpack.c.l.bf16 %v1035
          %v1052 = vunpack.c.l.bf16 %v1036
          %v1053 = vunpack.c.l.bf16 %v1037
          %v1054 = vunpack.c.l.bf16 %v1038
          %v1055 = vunpack.c.l.bf16 %v1039
          %v1056 = vunpack.c.l.bf16 %v1040
          %v1057 = vunpack.c.l.bf16 %v1041
          %v1058 = vunpack.c.l.bf16 %v1042
          %v1059 = vunpack.c.l.bf16 %v1043
          %v1060 = vunpack.c.l.bf16 %v1044
          %v1061 = vunpack.c.l.bf16 %v1045
          %v1062 = vunpack.c.l.bf16 %v1046
          %v1063 = vsel %vm765, %v1047, 0.0
          %1064 = vadd.xlane.f32.xlu0 %v1063
          %v1065 = vpop.xlane.xlu0 %1064
          %v1066 = vsel %vm765, %v1048, 0.0
          %1067 = vadd.xlane.f32.xlu0 %v1066
          %v1068 = vpop.xlane.xlu0 %1067
          %v1069 = vsel %vm765, %v1049, 0.0
          %1070 = vadd.xlane.f32.xlu0 %v1069
          %v1071 = vpop.xlane.xlu0 %1070
          %v1072 = vsel %vm765, %v1050, 0.0
          %1073 = vadd.xlane.f32.xlu0 %v1072
          %v1074 = vpop.xlane.xlu0 %1073
          %v1075 = vsel %vm765, %v1051, 0.0
          %1076 = vadd.xlane.f32.xlu0 %v1075
          %v1077 = vpop.xlane.xlu0 %1076
          %v1078 = vsel %vm765, %v1052, 0.0
          %1079 = vadd.xlane.f32.xlu0 %v1078
          %v1080 = vpop.xlane.xlu0 %1079
          %v1081 = vsel %vm765, %v1053, 0.0
          %1082 = vadd.xlane.f32.xlu0 %v1081
          %v1083 = vpop.xlane.xlu0 %1082
          %v1084 = vsel %vm765, %v1054, 0.0
          %1085 = vadd.xlane.f32.xlu0 %v1084
          %v1086 = vpop.xlane.xlu0 %1085
          %v1087 = vsel %vm765, %v1055, 0.0
          %1088 = vadd.xlane.f32.xlu0 %v1087
          %v1089 = vpop.xlane.xlu0 %1088
          %v1090 = vsel %vm765, %v1056, 0.0
          %1091 = vadd.xlane.f32.xlu0 %v1090
          %v1092 = vpop.xlane.xlu0 %1091
          %v1093 = vsel %vm765, %v1057, 0.0
          %1094 = vadd.xlane.f32.xlu0 %v1093
          %v1095 = vpop.xlane.xlu0 %1094
          %v1096 = vsel %vm765, %v1058, 0.0
          %1097 = vadd.xlane.f32.xlu0 %v1096
          %v1098 = vpop.xlane.xlu0 %1097
          %v1099 = vsel %vm765, %v1059, 0.0
          %1100 = vadd.xlane.f32.xlu0 %v1099
          %v1101 = vpop.xlane.xlu0 %1100
          %v1102 = vsel %vm765, %v1060, 0.0
          %1103 = vadd.xlane.f32.xlu0 %v1102
          %v1104 = vpop.xlane.xlu0 %1103
          %v1105 = vsel %vm765, %v1061, 0.0
          %1106 = vadd.xlane.f32.xlu0 %v1105
          %v1107 = vpop.xlane.xlu0 %1106
          %v1108 = vsel %vm765, %v1062, 0.0
          %1109 = vadd.xlane.f32.xlu0 %v1108
          %v1110 = vpop.xlane.xlu0 %1109
          %v1111 = vmul.f32 %v1065, %v854
          %v1112 = vmul.f32 %v1068, %v854
          %v1113 = vmul.f32 %v1071, %v854
          %v1114 = vmul.f32 %v1074, %v854
          %v1115 = vmul.f32 %v1077, %v854
          %v1116 = vmul.f32 %v1080, %v854
          %v1117 = vmul.f32 %v1083, %v854
          %v1118 = vmul.f32 %v1086, %v854
          %v1119 = vmul.f32 %v1089, %v854
          %v1120 = vmul.f32 %v1092, %v854
          %v1121 = vmul.f32 %v1095, %v854
          %v1122 = vmul.f32 %v1098, %v854
          %v1123 = vmul.f32 %v1101, %v854
          %v1124 = vmul.f32 %v1104, %v854
          %v1125 = vmul.f32 %v1107, %v854
          %v1126 = vmul.f32 %v1110, %v854
          %v1127 = vsub.f32 %v1047, %v1111
          %v1128 = vsub.f32 %v1048, %v1112
          %v1129 = vsub.f32 %v1049, %v1113
          %v1130 = vsub.f32 %v1050, %v1114
          %v1131 = vsub.f32 %v1051, %v1115
          %v1132 = vsub.f32 %v1052, %v1116
          %v1133 = vsub.f32 %v1053, %v1117
          %v1134 = vsub.f32 %v1054, %v1118
          %v1135 = vsub.f32 %v1055, %v1119
          %v1136 = vsub.f32 %v1056, %v1120
          %v1137 = vsub.f32 %v1057, %v1121
          %v1138 = vsub.f32 %v1058, %v1122
          %v1139 = vsub.f32 %v1059, %v1123
          %v1140 = vsub.f32 %v1060, %v1124
          %v1141 = vsub.f32 %v1061, %v1125
          %v1142 = vsub.f32 %v1062, %v1126
          %v1143 = vmul.f32 %v1127, %v1127
          %v1144 = vmul.f32 %v1128, %v1128
          %v1145 = vmul.f32 %v1129, %v1129
          %v1146 = vmul.f32 %v1130, %v1130
          %v1147 = vmul.f32 %v1131, %v1131
          %v1148 = vmul.f32 %v1132, %v1132
          %v1149 = vmul.f32 %v1133, %v1133
          %v1150 = vmul.f32 %v1134, %v1134
          %v1151 = vmul.f32 %v1135, %v1135
          %v1152 = vmul.f32 %v1136, %v1136
          %v1153 = vmul.f32 %v1137, %v1137
          %v1154 = vmul.f32 %v1138, %v1138
          %v1155 = vmul.f32 %v1139, %v1139
          %v1156 = vmul.f32 %v1140, %v1140
          %v1157 = vmul.f32 %v1141, %v1141
          %v1158 = vmul.f32 %v1142, %v1142
          %v1159 = vsel %vm765, %v1143, 0.0
          %1160 = vadd.xlane.f32.xlu0 %v1159
          %v1161 = vpop.xlane.xlu0 %1160
          %v1162 = vsel %vm765, %v1144, 0.0
          %1163 = vadd.xlane.f32.xlu0 %v1162
          %v1164 = vpop.xlane.xlu0 %1163
          %v1165 = vsel %vm765, %v1145, 0.0
          %1166 = vadd.xlane.f32.xlu0 %v1165
          %v1167 = vpop.xlane.xlu0 %1166
          %v1168 = vsel %vm765, %v1146, 0.0
          %1169 = vadd.xlane.f32.xlu0 %v1168
          %v1170 = vpop.xlane.xlu0 %1169
          %v1171 = vsel %vm765, %v1147, 0.0
          %1172 = vadd.xlane.f32.xlu0 %v1171
          %v1173 = vpop.xlane.xlu0 %1172
          %v1174 = vsel %vm765, %v1148, 0.0
          %1175 = vadd.xlane.f32.xlu0 %v1174
          %v1176 = vpop.xlane.xlu0 %1175
          %v1177 = vsel %vm765, %v1149, 0.0
          %1178 = vadd.xlane.f32.xlu0 %v1177
          %v1179 = vpop.xlane.xlu0 %1178
          %v1180 = vsel %vm765, %v1150, 0.0
          %1181 = vadd.xlane.f32.xlu0 %v1180
          %v1182 = vpop.xlane.xlu0 %1181
          %v1183 = vsel %vm765, %v1151, 0.0
          %1184 = vadd.xlane.f32.xlu0 %v1183
          %v1185 = vpop.xlane.xlu0 %1184
          %v1186 = vsel %vm765, %v1152, 0.0
          %1187 = vadd.xlane.f32.xlu0 %v1186
          %v1188 = vpop.xlane.xlu0 %1187
          %v1189 = vsel %vm765, %v1153, 0.0
          %1190 = vadd.xlane.f32.xlu0 %v1189
          %v1191 = vpop.xlane.xlu0 %1190
          %v1192 = vsel %vm765, %v1154, 0.0
          %1193 = vadd.xlane.f32.xlu0 %v1192
          %v1194 = vpop.xlane.xlu0 %1193
          %v1195 = vsel %vm765, %v1155, 0.0
          %1196 = vadd.xlane.f32.xlu0 %v1195
          %v1197 = vpop.xlane.xlu0 %1196
          %v1198 = vsel %vm765, %v1156, 0.0
          %1199 = vadd.xlane.f32.xlu0 %v1198
          %v1200 = vpop.xlane.xlu0 %1199
          %v1201 = vsel %vm765, %v1157, 0.0
          %1202 = vadd.xlane.f32.xlu0 %v1201
          %v1203 = vpop.xlane.xlu0 %1202
          %v1204 = vsel %vm765, %v1158, 0.0
          %1205 = vadd.xlane.f32.xlu0 %v1204
          %v1206 = vpop.xlane.xlu0 %1205
          %v1207 = vmul.f32 %v1161, %v854
          %v1208 = vmul.f32 %v1164, %v854
          %v1209 = vmul.f32 %v1167, %v854
          %v1210 = vmul.f32 %v1170, %v854
          %v1211 = vmul.f32 %v1173, %v854
          %v1212 = vmul.f32 %v1176, %v854
          %v1213 = vmul.f32 %v1179, %v854
          %v1214 = vmul.f32 %v1182, %v854
          %v1215 = vmul.f32 %v1185, %v854
          %v1216 = vmul.f32 %v1188, %v854
          %v1217 = vmul.f32 %v1191, %v854
          %v1218 = vmul.f32 %v1194, %v854
          %v1219 = vmul.f32 %v1197, %v854
          %v1220 = vmul.f32 %v1200, %v854
          %v1221 = vmul.f32 %v1203, %v854
          %v1222 = vmul.f32 %v1206, %v854
          %v1223 = vadd.f32 %v1207, 1e-05
          %v1224 = vadd.f32 %v1208, 1e-05
          %v1225 = vadd.f32 %v1209, 1e-05
          %v1226 = vadd.f32 %v1210, 1e-05
          %v1227 = vadd.f32 %v1211, 1e-05
          %v1228 = vadd.f32 %v1212, 1e-05
          %v1229 = vadd.f32 %v1213, 1e-05
          %v1230 = vadd.f32 %v1214, 1e-05
          %v1231 = vadd.f32 %v1215, 1e-05
          %v1232 = vadd.f32 %v1216, 1e-05
          %v1233 = vadd.f32 %v1217, 1e-05
          %v1234 = vadd.f32 %v1218, 1e-05
          %v1235 = vadd.f32 %v1219, 1e-05
          %v1236 = vadd.f32 %v1220, 1e-05
          %v1237 = vadd.f32 %v1221, 1e-05
          %v1238 = vadd.f32 %v1222, 1e-05
          %v1239 = vrsqrt.pop %v1223
          %v1240 = vrsqrt.pop %v1224
          %v1241 = vrsqrt.pop %v1225
          %v1242 = vrsqrt.pop %v1226
          %v1243 = vrsqrt.pop %v1227
          %v1244 = vrsqrt.pop %v1228
          %v1245 = vrsqrt.pop %v1229
          %v1246 = vrsqrt.pop %v1230
          %v1247 = vrsqrt.pop %v1231
          %v1248 = vrsqrt.pop %v1232
          %v1249 = vrsqrt.pop %v1233
          %v1250 = vrsqrt.pop %v1234
          %v1251 = vrsqrt.pop %v1235
          %v1252 = vrsqrt.pop %v1236
          %v1253 = vrsqrt.pop %v1237
          %v1254 = vrsqrt.pop %v1238
          %v1255 = vmul.f32 %v1127, %v1239
          %v1256 = vmul.f32 %v1128, %v1240
          %v1257 = vmul.f32 %v1129, %v1241
          %v1258 = vmul.f32 %v1130, %v1242
          %v1259 = vmul.f32 %v1131, %v1243
          %v1260 = vmul.f32 %v1132, %v1244
          %v1261 = vmul.f32 %v1133, %v1245
          %v1262 = vmul.f32 %v1134, %v1246
          %v1263 = vmul.f32 %v1135, %v1247
          %v1264 = vmul.f32 %v1136, %v1248
          %v1265 = vmul.f32 %v1137, %v1249
          %v1266 = vmul.f32 %v1138, %v1250
          %v1267 = vmul.f32 %v1139, %v1251
          %v1268 = vmul.f32 %v1140, %v1252
          %v1269 = vmul.f32 %v1141, %v1253
          %v1270 = vmul.f32 %v1142, %v1254
          %v1271 = vpack.c.bf16 %v1256, %v1255
          %v1272 = vpack.c.bf16 %v1258, %v1257
          %v1273 = vpack.c.bf16 %v1260, %v1259
          %v1274 = vpack.c.bf16 %v1262, %v1261
          %v1275 = vpack.c.bf16 %v1264, %v1263
          %v1276 = vpack.c.bf16 %v1266, %v1265
          %v1277 = vpack.c.bf16 %v1268, %v1267
          %v1278 = vpack.c.bf16 %v1270, %v1269
          %1279 = vst.msk [vmem:[#allocation4] sm:$0xff] %vm765, %v1271
          %1280 = vst.msk [vmem:[#allocation4 + $0x8] sm:$0xff] %vm765, %v1272
          %1281 = vst.msk [vmem:[#allocation4 + $0x10] sm:$0xff] %vm765, %v1273
          %1282 = vst.msk [vmem:[#allocation4 + $0x18] sm:$0xff] %vm765, %v1274
          %1283 = vst.msk [vmem:[#allocation4 + $0x20] sm:$0xff] %vm765, %v1275
          %1284 = vst.msk [vmem:[#allocation4 + $0x28] sm:$0xff] %vm765, %v1276
          %1285 = vst.msk [vmem:[#allocation4 + $0x30] sm:$0xff] %vm765, %v1277
          %1286 = vst.msk [vmem:[#allocation4 + $0x38] sm:$0xff] %vm765, %v1278
          %v1287 = vld [vmem:[%s697 + $0x40] sm:$0xf]
          %v1288 = vld [vmem:[%s697 + $0x44] sm:$0xf]
          %v1289 = vld [vmem:[%s697 + $0x48] sm:$0xf]
          %v1290 = vld [vmem:[%s697 + $0x4c] sm:$0xf]
          %v1291 = vld [vmem:[%s697 + $0x50] sm:$0xf]
          %v1292 = vld [vmem:[%s697 + $0x54] sm:$0xf]
          %v1293 = vld [vmem:[%s697 + $0x58] sm:$0xf]
          %v1294 = vld [vmem:[%s697 + $0x5c] sm:$0xf]
          %v1295 = vld [vmem:[%s697 + $0x60] sm:$0xf]
          %v1296 = vld [vmem:[%s697 + $0x64] sm:$0xf]
          %v1297 = vld [vmem:[%s697 + $0x68] sm:$0xf]
          %v1298 = vld [vmem:[%s697 + $0x6c] sm:$0xf]
          %v1299 = vld [vmem:[%s697 + $0x70] sm:$0xf]
          %v1300 = vld [vmem:[%s697 + $0x74] sm:$0xf]
          %v1301 = vld [vmem:[%s697 + $0x78] sm:$0xf]
          %v1302 = vld [vmem:[%s697 + $0x7c] sm:$0xf]
          %v1303 = vunpack.c.l.bf16 %v1287
          %v1304 = vunpack.c.l.bf16 %v1288
          %v1305 = vunpack.c.l.bf16 %v1289
          %v1306 = vunpack.c.l.bf16 %v1290
          %v1307 = vunpack.c.l.bf16 %v1291
          %v1308 = vunpack.c.l.bf16 %v1292
          %v1309 = vunpack.c.l.bf16 %v1293
          %v1310 = vunpack.c.l.bf16 %v1294
          %v1311 = vunpack.c.l.bf16 %v1295
          %v1312 = vunpack.c.l.bf16 %v1296
          %v1313 = vunpack.c.l.bf16 %v1297
          %v1314 = vunpack.c.l.bf16 %v1298
          %v1315 = vunpack.c.l.bf16 %v1299
          %v1316 = vunpack.c.l.bf16 %v1300
          %v1317 = vunpack.c.l.bf16 %v1301
          %v1318 = vunpack.c.l.bf16 %v1302
          %v1319 = vsel %vm765, %v1303, 0.0
          %1320 = vadd.xlane.f32.xlu0 %v1319
          %v1321 = vpop.xlane.xlu0 %1320
          %v1322 = vsel %vm765, %v1304, 0.0
          %1323 = vadd.xlane.f32.xlu0 %v1322
          %v1324 = vpop.xlane.xlu0 %1323
          %v1325 = vsel %vm765, %v1305, 0.0
          %1326 = vadd.xlane.f32.xlu0 %v1325
          %v1327 = vpop.xlane.xlu0 %1326
          %v1328 = vsel %vm765, %v1306, 0.0
          %1329 = vadd.xlane.f32.xlu0 %v1328
          %v1330 = vpop.xlane.xlu0 %1329
          %v1331 = vsel %vm765, %v1307, 0.0
          %1332 = vadd.xlane.f32.xlu0 %v1331
          %v1333 = vpop.xlane.xlu0 %1332
          %v1334 = vsel %vm765, %v1308, 0.0
          %1335 = vadd.xlane.f32.xlu0 %v1334
          %v1336 = vpop.xlane.xlu0 %1335
          %v1337 = vsel %vm765, %v1309, 0.0
          %1338 = vadd.xlane.f32.xlu0 %v1337
          %v1339 = vpop.xlane.xlu0 %1338
          %v1340 = vsel %vm765, %v1310, 0.0
          %1341 = vadd.xlane.f32.xlu0 %v1340
          %v1342 = vpop.xlane.xlu0 %1341
          %v1343 = vsel %vm765, %v1311, 0.0
          %1344 = vadd.xlane.f32.xlu0 %v1343
          %v1345 = vpop.xlane.xlu0 %1344
          %v1346 = vsel %vm765, %v1312, 0.0
          %1347 = vadd.xlane.f32.xlu0 %v1346
          %v1348 = vpop.xlane.xlu0 %1347
          %v1349 = vsel %vm765, %v1313, 0.0
          %1350 = vadd.xlane.f32.xlu0 %v1349
          %v1351 = vpop.xlane.xlu0 %1350
          %v1352 = vsel %vm765, %v1314, 0.0
          %1353 = vadd.xlane.f32.xlu0 %v1352
          %v1354 = vpop.xlane.xlu0 %1353
          %v1355 = vsel %vm765, %v1315, 0.0
          %1356 = vadd.xlane.f32.xlu0 %v1355
          %v1357 = vpop.xlane.xlu0 %1356
          %v1358 = vsel %vm765, %v1316, 0.0
          %1359 = vadd.xlane.f32.xlu0 %v1358
          %v1360 = vpop.xlane.xlu0 %1359
          %v1361 = vsel %vm765, %v1317, 0.0
          %1362 = vadd.xlane.f32.xlu0 %v1361
          %v1363 = vpop.xlane.xlu0 %1362
          %v1364 = vsel %vm765, %v1318, 0.0
          %1365 = vadd.xlane.f32.xlu0 %v1364
          %v1366 = vpop.xlane.xlu0 %1365
          %v1367 = vmul.f32 %v1321, %v854
          %v1368 = vmul.f32 %v1324, %v854
          %v1369 = vmul.f32 %v1327, %v854
          %v1370 = vmul.f32 %v1330, %v854
          %v1371 = vmul.f32 %v1333, %v854
          %v1372 = vmul.f32 %v1336, %v854
          %v1373 = vmul.f32 %v1339, %v854
          %v1374 = vmul.f32 %v1342, %v854
          %v1375 = vmul.f32 %v1345, %v854
          %v1376 = vmul.f32 %v1348, %v854
          %v1377 = vmul.f32 %v1351, %v854
          %v1378 = vmul.f32 %v1354, %v854
          %v1379 = vmul.f32 %v1357, %v854
          %v1380 = vmul.f32 %v1360, %v854
          %v1381 = vmul.f32 %v1363, %v854
          %v1382 = vmul.f32 %v1366, %v854
          %v1383 = vsub.f32 %v1303, %v1367
          %v1384 = vsub.f32 %v1304, %v1368
          %v1385 = vsub.f32 %v1305, %v1369
          %v1386 = vsub.f32 %v1306, %v1370
          %v1387 = vsub.f32 %v1307, %v1371
          %v1388 = vsub.f32 %v1308, %v1372
          %v1389 = vsub.f32 %v1309, %v1373
          %v1390 = vsub.f32 %v1310, %v1374
          %v1391 = vsub.f32 %v1311, %v1375
          %v1392 = vsub.f32 %v1312, %v1376
          %v1393 = vsub.f32 %v1313, %v1377
          %v1394 = vsub.f32 %v1314, %v1378
          %v1395 = vsub.f32 %v1315, %v1379
          %v1396 = vsub.f32 %v1316, %v1380
          %v1397 = vsub.f32 %v1317, %v1381
          %v1398 = vsub.f32 %v1318, %v1382
          %v1399 = vmul.f32 %v1383, %v1383
          %v1400 = vmul.f32 %v1384, %v1384
          %v1401 = vmul.f32 %v1385, %v1385
          %v1402 = vmul.f32 %v1386, %v1386
          %v1403 = vmul.f32 %v1387, %v1387
          %v1404 = vmul.f32 %v1388, %v1388
          %v1405 = vmul.f32 %v1389, %v1389
          %v1406 = vmul.f32 %v1390, %v1390
          %v1407 = vmul.f32 %v1391, %v1391
          %v1408 = vmul.f32 %v1392, %v1392
          %v1409 = vmul.f32 %v1393, %v1393
          %v1410 = vmul.f32 %v1394, %v1394
          %v1411 = vmul.f32 %v1395, %v1395
          %v1412 = vmul.f32 %v1396, %v1396
          %v1413 = vmul.f32 %v1397, %v1397
          %v1414 = vmul.f32 %v1398, %v1398
          %v1415 = vsel %vm765, %v1399, 0.0
          %1416 = vadd.xlane.f32.xlu0 %v1415
          %v1417 = vpop.xlane.xlu0 %1416
          %v1418 = vsel %vm765, %v1400, 0.0
          %1419 = vadd.xlane.f32.xlu0 %v1418
          %v1420 = vpop.xlane.xlu0 %1419
          %v1421 = vsel %vm765, %v1401, 0.0
          %1422 = vadd.xlane.f32.xlu0 %v1421
          %v1423 = vpop.xlane.xlu0 %1422
          %v1424 = vsel %vm765, %v1402, 0.0
          %1425 = vadd.xlane.f32.xlu0 %v1424
          %v1426 = vpop.xlane.xlu0 %1425
          %v1427 = vsel %vm765, %v1403, 0.0
          %1428 = vadd.xlane.f32.xlu0 %v1427
          %v1429 = vpop.xlane.xlu0 %1428
          %v1430 = vsel %vm765, %v1404, 0.0
          %1431 = vadd.xlane.f32.xlu0 %v1430
          %v1432 = vpop.xlane.xlu0 %1431
          %v1433 = vsel %vm765, %v1405, 0.0
          %1434 = vadd.xlane.f32.xlu0 %v1433
          %v1435 = vpop.xlane.xlu0 %1434
          %v1436 = vsel %vm765, %v1406, 0.0
          %1437 = vadd.xlane.f32.xlu0 %v1436
          %v1438 = vpop.xlane.xlu0 %1437
          %v1439 = vsel %vm765, %v1407, 0.0
          %1440 = vadd.xlane.f32.xlu0 %v1439
          %v1441 = vpop.xlane.xlu0 %1440
          %v1442 = vsel %vm765, %v1408, 0.0
          %1443 = vadd.xlane.f32.xlu0 %v1442
          %v1444 = vpop.xlane.xlu0 %1443
          %v1445 = vsel %vm765, %v1409, 0.0
          %1446 = vadd.xlane.f32.xlu0 %v1445
          %v1447 = vpop.xlane.xlu0 %1446
          %v1448 = vsel %vm765, %v1410, 0.0
          %1449 = vadd.xlane.f32.xlu0 %v1448
          %v1450 = vpop.xlane.xlu0 %1449
          %v1451 = vsel %vm765, %v1411, 0.0
          %1452 = vadd.xlane.f32.xlu0 %v1451
          %v1453 = vpop.xlane.xlu0 %1452
          %v1454 = vsel %vm765, %v1412, 0.0
          %1455 = vadd.xlane.f32.xlu0 %v1454
          %v1456 = vpop.xlane.xlu0 %1455
          %v1457 = vsel %vm765, %v1413, 0.0
          %1458 = vadd.xlane.f32.xlu0 %v1457
          %v1459 = vpop.xlane.xlu0 %1458
          %v1460 = vsel %vm765, %v1414, 0.0
          %1461 = vadd.xlane.f32.xlu0 %v1460
          %v1462 = vpop.xlane.xlu0 %1461
          %v1463 = vmul.f32 %v1417, %v854
          %v1464 = vmul.f32 %v1420, %v854
          %v1465 = vmul.f32 %v1423, %v854
          %v1466 = vmul.f32 %v1426, %v854
          %v1467 = vmul.f32 %v1429, %v854
          %v1468 = vmul.f32 %v1432, %v854
          %v1469 = vmul.f32 %v1435, %v854
          %v1470 = vmul.f32 %v1438, %v854
          %v1471 = vmul.f32 %v1441, %v854
          %v1472 = vmul.f32 %v1444, %v854
          %v1473 = vmul.f32 %v1447, %v854
          %v1474 = vmul.f32 %v1450, %v854
          %v1475 = vmul.f32 %v1453, %v854
          %v1476 = vmul.f32 %v1456, %v854
          %v1477 = vmul.f32 %v1459, %v854
          %v1478 = vmul.f32 %v1462, %v854
          %v1479 = vadd.f32 %v1463, 1e-05
          %v1480 = vadd.f32 %v1464, 1e-05
          %v1481 = vadd.f32 %v1465, 1e-05
          %v1482 = vadd.f32 %v1466, 1e-05
          %v1483 = vadd.f32 %v1467, 1e-05
          %v1484 = vadd.f32 %v1468, 1e-05
          %v1485 = vadd.f32 %v1469, 1e-05
          %v1486 = vadd.f32 %v1470, 1e-05
          %v1487 = vadd.f32 %v1471, 1e-05
          %v1488 = vadd.f32 %v1472, 1e-05
          %v1489 = vadd.f32 %v1473, 1e-05
          %v1490 = vadd.f32 %v1474, 1e-05
          %v1491 = vadd.f32 %v1475, 1e-05
          %v1492 = vadd.f32 %v1476, 1e-05
          %v1493 = vadd.f32 %v1477, 1e-05
          %v1494 = vadd.f32 %v1478, 1e-05
          %v1495 = vrsqrt.pop %v1479
          %v1496 = vrsqrt.pop %v1480
          %v1497 = vrsqrt.pop %v1481
          %v1498 = vrsqrt.pop %v1482
          %v1499 = vrsqrt.pop %v1483
          %v1500 = vrsqrt.pop %v1484
          %v1501 = vrsqrt.pop %v1485
          %v1502 = vrsqrt.pop %v1486
          %v1503 = vrsqrt.pop %v1487
          %v1504 = vrsqrt.pop %v1488
          %v1505 = vrsqrt.pop %v1489
          %v1506 = vrsqrt.pop %v1490
          %v1507 = vrsqrt.pop %v1491
          %v1508 = vrsqrt.pop %v1492
          %v1509 = vrsqrt.pop %v1493
          %v1510 = vrsqrt.pop %v1494
          %v1511 = vmul.f32 %v1383, %v1495
          %v1512 = vmul.f32 %v1384, %v1496
          %v1513 = vmul.f32 %v1385, %v1497
          %v1514 = vmul.f32 %v1386, %v1498
          %v1515 = vmul.f32 %v1387, %v1499
          %v1516 = vmul.f32 %v1388, %v1500
          %v1517 = vmul.f32 %v1389, %v1501
          %v1518 = vmul.f32 %v1390, %v1502
          %v1519 = vmul.f32 %v1391, %v1503
          %v1520 = vmul.f32 %v1392, %v1504
          %v1521 = vmul.f32 %v1393, %v1505
          %v1522 = vmul.f32 %v1394, %v1506
          %v1523 = vmul.f32 %v1395, %v1507
          %v1524 = vmul.f32 %v1396, %v1508
          %v1525 = vmul.f32 %v1397, %v1509
          %v1526 = vmul.f32 %v1398, %v1510
          %v1527 = vpack.c.bf16 %v1512, %v1511
          %v1528 = vpack.c.bf16 %v1514, %v1513
          %v1529 = vpack.c.bf16 %v1516, %v1515
          %v1530 = vpack.c.bf16 %v1518, %v1517
          %v1531 = vpack.c.bf16 %v1520, %v1519
          %v1532 = vpack.c.bf16 %v1522, %v1521
          %v1533 = vpack.c.bf16 %v1524, %v1523
          %v1534 = vpack.c.bf16 %v1526, %v1525
          %1535 = vst.msk [vmem:[#allocation3 + $0x40] sm:$0xff] %vm765, %v1527
          %1536 = vst.msk [vmem:[#allocation3 + $0x48] sm:$0xff] %vm765, %v1528
          %1537 = vst.msk [vmem:[#allocation3 + $0x50] sm:$0xff] %vm765, %v1529
          %1538 = vst.msk [vmem:[#allocation3 + $0x58] sm:$0xff] %vm765, %v1530
          %1539 = vst.msk [vmem:[#allocation3 + $0x60] sm:$0xff] %vm765, %v1531
          %1540 = vst.msk [vmem:[#allocation3 + $0x68] sm:$0xff] %vm765, %v1532
          %1541 = vst.msk [vmem:[#allocation3 + $0x70] sm:$0xff] %vm765, %v1533
          %1542 = vst.msk [vmem:[#allocation3 + $0x78] sm:$0xff] %vm765, %v1534
          %v1543 = vld [vmem:[%s702 + $0x40] sm:$0xf]
          %v1544 = vld [vmem:[%s702 + $0x44] sm:$0xf]
          %v1545 = vld [vmem:[%s702 + $0x48] sm:$0xf]
          %v1546 = vld [vmem:[%s702 + $0x4c] sm:$0xf]
          %v1547 = vld [vmem:[%s702 + $0x50] sm:$0xf]
          %v1548 = vld [vmem:[%s702 + $0x54] sm:$0xf]
          %v1549 = vld [vmem:[%s702 + $0x58] sm:$0xf]
          %v1550 = vld [vmem:[%s702 + $0x5c] sm:$0xf]
          %v1551 = vld [vmem:[%s702 + $0x60] sm:$0xf]
          %v1552 = vld [vmem:[%s702 + $0x64] sm:$0xf]
          %v1553 = vld [vmem:[%s702 + $0x68] sm:$0xf]
          %v1554 = vld [vmem:[%s702 + $0x6c] sm:$0xf]
          %v1555 = vld [vmem:[%s702 + $0x70] sm:$0xf]
          %v1556 = vld [vmem:[%s702 + $0x74] sm:$0xf]
          %v1557 = vld [vmem:[%s702 + $0x78] sm:$0xf]
          %v1558 = vld [vmem:[%s702 + $0x7c] sm:$0xf]
          %v1559 = vunpack.c.l.bf16 %v1543
          %v1560 = vunpack.c.l.bf16 %v1544
          %v1561 = vunpack.c.l.bf16 %v1545
          %v1562 = vunpack.c.l.bf16 %v1546
          %v1563 = vunpack.c.l.bf16 %v1547
          %v1564 = vunpack.c.l.bf16 %v1548
          %v1565 = vunpack.c.l.bf16 %v1549
          %v1566 = vunpack.c.l.bf16 %v1550
          %v1567 = vunpack.c.l.bf16 %v1551
          %v1568 = vunpack.c.l.bf16 %v1552
          %v1569 = vunpack.c.l.bf16 %v1553
          %v1570 = vunpack.c.l.bf16 %v1554
          %v1571 = vunpack.c.l.bf16 %v1555
          %v1572 = vunpack.c.l.bf16 %v1556
          %v1573 = vunpack.c.l.bf16 %v1557
          %v1574 = vunpack.c.l.bf16 %v1558
          %v1575 = vsel %vm765, %v1559, 0.0
          %1576 = vadd.xlane.f32.xlu0 %v1575
          %v1577 = vpop.xlane.xlu0 %1576
          %v1578 = vsel %vm765, %v1560, 0.0
          %1579 = vadd.xlane.f32.xlu0 %v1578
          %v1580 = vpop.xlane.xlu0 %1579
          %v1581 = vsel %vm765, %v1561, 0.0
          %1582 = vadd.xlane.f32.xlu0 %v1581
          %v1583 = vpop.xlane.xlu0 %1582
          %v1584 = vsel %vm765, %v1562, 0.0
          %1585 = vadd.xlane.f32.xlu0 %v1584
          %v1586 = vpop.xlane.xlu0 %1585
          %v1587 = vsel %vm765, %v1563, 0.0
          %1588 = vadd.xlane.f32.xlu0 %v1587
          %v1589 = vpop.xlane.xlu0 %1588
          %v1590 = vsel %vm765, %v1564, 0.0
          %1591 = vadd.xlane.f32.xlu0 %v1590
          %v1592 = vpop.xlane.xlu0 %1591
          %v1593 = vsel %vm765, %v1565, 0.0
          %1594 = vadd.xlane.f32.xlu0 %v1593
          %v1595 = vpop.xlane.xlu0 %1594
          %v1596 = vsel %vm765, %v1566, 0.0
          %1597 = vadd.xlane.f32.xlu0 %v1596
          %v1598 = vpop.xlane.xlu0 %1597
          %v1599 = vsel %vm765, %v1567, 0.0
          %1600 = vadd.xlane.f32.xlu0 %v1599
          %v1601 = vpop.xlane.xlu0 %1600
          %v1602 = vsel %vm765, %v1568, 0.0
          %1603 = vadd.xlane.f32.xlu0 %v1602
          %v1604 = vpop.xlane.xlu0 %1603
          %v1605 = vsel %vm765, %v1569, 0.0
          %1606 = vadd.xlane.f32.xlu0 %v1605
          %v1607 = vpop.xlane.xlu0 %1606
          %v1608 = vsel %vm765, %v1570, 0.0
          %1609 = vadd.xlane.f32.xlu0 %v1608
          %v1610 = vpop.xlane.xlu0 %1609
          %v1611 = vsel %vm765, %v1571, 0.0
          %1612 = vadd.xlane.f32.xlu0 %v1611
          %v1613 = vpop.xlane.xlu0 %1612
          %v1614 = vsel %vm765, %v1572, 0.0
          %1615 = vadd.xlane.f32.xlu0 %v1614
          %v1616 = vpop.xlane.xlu0 %1615
          %v1617 = vsel %vm765, %v1573, 0.0
          %1618 = vadd.xlane.f32.xlu0 %v1617
          %v1619 = vpop.xlane.xlu0 %1618
          %v1620 = vsel %vm765, %v1574, 0.0
          %1621 = vadd.xlane.f32.xlu0 %v1620
          %v1622 = vpop.xlane.xlu0 %1621
          %v1623 = vmul.f32 %v1577, %v854
          %v1624 = vmul.f32 %v1580, %v854
          %v1625 = vmul.f32 %v1583, %v854
          %v1626 = vmul.f32 %v1586, %v854
          %v1627 = vmul.f32 %v1589, %v854
          %v1628 = vmul.f32 %v1592, %v854
          %v1629 = vmul.f32 %v1595, %v854
          %v1630 = vmul.f32 %v1598, %v854
          %v1631 = vmul.f32 %v1601, %v854
          %v1632 = vmul.f32 %v1604, %v854
          %v1633 = vmul.f32 %v1607, %v854
          %v1634 = vmul.f32 %v1610, %v854
          %v1635 = vmul.f32 %v1613, %v854
          %v1636 = vmul.f32 %v1616, %v854
          %v1637 = vmul.f32 %v1619, %v854
          %v1638 = vmul.f32 %v1622, %v854
          %v1639 = vsub.f32 %v1559, %v1623
          %v1640 = vsub.f32 %v1560, %v1624
          %v1641 = vsub.f32 %v1561, %v1625
          %v1642 = vsub.f32 %v1562, %v1626
          %v1643 = vsub.f32 %v1563, %v1627
          %v1644 = vsub.f32 %v1564, %v1628
          %v1645 = vsub.f32 %v1565, %v1629
          %v1646 = vsub.f32 %v1566, %v1630
          %v1647 = vsub.f32 %v1567, %v1631
          %v1648 = vsub.f32 %v1568, %v1632
          %v1649 = vsub.f32 %v1569, %v1633
          %v1650 = vsub.f32 %v1570, %v1634
          %v1651 = vsub.f32 %v1571, %v1635
          %v1652 = vsub.f32 %v1572, %v1636
          %v1653 = vsub.f32 %v1573, %v1637
          %v1654 = vsub.f32 %v1574, %v1638
          %v1655 = vmul.f32 %v1639, %v1639
          %v1656 = vmul.f32 %v1640, %v1640
          %v1657 = vmul.f32 %v1641, %v1641
          %v1658 = vmul.f32 %v1642, %v1642
          %v1659 = vmul.f32 %v1643, %v1643
          %v1660 = vmul.f32 %v1644, %v1644
          %v1661 = vmul.f32 %v1645, %v1645
          %v1662 = vmul.f32 %v1646, %v1646
          %v1663 = vmul.f32 %v1647, %v1647
          %v1664 = vmul.f32 %v1648, %v1648
          %v1665 = vmul.f32 %v1649, %v1649
          %v1666 = vmul.f32 %v1650, %v1650
          %v1667 = vmul.f32 %v1651, %v1651
          %v1668 = vmul.f32 %v1652, %v1652
          %v1669 = vmul.f32 %v1653, %v1653
          %v1670 = vmul.f32 %v1654, %v1654
          %v1671 = vsel %vm765, %v1655, 0.0
          %1672 = vadd.xlane.f32.xlu0 %v1671
          %v1673 = vpop.xlane.xlu0 %1672
          %v1674 = vsel %vm765, %v1656, 0.0
          %1675 = vadd.xlane.f32.xlu0 %v1674
          %v1676 = vpop.xlane.xlu0 %1675
          %v1677 = vsel %vm765, %v1657, 0.0
          %1678 = vadd.xlane.f32.xlu0 %v1677
          %v1679 = vpop.xlane.xlu0 %1678
          %v1680 = vsel %vm765, %v1658, 0.0
          %1681 = vadd.xlane.f32.xlu0 %v1680
          %v1682 = vpop.xlane.xlu0 %1681
          %v1683 = vsel %vm765, %v1659, 0.0
          %1684 = vadd.xlane.f32.xlu0 %v1683
          %v1685 = vpop.xlane.xlu0 %1684
          %v1686 = vsel %vm765, %v1660, 0.0
          %1687 = vadd.xlane.f32.xlu0 %v1686
          %v1688 = vpop.xlane.xlu0 %1687
          %v1689 = vsel %vm765, %v1661, 0.0
          %1690 = vadd.xlane.f32.xlu0 %v1689
          %v1691 = vpop.xlane.xlu0 %1690
          %v1692 = vsel %vm765, %v1662, 0.0
          %1693 = vadd.xlane.f32.xlu0 %v1692
          %v1694 = vpop.xlane.xlu0 %1693
          %v1695 = vsel %vm765, %v1663, 0.0
          %1696 = vadd.xlane.f32.xlu0 %v1695
          %v1697 = vpop.xlane.xlu0 %1696
          %v1698 = vsel %vm765, %v1664, 0.0
          %1699 = vadd.xlane.f32.xlu0 %v1698
          %v1700 = vpop.xlane.xlu0 %1699
          %v1701 = vsel %vm765, %v1665, 0.0
          %1702 = vadd.xlane.f32.xlu0 %v1701
          %v1703 = vpop.xlane.xlu0 %1702
          %v1704 = vsel %vm765, %v1666, 0.0
          %1705 = vadd.xlane.f32.xlu0 %v1704
          %v1706 = vpop.xlane.xlu0 %1705
          %v1707 = vsel %vm765, %v1667, 0.0
          %1708 = vadd.xlane.f32.xlu0 %v1707
          %v1709 = vpop.xlane.xlu0 %1708
          %v1710 = vsel %vm765, %v1668, 0.0
          %1711 = vadd.xlane.f32.xlu0 %v1710
          %v1712 = vpop.xlane.xlu0 %1711
          %v1713 = vsel %vm765, %v1669, 0.0
          %1714 = vadd.xlane.f32.xlu0 %v1713
          %v1715 = vpop.xlane.xlu0 %1714
          %v1716 = vsel %vm765, %v1670, 0.0
          %1717 = vadd.xlane.f32.xlu0 %v1716
          %v1718 = vpop.xlane.xlu0 %1717
          %v1719 = vmul.f32 %v1673, %v854
          %v1720 = vmul.f32 %v1676, %v854
          %v1721 = vmul.f32 %v1679, %v854
          %v1722 = vmul.f32 %v1682, %v854
          %v1723 = vmul.f32 %v1685, %v854
          %v1724 = vmul.f32 %v1688, %v854
          %v1725 = vmul.f32 %v1691, %v854
          %v1726 = vmul.f32 %v1694, %v854
          %v1727 = vmul.f32 %v1697, %v854
          %v1728 = vmul.f32 %v1700, %v854
          %v1729 = vmul.f32 %v1703, %v854
          %v1730 = vmul.f32 %v1706, %v854
          %v1731 = vmul.f32 %v1709, %v854
          %v1732 = vmul.f32 %v1712, %v854
          %v1733 = vmul.f32 %v1715, %v854
          %v1734 = vmul.f32 %v1718, %v854
          %v1735 = vadd.f32 %v1719, 1e-05
          %v1736 = vadd.f32 %v1720, 1e-05
          %v1737 = vadd.f32 %v1721, 1e-05
          %v1738 = vadd.f32 %v1722, 1e-05
          %v1739 = vadd.f32 %v1723, 1e-05
          %v1740 = vadd.f32 %v1724, 1e-05
          %v1741 = vadd.f32 %v1725, 1e-05
          %v1742 = vadd.f32 %v1726, 1e-05
          %v1743 = vadd.f32 %v1727, 1e-05
          %v1744 = vadd.f32 %v1728, 1e-05
          %v1745 = vadd.f32 %v1729, 1e-05
          %v1746 = vadd.f32 %v1730, 1e-05
          %v1747 = vadd.f32 %v1731, 1e-05
          %v1748 = vadd.f32 %v1732, 1e-05
          %v1749 = vadd.f32 %v1733, 1e-05
          %v1750 = vadd.f32 %v1734, 1e-05
          %v1751 = vrsqrt.pop %v1735
          %v1752 = vrsqrt.pop %v1736
          %v1753 = vrsqrt.pop %v1737
          %v1754 = vrsqrt.pop %v1738
          %v1755 = vrsqrt.pop %v1739
          %v1756 = vrsqrt.pop %v1740
          %v1757 = vrsqrt.pop %v1741
          %v1758 = vrsqrt.pop %v1742
          %v1759 = vrsqrt.pop %v1743
          %v1760 = vrsqrt.pop %v1744
          %v1761 = vrsqrt.pop %v1745
          %v1762 = vrsqrt.pop %v1746
          %v1763 = vrsqrt.pop %v1747
          %v1764 = vrsqrt.pop %v1748
          %v1765 = vrsqrt.pop %v1749
          %v1766 = vrsqrt.pop %v1750
          %v1767 = vmul.f32 %v1639, %v1751
          %v1768 = vmul.f32 %v1640, %v1752
          %v1769 = vmul.f32 %v1641, %v1753
          %v1770 = vmul.f32 %v1642, %v1754
          %v1771 = vmul.f32 %v1643, %v1755
          %v1772 = vmul.f32 %v1644, %v1756
          %v1773 = vmul.f32 %v1645, %v1757
          %v1774 = vmul.f32 %v1646, %v1758
          %v1775 = vmul.f32 %v1647, %v1759
          %v1776 = vmul.f32 %v1648, %v1760
          %v1777 = vmul.f32 %v1649, %v1761
          %v1778 = vmul.f32 %v1650, %v1762
          %v1779 = vmul.f32 %v1651, %v1763
          %v1780 = vmul.f32 %v1652, %v1764
          %v1781 = vmul.f32 %v1653, %v1765
          %v1782 = vmul.f32 %v1654, %v1766
          %v1783 = vpack.c.bf16 %v1768, %v1767
          %v1784 = vpack.c.bf16 %v1770, %v1769
          %v1785 = vpack.c.bf16 %v1772, %v1771
          %v1786 = vpack.c.bf16 %v1774, %v1773
          %v1787 = vpack.c.bf16 %v1776, %v1775
          %v1788 = vpack.c.bf16 %v1778, %v1777
          %v1789 = vpack.c.bf16 %v1780, %v1779
          %v1790 = vpack.c.bf16 %v1782, %v1781
          %1791 = vst.msk [vmem:[#allocation4 + $0x40] sm:$0xff] %vm765, %v1783
          %1792 = vst.msk [vmem:[#allocation4 + $0x48] sm:$0xff] %vm765, %v1784
          %1793 = vst.msk [vmem:[#allocation4 + $0x50] sm:$0xff] %vm765, %v1785
          %1794 = vst.msk [vmem:[#allocation4 + $0x58] sm:$0xff] %vm765, %v1786
          %1795 = vst.msk [vmem:[#allocation4 + $0x60] sm:$0xff] %vm765, %v1787
          %1796 = vst.msk [vmem:[#allocation4 + $0x68] sm:$0xff] %vm765, %v1788
          %1797 = vst.msk [vmem:[#allocation4 + $0x70] sm:$0xff] %vm765, %v1789
          %1798 = vst.msk [vmem:[#allocation4 + $0x78] sm:$0xff] %vm765, %v1790
        $region84: #{tmixer_forward.1} parent=79 // pred_fallthru
          _
        %v1799 = vld [vmem:[#allocation2] sm:$0xff]
        %v1800 = vld [vmem:[#allocation2 + $0x8] sm:$0xff]
        %v1801 = vld [vmem:[#allocation2 + $0x10] sm:$0xff]
        %v1802 = vld [vmem:[#allocation2 + $0x18] sm:$0xff]
        %v1803 = vld [vmem:[#allocation2 + $0x20] sm:$0xff]
        %v1804 = vld [vmem:[#allocation2 + $0x28] sm:$0xff]
        %v1805 = vld [vmem:[#allocation2 + $0x30] sm:$0xff]
        %v1806 = vld [vmem:[#allocation2 + $0x38] sm:$0xff]
        %vm1807 = vcmask 523264
        %v1808 = vsel %vm1807, %v1799, 0.0
        %1809 = vadd.xlane.f32.xlu0 %v1808
        %v1810 = vpop.xlane.xlu0 %1809
        %v1811 = vsel %vm1807, %v1800, 0.0
        %1812 = vadd.xlane.f32.xlu0 %v1811
        %v1813 = vpop.xlane.xlu0 %1812
        %v1814 = vsel %vm1807, %v1801, 0.0
        %1815 = vadd.xlane.f32.xlu0 %v1814
        %v1816 = vpop.xlane.xlu0 %1815
        %v1817 = vsel %vm1807, %v1802, 0.0
        %1818 = vadd.xlane.f32.xlu0 %v1817
        %v1819 = vpop.xlane.xlu0 %1818
        %v1820 = vsel %vm1807, %v1803, 0.0
        %1821 = vadd.xlane.f32.xlu0 %v1820
        %v1822 = vpop.xlane.xlu0 %1821
        %v1823 = vsel %vm1807, %v1804, 0.0
        %1824 = vadd.xlane.f32.xlu0 %v1823
        %v1825 = vpop.xlane.xlu0 %1824
        %v1826 = vsel %vm1807, %v1805, 0.0
        %1827 = vadd.xlane.f32.xlu0 %v1826
        %v1828 = vpop.xlane.xlu0 %1827
        %v1829 = vsel %vm1807, %v1806, 0.0
        %1830 = vadd.xlane.f32.xlu0 %v1829
        %v1831 = vpop.xlane.xlu0 %1830
        %v1832 = vrcp.pop 64.0
        %v1833 = vmul.f32 %v1810, %v1832
        %v1834 = vmul.f32 %v1813, %v1832
        %v1835 = vmul.f32 %v1816, %v1832
        %v1836 = vmul.f32 %v1819, %v1832
        %v1837 = vmul.f32 %v1822, %v1832
        %v1838 = vmul.f32 %v1825, %v1832
        %v1839 = vmul.f32 %v1828, %v1832
        %v1840 = vmul.f32 %v1831, %v1832
        %v1841 = vsub.f32 %v1799, %v1833
        %v1842 = vsub.f32 %v1800, %v1834
        %v1843 = vsub.f32 %v1801, %v1835
        %v1844 = vsub.f32 %v1802, %v1836
        %v1845 = vsub.f32 %v1803, %v1837
        %v1846 = vsub.f32 %v1804, %v1838
        %v1847 = vsub.f32 %v1805, %v1839
        %v1848 = vsub.f32 %v1806, %v1840
        %v1849 = vmul.f32 %v1841, %v1841
        %v1850 = vmul.f32 %v1842, %v1842
        %v1851 = vmul.f32 %v1843, %v1843
        %v1852 = vmul.f32 %v1844, %v1844
        %v1853 = vmul.f32 %v1845, %v1845
        %v1854 = vmul.f32 %v1846, %v1846
        %v1855 = vmul.f32 %v1847, %v1847
        %v1856 = vmul.f32 %v1848, %v1848
        %v1857 = vsel %vm1807, %v1849, 0.0
        %1858 = vadd.xlane.f32.xlu0 %v1857
        %v1859 = vpop.xlane.xlu0 %1858
        %v1860 = vsel %vm1807, %v1850, 0.0
        %1861 = vadd.xlane.f32.xlu0 %v1860
        %v1862 = vpop.xlane.xlu0 %1861
        %v1863 = vsel %vm1807, %v1851, 0.0
        %1864 = vadd.xlane.f32.xlu0 %v1863
        %v1865 = vpop.xlane.xlu0 %1864
        %v1866 = vsel %vm1807, %v1852, 0.0
        %1867 = vadd.xlane.f32.xlu0 %v1866
        %v1868 = vpop.xlane.xlu0 %1867
        %v1869 = vsel %vm1807, %v1853, 0.0
        %1870 = vadd.xlane.f32.xlu0 %v1869
        %v1871 = vpop.xlane.xlu0 %1870
        %v1872 = vsel %vm1807, %v1854, 0.0
        %1873 = vadd.xlane.f32.xlu0 %v1872
        %v1874 = vpop.xlane.xlu0 %1873
        %v1875 = vsel %vm1807, %v1855, 0.0
        %1876 = vadd.xlane.f32.xlu0 %v1875
        %v1877 = vpop.xlane.xlu0 %1876
        %v1878 = vsel %vm1807, %v1856, 0.0
        %1879 = vadd.xlane.f32.xlu0 %v1878
        %v1880 = vpop.xlane.xlu0 %1879
        %v1881 = vmul.f32 %v1859, %v1832
        %v1882 = vmul.f32 %v1862, %v1832
        %v1883 = vmul.f32 %v1865, %v1832
        %v1884 = vmul.f32 %v1868, %v1832
        %v1885 = vmul.f32 %v1871, %v1832
        %v1886 = vmul.f32 %v1874, %v1832
        %v1887 = vmul.f32 %v1877, %v1832
        %v1888 = vmul.f32 %v1880, %v1832
        %v1889 = vadd.f32 %v1881, 1e-05
        %v1890 = vadd.f32 %v1882, 1e-05
        %v1891 = vadd.f32 %v1883, 1e-05
        %v1892 = vadd.f32 %v1884, 1e-05
        %v1893 = vadd.f32 %v1885, 1e-05
        %v1894 = vadd.f32 %v1886, 1e-05
        %v1895 = vadd.f32 %v1887, 1e-05
        %v1896 = vadd.f32 %v1888, 1e-05
        %v1897 = vrsqrt.pop %v1889
        %v1898 = vrsqrt.pop %v1890
        %v1899 = vrsqrt.pop %v1891
        %v1900 = vrsqrt.pop %v1892
        %v1901 = vrsqrt.pop %v1893
        %v1902 = vrsqrt.pop %v1894
        %v1903 = vrsqrt.pop %v1895
        %v1904 = vrsqrt.pop %v1896
        %v1905 = vmul.f32 %v1841, %v1897
        %v1906 = vmul.f32 %v1842, %v1898
        %v1907 = vmul.f32 %v1843, %v1899
        %v1908 = vmul.f32 %v1844, %v1900
        %v1909 = vmul.f32 %v1845, %v1901
        %v1910 = vmul.f32 %v1846, %v1902
        %v1911 = vmul.f32 %v1847, %v1903
        %v1912 = vmul.f32 %v1848, %v1904
        %v1913 = vpack.c.bf16 %v1906, %v1905
        %v1914 = vpack.c.bf16 %v1908, %v1907
        %v1915 = vpack.c.bf16 %v1910, %v1909
        %v1916 = vpack.c.bf16 %v1912, %v1911
        %v1917 = vld [vmem:[%s707] sm:$0xf]
        %v1918 = vld [vmem:[%s707 + $0x4] sm:$0xf]
        %v1919 = vld [vmem:[%s707 + $0x8] sm:$0xf]
        %v1920 = vld [vmem:[%s707 + $0xc] sm:$0xf]
        %v1921 = vld [vmem:[%s707 + $0x10] sm:$0xf]
        %v1922 = vld [vmem:[%s707 + $0x14] sm:$0xf]
        %v1923 = vld [vmem:[%s707 + $0x18] sm:$0xf]
        %v1924 = vld [vmem:[%s707 + $0x1c] sm:$0xf]
        %v1925 = vld [vmem:[%s720] sm:$0x1]
        %v1927 = vlaneseq
        %v1928 = vshrl.u32 %v1927, 7
        %v1929 = vsub.s32 0, %v1928
        %v1930 = vrot.slane %v1925, %v1929
        %v1940 = vunpack.c.l.b16 %v1917
        %v1941 = vunpack.c.l.b16 %v1918
        %v1942 = vunpack.c.l.b16 %v1919
        %v1943 = vunpack.c.l.b16 %v1920
        %v1944 = vunpack.c.l.b16 %v1921
        %v1945 = vunpack.c.l.b16 %v1922
        %v1946 = vunpack.c.l.b16 %v1923
        %v1947 = vunpack.c.l.b16 %v1924
        %v1948 = vpack.c.b16 %v1941, %v1940
        %v1949 = vpack.c.b16 %v1943, %v1942
        %v1950 = vpack.c.b16 %v1945, %v1944
        %v1951 = vpack.c.b16 %v1947, %v1946
        %v1957 = vsel %vm1807, %v1913, 0
        %v1960 = vsel %vm1807, %v1914, 0
        %v1963 = vsel %vm1807, %v1915, 0
        %v1966 = vsel %vm1807, %v1916, 0
        %1968 = vmatprep.subr.bf16.mxu0 0
        %1969 = vmatpush1.bf16.msra.mxu0 %v1948
        %1970 = vmatprep.subr.bf16.mxu0 0
        %1971 = vmatpush1.bf16.msra.mxu0 %v1949
        %1972 = vmatprep.subr.bf16.mxu0 0
        %1973 = vmatpush1.bf16.msra.mxu0 %v1950
        %1974 = vmatprep.subr.bf16.mxu0 0
        %1975 = vmatpush1.bf16.msra.mxu0 %v1951
        %1976 = vmatprep.subr.bf16.mxu0 0
        %1977 = vmatpush1.bf16.msra.mxu0 0
        %1978 = vmatprep.subr.bf16.mxu0 0
        %1979 = vmatpush1.bf16.msra.mxu0 0
        %1980 = vmatprep.subr.bf16.mxu0 0
        %1981 = vmatpush1.bf16.msra.mxu0 0
        %1982 = vmatprep.subr.bf16.mxu0 0
        %1983 = vmatpush1.bf16.msra.mxu0 0
        %1984 = vmatprep.subr.bf16.mxu0 0
        %1985 = vmatpush1.bf16.msra.mxu0 0
        %1986 = vmatprep.subr.bf16.mxu0 0
        %1987 = vmatpush1.bf16.msra.mxu0 0
        %1988 = vmatprep.subr.bf16.mxu0 0
        %1989 = vmatpush1.bf16.msra.mxu0 0
        %1990 = vmatprep.subr.bf16.mxu0 0
        %1991 = vmatpush1.bf16.msra.mxu0 0
        %1992 = vmatprep.subr.bf16.mxu0 0
        %1993 = vmatpush1.bf16.msra.mxu0 0
        %1994 = vmatprep.subr.bf16.mxu0 0
        %1995 = vmatpush1.bf16.msra.mxu0 0
        %1996 = vmatprep.subr.bf16.mxu0 0
        %1997 = vmatpush1.bf16.msra.mxu0 0
        %1998 = vmatprep.subr.bf16.mxu0 0
        %1999 = vmatpush1.bf16.msra.mxu0 0
        %2000 = vmatprep.mubr.bf16.mxu0 0
        %2001 = vmatmul.mubr.bf16.gmra.mrb[0].mxu0 %v1957
        %v2002 = vpop.f32.mrb[0].mxu0
        %v2003 = vadd.f32 %v1930, %v2002
        %v2004 = vpop.f32.mrb[0].mxu0
        %v2005 = vpop.f32.mrb[0].mxu0
        %v2006 = vadd.f32 %v1930, %v2005
        %v2007 = vpop.f32.mrb[0].mxu0
        %2008 = vmatprep.mubr.bf16.mxu0 0
        %2009 = vmatmul.mubr.bf16.gmra.mrb[0].mxu0 %v1960
        %v2010 = vpop.f32.mrb[0].mxu0
        %v2011 = vadd.f32 %v1930, %v2010
        %v2012 = vpop.f32.mrb[0].mxu0
        %v2013 = vpop.f32.mrb[0].mxu0
        %v2014 = vadd.f32 %v1930, %v2013
        %v2015 = vpop.f32.mrb[0].mxu0
        %2016 = vmatprep.mubr.bf16.mxu0 0
        %2017 = vmatmul.mubr.bf16.gmra.mrb[0].mxu0 %v1963
        %v2018 = vpop.f32.mrb[0].mxu0
        %v2019 = vadd.f32 %v1930, %v2018
        %v2020 = vpop.f32.mrb[0].mxu0
        %v2021 = vpop.f32.mrb[0].mxu0
        %v2022 = vadd.f32 %v1930, %v2021
        %v2023 = vpop.f32.mrb[0].mxu0
        %2024 = vmatprep.mubr.bf16.mxu0 0
        %2025 = vmatmul.mubr.bf16.gmra.mrb[0].mxu0 %v1966
        %v2026 = vpop.f32.mrb[0].mxu0
        %v2027 = vadd.f32 %v1930, %v2026
        %v2028 = vpop.f32.mrb[0].mxu0
        %v2029 = vpop.f32.mrb[0].mxu0
        %v2030 = vadd.f32 %v1930, %v2029
        %v2031 = vpop.f32.mrb[0].mxu0
        %2032 = vdwg.mxu0
        %v2033 = vpack.c.bf16 %v2006, %v2003
        %v2034 = vpack.c.bf16 %v2014, %v2011
        %v2035 = vpack.c.bf16 %v2022, %v2019
        %v2036 = vpack.c.bf16 %v2030, %v2027
        %v2037 = vld [vmem:[#allocation3] sm:$0xff]
        %v2038 = vld [vmem:[#allocation3 + $0x8] sm:$0xff]
        %v2039 = vld [vmem:[#allocation3 + $0x10] sm:$0xff]
        %v2040 = vld [vmem:[#allocation3 + $0x18] sm:$0xff]
        %v2041 = vld [vmem:[#allocation3 + $0x20] sm:$0xff]
        %v2042 = vld [vmem:[#allocation3 + $0x28] sm:$0xff]
        %v2043 = vld [vmem:[#allocation3 + $0x30] sm:$0xff]
        %v2044 = vld [vmem:[#allocation3 + $0x38] sm:$0xff]
        %v2045 = vld [vmem:[%s712] sm:$0xf]
        %v2046 = vld [vmem:[%s712 + $0x4] sm:$0xf]
        %v2047 = vld [vmem:[%s712 + $0x8] sm:$0xf]
        %v2048 = vld [vmem:[%s712 + $0xc] sm:$0xf]
        %v2049 = vld [vmem:[%s712 + $0x10] sm:$0xf]
        %v2050 = vld [vmem:[%s712 + $0x14] sm:$0xf]
        %v2051 = vld [vmem:[%s712 + $0x18] sm:$0xf]
        %v2052 = vld [vmem:[%s712 + $0x1c] sm:$0xf]
        %v2053 = vld [vmem:[%s723] sm:$0x1]
        %v2055 = vlaneseq
        %v2056 = vshrl.u32 %v2055, 7
        %v2057 = vsub.s32 0, %v2056
        %v2058 = vrot.slane %v2053, %v2057
        %v2068 = vunpack.c.l.b16 %v2045
        %v2069 = vunpack.c.l.b16 %v2046
        %v2070 = vunpack.c.l.b16 %v2047
        %v2071 = vunpack.c.l.b16 %v2048
        %v2072 = vunpack.c.l.b16 %v2049
        %v2073 = vunpack.c.l.b16 %v2050
        %v2074 = vunpack.c.l.b16 %v2051
        %v2075 = vunpack.c.l.b16 %v2052
        %v2076 = vpack.c.b16 %v2069, %v2068
        %v2077 = vpack.c.b16 %v2071, %v2070
        %v2078 = vpack.c.b16 %v2073, %v2072
        %v2079 = vpack.c.b16 %v2075, %v2074
        %v2085 = vsel %vm1807, %v2037, 0
        %v2088 = vsel %vm1807, %v2038, 0
        %v2091 = vsel %vm1807, %v2039, 0
        %v2094 = vsel %vm1807, %v2040, 0
        %v2097 = vsel %vm1807, %v2041, 0
        %v2100 = vsel %vm1807, %v2042, 0
        %v2103 = vsel %vm1807, %v2043, 0
        %v2106 = vsel %vm1807, %v2044, 0
        %2108 = vmatprep.subr.bf16.mxu0 0
        %2109 = vmatpush1.bf16.msra.mxu0 %v2076
        %2110 = vmatprep.subr.bf16.mxu0 0
        %2111 = vmatpush1.bf16.msra.mxu0 %v2077
        %2112 = vmatprep.subr.bf16.mxu0 0
        %2113 = vmatpush1.bf16.msra.mxu0 %v2078
        %2114 = vmatprep.subr.bf16.mxu0 0
        %2115 = vmatpush1.bf16.msra.mxu0 %v2079
        %2116 = vmatprep.subr.bf16.mxu0 0
        %2117 = vmatpush1.bf16.msra.mxu0 0
        %2118 = vmatprep.subr.bf16.mxu0 0
        %2119 = vmatpush1.bf16.msra.mxu0 0
        %2120 = vmatprep.subr.bf16.mxu0 0
        %2121 = vmatpush1.bf16.msra.mxu0 0
        %2122 = vmatprep.subr.bf16.mxu0 0
        %2123 = vmatpush1.bf16.msra.mxu0 0
        %2124 = vmatprep.subr.bf16.mxu0 0
        %2125 = vmatpush1.bf16.msra.mxu0 0
        %2126 = vmatprep.subr.bf16.mxu0 0
        %2127 = vmatpush1.bf16.msra.mxu0 0
        %2128 = vmatprep.subr.bf16.mxu0 0
        %2129 = vmatpush1.bf16.msra.mxu0 0
        %2130 = vmatprep.subr.bf16.mxu0 0
        %2131 = vmatpush1.bf16.msra.mxu0 0
        %2132 = vmatprep.subr.bf16.mxu0 0
        %2133 = vmatpush1.bf16.msra.mxu0 0
        %2134 = vmatprep.subr.bf16.mxu0 0
        %2135 = vmatpush1.bf16.msra.mxu0 0
        %2136 = vmatprep.subr.bf16.mxu0 0
        %2137 = vmatpush1.bf16.msra.mxu0 0
        %2138 = vmatprep.subr.bf16.mxu0 0
        %2139 = vmatpush1.bf16.msra.mxu0 0
        %2140 = vmatprep.mubr.bf16.mxu0 0
        %2141 = vmatmul.mubr.bf16.gmra.mrb[0].mxu0 %v2085
        %v2142 = vpop.f32.mrb[0].mxu0
        %v2143 = vadd.f32 %v2058, %v2142
        %v2144 = vpop.f32.mrb[0].mxu0
        %v2145 = vpop.f32.mrb[0].mxu0
        %v2146 = vadd.f32 %v2058, %v2145
        %v2147 = vpop.f32.mrb[0].mxu0
        %2148 = vmatprep.mubr.bf16.mxu0 0
        %2149 = vmatmul.mubr.bf16.gmra.mrb[0].mxu0 %v2088
        %v2150 = vpop.f32.mrb[0].mxu0
        %v2151 = vadd.f32 %v2058, %v2150
        %v2152 = vpop.f32.mrb[0].mxu0
        %v2153 = vpop.f32.mrb[0].mxu0
        %v2154 = vadd.f32 %v2058, %v2153
        %v2155 = vpop.f32.mrb[0].mxu0
        %2156 = vmatprep.mubr.bf16.mxu0 0
        %2157 = vmatmul.mubr.bf16.gmra.mrb[0].mxu0 %v2091
        %v2158 = vpop.f32.mrb[0].mxu0
        %v2159 = vadd.f32 %v2058, %v2158
        %v2160 = vpop.f32.mrb[0].mxu0
        %v2161 = vpop.f32.mrb[0].mxu0
        %v2162 = vadd.f32 %v2058, %v2161
        %v2163 = vpop.f32.mrb[0].mxu0
        %2164 = vmatprep.mubr.bf16.mxu0 0
        %2165 = vmatmul.mubr.bf16.gmra.mrb[0].mxu0 %v2094
        %v2166 = vpop.f32.mrb[0].mxu0
        %v2167 = vadd.f32 %v2058, %v2166
        %v2168 = vpop.f32.mrb[0].mxu0
        %v2169 = vpop.f32.mrb[0].mxu0
        %v2170 = vadd.f32 %v2058, %v2169
        %v2171 = vpop.f32.mrb[0].mxu0
        %2172 = vmatprep.mubr.bf16.mxu0 0
        %2173 = vmatmul.mubr.bf16.gmra.mrb[0].mxu0 %v2097
        %v2174 = vpop.f32.mrb[0].mxu0
        %v2175 = vadd.f32 %v2058, %v2174
        %v2176 = vpop.f32.mrb[0].mxu0
        %v2177 = vpop.f32.mrb[0].mxu0
        %v2178 = vadd.f32 %v2058, %v2177
        %v2179 = vpop.f32.mrb[0].mxu0
        %2180 = vmatprep.mubr.bf16.mxu0 0
        %2181 = vmatmul.mubr.bf16.gmra.mrb[0].mxu0 %v2100
        %v2182 = vpop.f32.mrb[0].mxu0
        %v2183 = vadd.f32 %v2058, %v2182
        %v2184 = vpop.f32.mrb[0].mxu0
        %v2185 = vpop.f32.mrb[0].mxu0
        %v2186 = vadd.f32 %v2058, %v2185
        %v2187 = vpop.f32.mrb[0].mxu0
        %2188 = vmatprep.mubr.bf16.mxu0 0
        %2189 = vmatmul.mubr.bf16.gmra.mrb[0].mxu0 %v2103
        %v2190 = vpop.f32.mrb[0].mxu0
        %v2191 = vadd.f32 %v2058, %v2190
        %v2192 = vpop.f32.mrb[0].mxu0
        %v2193 = vpop.f32.mrb[0].mxu0
        %v2194 = vadd.f32 %v2058, %v2193
        %v2195 = vpop.f32.mrb[0].mxu0
        %2196 = vmatprep.mubr.bf16.mxu0 0
        %2197 = vmatmul.mubr.bf16.gmra.mrb[0].mxu0 %v2106
        %v2198 = vpop.f32.mrb[0].mxu0
        %v2199 = vadd.f32 %v2058, %v2198
        %v2200 = vpop.f32.mrb[0].mxu0
        %v2201 = vpop.f32.mrb[0].mxu0
        %v2202 = vadd.f32 %v2058, %v2201
        %v2203 = vpop.f32.mrb[0].mxu0
        %2204 = vdwg.mxu0
        %v2205 = vpack.c.bf16 %v2146, %v2143
        %v2206 = vpack.c.bf16 %v2154, %v2151
        %v2207 = vpack.c.bf16 %v2162, %v2159
        %v2208 = vpack.c.bf16 %v2170, %v2167
        %v2209 = vpack.c.bf16 %v2178, %v2175
        %v2210 = vpack.c.bf16 %v2186, %v2183
        %v2211 = vpack.c.bf16 %v2194, %v2191
        %v2212 = vpack.c.bf16 %v2202, %v2199
        %v2213 = vld [vmem:[#allocation4] sm:$0xff]
        %v2214 = vld [vmem:[#allocation4 + $0x8] sm:$0xff]
        %v2215 = vld [vmem:[#allocation4 + $0x10] sm:$0xff]
        %v2216 = vld [vmem:[#allocation4 + $0x18] sm:$0xff]
        %v2217 = vld [vmem:[#allocation4 + $0x20] sm:$0xff]
        %v2218 = vld [vmem:[#allocation4 + $0x28] sm:$0xff]
        %v2219 = vld [vmem:[#allocation4 + $0x30] sm:$0xff]
        %v2220 = vld [vmem:[#allocation4 + $0x38] sm:$0xff]
        %v2221 = vld [vmem:[%s717] sm:$0xf]
        %v2222 = vld [vmem:[%s717 + $0x4] sm:$0xf]
        %v2223 = vld [vmem:[%s717 + $0x8] sm:$0xf]
        %v2224 = vld [vmem:[%s717 + $0xc] sm:$0xf]
        %v2225 = vld [vmem:[%s717 + $0x10] sm:$0xf]
        %v2226 = vld [vmem:[%s717 + $0x14] sm:$0xf]
        %v2227 = vld [vmem:[%s717 + $0x18] sm:$0xf]
        %v2228 = vld [vmem:[%s717 + $0x1c] sm:$0xf]
        %v2229 = vld [vmem:[%s726] sm:$0x1]
        %v2231 = vlaneseq
        %v2232 = vshrl.u32 %v2231, 7
        %v2233 = vsub.s32 0, %v2232
        %v2234 = vrot.slane %v2229, %v2233
        %v2244 = vunpack.c.l.b16 %v2221
        %v2245 = vunpack.c.l.b16 %v2222
        %v2246 = vunpack.c.l.b16 %v2223
        %v2247 = vunpack.c.l.b16 %v2224
        %v2248 = vunpack.c.l.b16 %v2225
        %v2249 = vunpack.c.l.b16 %v2226
        %v2250 = vunpack.c.l.b16 %v2227
        %v2251 = vunpack.c.l.b16 %v2228
        %v2252 = vpack.c.b16 %v2245, %v2244
        %v2253 = vpack.c.b16 %v2247, %v2246
        %v2254 = vpack.c.b16 %v2249, %v2248
        %v2255 = vpack.c.b16 %v2251, %v2250
        %v2261 = vsel %vm1807, %v2213, 0
        %v2264 = vsel %vm1807, %v2214, 0
        %v2267 = vsel %vm1807, %v2215, 0
        %v2270 = vsel %vm1807, %v2216, 0
        %v2273 = vsel %vm1807, %v2217, 0
        %v2276 = vsel %vm1807, %v2218, 0
        %v2279 = vsel %vm1807, %v2219, 0
        %v2282 = vsel %vm1807, %v2220, 0
        %2284 = vmatprep.subr.bf16.mxu0 0
        %2285 = vmatpush1.bf16.msra.mxu0 %v2252
        %2286 = vmatprep.subr.bf16.mxu0 0
        %2287 = vmatpush1.bf16.msra.mxu0 %v2253
        %2288 = vmatprep.subr.bf16.mxu0 0
        %2289 = vmatpush1.bf16.msra.mxu0 %v2254
        %2290 = vmatprep.subr.bf16.mxu0 0
        %2291 = vmatpush1.bf16.msra.mxu0 %v2255
        %2292 = vmatprep.subr.bf16.mxu0 0
        %2293 = vmatpush1.bf16.msra.mxu0 0
        %2294 = vmatprep.subr.bf16.mxu0 0
        %2295 = vmatpush1.bf16.msra.mxu0 0
        %2296 = vmatprep.subr.bf16.mxu0 0
        %2297 = vmatpush1.bf16.msra.mxu0 0
        %2298 = vmatprep.subr.bf16.mxu0 0
        %2299 = vmatpush1.bf16.msra.mxu0 0
        %2300 = vmatprep.subr.bf16.mxu0 0
        %2301 = vmatpush1.bf16.msra.mxu0 0
        %2302 = vmatprep.subr.bf16.mxu0 0
        %2303 = vmatpush1.bf16.msra.mxu0 0
        %2304 = vmatprep.subr.bf16.mxu0 0
        %2305 = vmatpush1.bf16.msra.mxu0 0
        %2306 = vmatprep.subr.bf16.mxu0 0
        %2307 = vmatpush1.bf16.msra.mxu0 0
        %2308 = vmatprep.subr.bf16.mxu0 0
        %2309 = vmatpush1.bf16.msra.mxu0 0
        %2310 = vmatprep.subr.bf16.mxu0 0
        %2311 = vmatpush1.bf16.msra.mxu0 0
        %2312 = vmatprep.subr.bf16.mxu0 0
        %2313 = vmatpush1.bf16.msra.mxu0 0
        %2314 = vmatprep.subr.bf16.mxu0 0
        %2315 = vmatpush1.bf16.msra.mxu0 0
        %2316 = vmatprep.mubr.bf16.mxu0 0
        %2317 = vmatmul.mubr.bf16.gmra.mrb[0].mxu0 %v2261
        %v2318 = vpop.f32.mrb[0].mxu0
        %v2319 = vadd.f32 %v2234, %v2318
        %v2320 = vpop.f32.mrb[0].mxu0
        %v2321 = vpop.f32.mrb[0].mxu0
        %v2322 = vadd.f32 %v2234, %v2321
        %v2323 = vpop.f32.mrb[0].mxu0
        %2324 = vmatprep.mubr.bf16.mxu0 0
        %2325 = vmatmul.mubr.bf16.gmra.mrb[0].mxu0 %v2264
        %v2326 = vpop.f32.mrb[0].mxu0
        %v2327 = vadd.f32 %v2234, %v2326
        %v2328 = vpop.f32.mrb[0].mxu0
        %v2329 = vpop.f32.mrb[0].mxu0
        %v2330 = vadd.f32 %v2234, %v2329
        %v2331 = vpop.f32.mrb[0].mxu0
        %2332 = vmatprep.mubr.bf16.mxu0 0
        %2333 = vmatmul.mubr.bf16.gmra.mrb[0].mxu0 %v2267
        %v2334 = vpop.f32.mrb[0].mxu0
        %v2335 = vadd.f32 %v2234, %v2334
        %v2336 = vpop.f32.mrb[0].mxu0
        %v2337 = vpop.f32.mrb[0].mxu0
        %v2338 = vadd.f32 %v2234, %v2337
        %v2339 = vpop.f32.mrb[0].mxu0
        %2340 = vmatprep.mubr.bf16.mxu0 0
        %2341 = vmatmul.mubr.bf16.gmra.mrb[0].mxu0 %v2270
        %v2342 = vpop.f32.mrb[0].mxu0
        %v2343 = vadd.f32 %v2234, %v2342
        %v2344 = vpop.f32.mrb[0].mxu0
        %v2345 = vpop.f32.mrb[0].mxu0
        %v2346 = vadd.f32 %v2234, %v2345
        %v2347 = vpop.f32.mrb[0].mxu0
        %2348 = vmatprep.mubr.bf16.mxu0 0
        %2349 = vmatmul.mubr.bf16.gmra.mrb[0].mxu0 %v2273
        %v2350 = vpop.f32.mrb[0].mxu0
        %v2351 = vadd.f32 %v2234, %v2350
        %v2352 = vpop.f32.mrb[0].mxu0
        %v2353 = vpop.f32.mrb[0].mxu0
        %v2354 = vadd.f32 %v2234, %v2353
        %v2355 = vpop.f32.mrb[0].mxu0
        %2356 = vmatprep.mubr.bf16.mxu0 0
        %2357 = vmatmul.mubr.bf16.gmra.mrb[0].mxu0 %v2276
        %v2358 = vpop.f32.mrb[0].mxu0
        %v2359 = vadd.f32 %v2234, %v2358
        %v2360 = vpop.f32.mrb[0].mxu0
        %v2361 = vpop.f32.mrb[0].mxu0
        %v2362 = vadd.f32 %v2234, %v2361
        %v2363 = vpop.f32.mrb[0].mxu0
        %2364 = vmatprep.mubr.bf16.mxu0 0
        %2365 = vmatmul.mubr.bf16.gmra.mrb[0].mxu0 %v2279
        %v2366 = vpop.f32.mrb[0].mxu0
        %v2367 = vadd.f32 %v2234, %v2366
        %v2368 = vpop.f32.mrb[0].mxu0
        %v2369 = vpop.f32.mrb[0].mxu0
        %v2370 = vadd.f32 %v2234, %v2369
        %v2371 = vpop.f32.mrb[0].mxu0
        %2372 = vmatprep.mubr.bf16.mxu0 0
        %2373 = vmatmul.mubr.bf16.gmra.mrb[0].mxu0 %v2282
        %v2374 = vpop.f32.mrb[0].mxu0
        %v2375 = vadd.f32 %v2234, %v2374
        %v2376 = vpop.f32.mrb[0].mxu0
        %v2377 = vpop.f32.mrb[0].mxu0
        %v2378 = vadd.f32 %v2234, %v2377
        %v2379 = vpop.f32.mrb[0].mxu0
        %2380 = vdwg.mxu0
        %v2381 = vpack.c.bf16 %v2322, %v2319
        %v2382 = vpack.c.bf16 %v2330, %v2327
        %v2383 = vpack.c.bf16 %v2338, %v2335
        %v2384 = vpack.c.bf16 %v2346, %v2343
        %v2385 = vpack.c.bf16 %v2354, %v2351
        %v2386 = vpack.c.bf16 %v2362, %v2359
        %v2387 = vpack.c.bf16 %v2370, %v2367
        %v2388 = vpack.c.bf16 %v2378, %v2375
        %v2390 = vsel %vm1807, %v2033, 0
        %v2393 = vsel %vm1807, %v2034, 0
        %v2396 = vsel %vm1807, %v2035, 0
        %v2399 = vsel %vm1807, %v2036, 0
        %v2402 = vsel %vm1807, %v2205, 0
        %v2405 = vsel %vm1807, %v2206, 0
        %v2408 = vsel %vm1807, %v2207, 0
        %v2411 = vsel %vm1807, %v2208, 0
        %v2414 = vsel %vm1807, %v2209, 0
        %v2417 = vsel %vm1807, %v2210, 0
        %v2420 = vsel %vm1807, %v2211, 0
        %v2423 = vsel %vm1807, %v2212, 0
        %2425 = vmatprep.subr.bf16.mxu0 0
        %2426 = vmatpush1.bf16.xpose.msra.mxu0 %v2402
        %2427 = vmatprep.subr.bf16.mxu0 0
        %2428 = vmatpush1.bf16.xpose.msra.mxu0 %v2405
        %2429 = vmatprep.subr.bf16.mxu0 0
        %2430 = vmatpush1.bf16.xpose.msra.mxu0 %v2408
        %2431 = vmatprep.subr.bf16.mxu0 0
        %2432 = vmatpush1.bf16.xpose.msra.mxu0 %v2411
        %2433 = vmatprep.subr.bf16.mxu0 0
        %2434 = vmatpush1.bf16.xpose.msra.mxu0 %v2414
        %2435 = vmatprep.subr.bf16.mxu0 0
        %2436 = vmatpush1.bf16.xpose.msra.mxu0 %v2417
        %2437 = vmatprep.subr.bf16.mxu0 0
        %2438 = vmatpush1.bf16.xpose.msra.mxu0 %v2420
        %2439 = vmatprep.subr.bf16.mxu0 0
        %2440 = vmatpush1.bf16.xpose.msra.mxu0 %v2423
        %2441 = vmatprep.subr.bf16.mxu0 0
        %2442 = vmatpush1.bf16.xpose.msra.mxu0 0
        %2443 = vmatprep.subr.bf16.mxu0 0
        %2444 = vmatpush1.bf16.xpose.msra.mxu0 0
        %2445 = vmatprep.subr.bf16.mxu0 0
        %2446 = vmatpush1.bf16.xpose.msra.mxu0 0
        %2447 = vmatprep.subr.bf16.mxu0 0
        %2448 = vmatpush1.bf16.xpose.msra.mxu0 0
        %2449 = vmatprep.subr.bf16.mxu0 0
        %2450 = vmatpush1.bf16.xpose.msra.mxu0 0
        %2451 = vmatprep.subr.bf16.mxu0 0
        %2452 = vmatpush1.bf16.xpose.msra.mxu0 0
        %2453 = vmatprep.subr.bf16.mxu0 0
        %2454 = vmatpush1.bf16.xpose.msra.mxu0 0
        %2455 = vmatprep.subr.bf16.mxu0 0
        %2456 = vmatpush1.bf16.xpose.msra.mxu0 0
        %2457 = vmatprep.mubr.bf16.mxu0 0
        %2458 = vmatmul.mubr.bf16.gmra.mrb[0].mxu0 %v2390
        %v2459 = vpop.f32.mrb[0].mxu0
        %v2460 = vadd.f32 0.0, %v2459
        %v2461 = vpop.f32.mrb[0].mxu0
        %v2462 = vpop.f32.mrb[0].mxu0
        %v2463 = vadd.f32 0.0, %v2462
        %v2464 = vpop.f32.mrb[0].mxu0
        %2465 = vmatprep.mubr.bf16.mxu0 0
        %2466 = vmatmul.mubr.bf16.gmra.mrb[0].mxu0 %v2393
        %v2467 = vpop.f32.mrb[0].mxu0
        %v2468 = vadd.f32 0.0, %v2467
        %v2469 = vpop.f32.mrb[0].mxu0
        %v2470 = vpop.f32.mrb[0].mxu0
        %v2471 = vadd.f32 0.0, %v2470
        %v2472 = vpop.f32.mrb[0].mxu0
        %2473 = vmatprep.mubr.bf16.mxu0 0
        %2474 = vmatmul.mubr.bf16.gmra.mrb[0].mxu0 %v2396
        %v2475 = vpop.f32.mrb[0].mxu0
        %v2476 = vadd.f32 0.0, %v2475
        %v2477 = vpop.f32.mrb[0].mxu0
        %v2478 = vpop.f32.mrb[0].mxu0
        %v2479 = vadd.f32 0.0, %v2478
        %v2480 = vpop.f32.mrb[0].mxu0
        %2481 = vmatprep.mubr.bf16.mxu0 0
        %2482 = vmatmul.mubr.bf16.gmra.mrb[0].mxu0 %v2399
        %v2483 = vpop.f32.mrb[0].mxu0
        %v2484 = vadd.f32 0.0, %v2483
        %v2485 = vpop.f32.mrb[0].mxu0
        %v2486 = vpop.f32.mrb[0].mxu0
        %v2487 = vadd.f32 0.0, %v2486
        %v2488 = vpop.f32.mrb[0].mxu0
        %2489 = vdwg.mxu0
        %2490 = vmax.xlane.f32.xlu0 %v2460
        %v2491 = vpop.xlane.xlu0 %2490
        %2492 = vmax.xlane.f32.xlu0 %v2463
        %v2493 = vpop.xlane.xlu0 %2492
        %2494 = vmax.xlane.f32.xlu0 %v2468
        %v2495 = vpop.xlane.xlu0 %2494
        %2496 = vmax.xlane.f32.xlu0 %v2471
        %v2497 = vpop.xlane.xlu0 %2496
        %2498 = vmax.xlane.f32.xlu0 %v2476
        %v2499 = vpop.xlane.xlu0 %2498
        %2500 = vmax.xlane.f32.xlu0 %v2479
        %v2501 = vpop.xlane.xlu0 %2500
        %2502 = vmax.xlane.f32.xlu0 %v2484
        %v2503 = vpop.xlane.xlu0 %2502
        %2504 = vmax.xlane.f32.xlu0 %v2487
        %v2505 = vpop.xlane.xlu0 %2504
        %v2506 = vmax.f32 %v2491, -1e+30
        %v2507 = vmax.f32 %v2493, -1e+30
        %v2508 = vmax.f32 %v2495, -1e+30
        %v2509 = vmax.f32 %v2497, -1e+30
        %v2510 = vmax.f32 %v2499, -1e+30
        %v2511 = vmax.f32 %v2501, -1e+30
        %v2512 = vmax.f32 %v2503, -1e+30
        %v2513 = vmax.f32 %v2505, -1e+30
        %v2514 = vsub.f32 -1e+30, %v2506
        %v2515 = vsub.f32 -1e+30, %v2507
        %v2516 = vsub.f32 -1e+30, %v2508
        %v2517 = vsub.f32 -1e+30, %v2509
        %v2518 = vsub.f32 -1e+30, %v2510
        %v2519 = vsub.f32 -1e+30, %v2511
        %v2520 = vsub.f32 -1e+30, %v2512
        %v2521 = vsub.f32 -1e+30, %v2513
        %v2522 = vmul.f32 %v2514, 1.442695
        %v2523 = vpow.pop %v2522
        %v2524 = vmul.f32 %v2515, 1.442695
        %v2525 = vpow.pop %v2524
        %v2526 = vmul.f32 %v2516, 1.442695
        %v2527 = vpow.pop %v2526
        %v2528 = vmul.f32 %v2517, 1.442695
        %v2529 = vpow.pop %v2528
        %v2530 = vmul.f32 %v2518, 1.442695
        %v2531 = vpow.pop %v2530
        %v2532 = vmul.f32 %v2519, 1.442695
        %v2533 = vpow.pop %v2532
        %v2534 = vmul.f32 %v2520, 1.442695
        %v2535 = vpow.pop %v2534
        %v2536 = vmul.f32 %v2521, 1.442695
        %v2537 = vpow.pop %v2536
        %v2538 = vsub.f32 %v2460, %v2506
        %v2539 = vsub.f32 %v2463, %v2507
        %v2540 = vsub.f32 %v2468, %v2508
        %v2541 = vsub.f32 %v2471, %v2509
        %v2542 = vsub.f32 %v2476, %v2510
        %v2543 = vsub.f32 %v2479, %v2511
        %v2544 = vsub.f32 %v2484, %v2512
        %v2545 = vsub.f32 %v2487, %v2513
        %v2546 = vmul.f32 %v2538, 1.442695
        %v2547 = vpow.pop %v2546
        %v2548 = vmul.f32 %v2539, 1.442695
        %v2549 = vpow.pop %v2548
        %v2550 = vmul.f32 %v2540, 1.442695
        %v2551 = vpow.pop %v2550
        %v2552 = vmul.f32 %v2541, 1.442695
        %v2553 = vpow.pop %v2552
        %v2554 = vmul.f32 %v2542, 1.442695
        %v2555 = vpow.pop %v2554
        %v2556 = vmul.f32 %v2543, 1.442695
        %v2557 = vpow.pop %v2556
        %v2558 = vmul.f32 %v2544, 1.442695
        %v2559 = vpow.pop %v2558
        %v2560 = vmul.f32 %v2545, 1.442695
        %v2561 = vpow.pop %v2560
        %v2562 = vmul.f32 %v2523, 0.0
        %v2563 = vmul.f32 %v2525, 0.0
        %v2564 = vmul.f32 %v2527, 0.0
        %v2565 = vmul.f32 %v2529, 0.0
        %v2566 = vmul.f32 %v2531, 0.0
        %v2567 = vmul.f32 %v2533, 0.0
        %v2568 = vmul.f32 %v2535, 0.0
        %v2569 = vmul.f32 %v2537, 0.0
        %2570 = vadd.xlane.f32.xlu0 %v2547
        %v2571 = vpop.xlane.xlu0 %2570
        %2572 = vadd.xlane.f32.xlu0 %v2549
        %v2573 = vpop.xlane.xlu0 %2572
        %2574 = vadd.xlane.f32.xlu0 %v2551
        %v2575 = vpop.xlane.xlu0 %2574
        %2576 = vadd.xlane.f32.xlu0 %v2553
        %v2577 = vpop.xlane.xlu0 %2576
        %2578 = vadd.xlane.f32.xlu0 %v2555
        %v2579 = vpop.xlane.xlu0 %2578
        %2580 = vadd.xlane.f32.xlu0 %v2557
        %v2581 = vpop.xlane.xlu0 %2580
        %2582 = vadd.xlane.f32.xlu0 %v2559
        %v2583 = vpop.xlane.xlu0 %2582
        %2584 = vadd.xlane.f32.xlu0 %v2561
        %v2585 = vpop.xlane.xlu0 %2584
        %v2586 = vadd.f32 %v2562, %v2571
        %v2587 = vadd.f32 %v2563, %v2573
        %v2588 = vadd.f32 %v2564, %v2575
        %v2589 = vadd.f32 %v2565, %v2577
        %v2590 = vadd.f32 %v2566, %v2579
        %v2591 = vadd.f32 %v2567, %v2581
        %v2592 = vadd.f32 %v2568, %v2583
        %v2593 = vadd.f32 %v2569, %v2585
        %v2594 = vpack.c.bf16 %v2549, %v2547
        %v2595 = vpack.c.bf16 %v2553, %v2551
        %v2596 = vpack.c.bf16 %v2557, %v2555
        %v2597 = vpack.c.bf16 %v2561, %v2559
        %2598 = vmatprep.subr.bf16.mxu0 0
        %2599 = vmatpush1.bf16.msra.mxu0 %v2381
        %2600 = vmatprep.subr.bf16.mxu0 0
        %2601 = vmatpush1.bf16.msra.mxu0 %v2382
        %2602 = vmatprep.subr.bf16.mxu0 0
        %2603 = vmatpush1.bf16.msra.mxu0 %v2383
        %2604 = vmatprep.subr.bf16.mxu0 0
        %2605 = vmatpush1.bf16.msra.mxu0 %v2384
        %2606 = vmatprep.subr.bf16.mxu0 0
        %2607 = vmatpush1.bf16.msra.mxu0 %v2385
        %2608 = vmatprep.subr.bf16.mxu0 0
        %2609 = vmatpush1.bf16.msra.mxu0 %v2386
        %2610 = vmatprep.subr.bf16.mxu0 0
        %2611 = vmatpush1.bf16.msra.mxu0 %v2387
        %2612 = vmatprep.subr.bf16.mxu0 0
        %2613 = vmatpush1.bf16.msra.mxu0 %v2388
        %2614 = vmatprep.subr.bf16.mxu0 0
        %2615 = vmatpush1.bf16.msra.mxu0 0
        %2616 = vmatprep.subr.bf16.mxu0 0
        %2617 = vmatpush1.bf16.msra.mxu0 0
        %2618 = vmatprep.subr.bf16.mxu0 0
        %2619 = vmatpush1.bf16.msra.mxu0 0
        %2620 = vmatprep.subr.bf16.mxu0 0
        %2621 = vmatpush1.bf16.msra.mxu0 0
        %2622 = vmatprep.subr.bf16.mxu0 0
        %2623 = vmatpush1.bf16.msra.mxu0 0
        %2624 = vmatprep.subr.bf16.mxu0 0
        %2625 = vmatpush1.bf16.msra.mxu0 0
        %2626 = vmatprep.subr.bf16.mxu0 0
        %2627 = vmatpush1.bf16.msra.mxu0 0
        %2628 = vmatprep.subr.bf16.mxu0 0
        %2629 = vmatpush1.bf16.msra.mxu0 0
        %2630 = vmatprep.mubr.bf16.mxu0 0
        %2631 = vmatmul.mubr.bf16.gmra.mrb[0].mxu0 %v2594
        %v2632 = vpop.f32.mrb[0].mxu0
        %v2633 = vadd.f32 0.0, %v2632
        %v2634 = vpop.f32.mrb[0].mxu0
        %v2635 = vpop.f32.mrb[0].mxu0
        %v2636 = vadd.f32 0.0, %v2635
        %v2637 = vpop.f32.mrb[0].mxu0
        %2638 = vmatprep.mubr.bf16.mxu0 0
        %2639 = vmatmul.mubr.bf16.gmra.mrb[0].mxu0 %v2595
        %v2640 = vpop.f32.mrb[0].mxu0
        %v2641 = vadd.f32 0.0, %v2640
        %v2642 = vpop.f32.mrb[0].mxu0
        %v2643 = vpop.f32.mrb[0].mxu0
        %v2644 = vadd.f32 0.0, %v2643
        %v2645 = vpop.f32.mrb[0].mxu0
        %2646 = vmatprep.mubr.bf16.mxu0 0
        %2647 = vmatmul.mubr.bf16.gmra.mrb[0].mxu0 %v2596
        %v2648 = vpop.f32.mrb[0].mxu0
        %v2649 = vadd.f32 0.0, %v2648
        %v2650 = vpop.f32.mrb[0].mxu0
        %v2651 = vpop.f32.mrb[0].mxu0
        %v2652 = vadd.f32 0.0, %v2651
        %v2653 = vpop.f32.mrb[0].mxu0
        %2654 = vmatprep.mubr.bf16.mxu0 0
        %2655 = vmatmul.mubr.bf16.gmra.mrb[0].mxu0 %v2597
        %v2656 = vpop.f32.mrb[0].mxu0
        %v2657 = vadd.f32 0.0, %v2656
        %v2658 = vpop.f32.mrb[0].mxu0
        %v2659 = vpop.f32.mrb[0].mxu0
        %v2660 = vadd.f32 0.0, %v2659
        %v2661 = vpop.f32.mrb[0].mxu0
        %2662 = vdwg.mxu0
        %v2663 = vadd.f32 %v2562, %v2633
        %v2664 = vadd.f32 %v2563, %v2636
        %v2665 = vadd.f32 %v2564, %v2641
        %v2666 = vadd.f32 %v2565, %v2644
        %v2667 = vadd.f32 %v2566, %v2649
        %v2668 = vadd.f32 %v2567, %v2652
        %v2669 = vadd.f32 %v2568, %v2657
        %v2670 = vadd.f32 %v2569, %v2660
        %v2671 = vld [vmem:[#allocation3 + $0x40] sm:$0xff]
        %v2672 = vld [vmem:[#allocation3 + $0x48] sm:$0xff]
        %v2673 = vld [vmem:[#allocation3 + $0x50] sm:$0xff]
        %v2674 = vld [vmem:[#allocation3 + $0x58] sm:$0xff]
        %v2675 = vld [vmem:[#allocation3 + $0x60] sm:$0xff]
        %v2676 = vld [vmem:[#allocation3 + $0x68] sm:$0xff]
        %v2677 = vld [vmem:[#allocation3 + $0x70] sm:$0xff]
        %v2678 = vld [vmem:[#allocation3 + $0x78] sm:$0xff]
        %v2680 = vsel %vm1807, %v2671, 0
        %v2683 = vsel %vm1807, %v2672, 0
        %v2686 = vsel %vm1807, %v2673, 0
        %v2689 = vsel %vm1807, %v2674, 0
        %v2692 = vsel %vm1807, %v2675, 0
        %v2695 = vsel %vm1807, %v2676, 0
        %v2698 = vsel %vm1807, %v2677, 0
        %v2701 = vsel %vm1807, %v2678, 0
        %2703 = vmatprep.subr.bf16.mxu0 0
        %2704 = vmatpush1.bf16.msra.mxu0 %v2076
        %2705 = vmatprep.subr.bf16.mxu0 0
        %2706 = vmatpush1.bf16.msra.mxu0 %v2077
        %2707 = vmatprep.subr.bf16.mxu0 0
        %2708 = vmatpush1.bf16.msra.mxu0 %v2078
        %2709 = vmatprep.subr.bf16.mxu0 0
        %2710 = vmatpush1.bf16.msra.mxu0 %v2079
        %2711 = vmatprep.subr.bf16.mxu0 0
        %2712 = vmatpush1.bf16.msra.mxu0 0
        %2713 = vmatprep.subr.bf16.mxu0 0
        %2714 = vmatpush1.bf16.msra.mxu0 0
        %2715 = vmatprep.subr.bf16.mxu0 0
        %2716 = vmatpush1.bf16.msra.mxu0 0
        %2717 = vmatprep.subr.bf16.mxu0 0
        %2718 = vmatpush1.bf16.msra.mxu0 0
        %2719 = vmatprep.subr.bf16.mxu0 0
        %2720 = vmatpush1.bf16.msra.mxu0 0
        %2721 = vmatprep.subr.bf16.mxu0 0
        %2722 = vmatpush1.bf16.msra.mxu0 0
        %2723 = vmatprep.subr.bf16.mxu0 0
        %2724 = vmatpush1.bf16.msra.mxu0 0
        %2725 = vmatprep.subr.bf16.mxu0 0
        %2726 = vmatpush1.bf16.msra.mxu0 0
        %2727 = vmatprep.subr.bf16.mxu0 0
        %2728 = vmatpush1.bf16.msra.mxu0 0
        %2729 = vmatprep.subr.bf16.mxu0 0
        %2730 = vmatpush1.bf16.msra.mxu0 0
        %2731 = vmatprep.subr.bf16.mxu0 0
        %2732 = vmatpush1.bf16.msra.mxu0 0
        %2733 = vmatprep.subr.bf16.mxu0 0
        %2734 = vmatpush1.bf16.msra.mxu0 0
        %2735 = vmatprep.mubr.bf16.mxu0 0
        %2736 = vmatmul.mubr.bf16.gmra.mrb[0].mxu0 %v2680
        %v2737 = vpop.f32.mrb[0].mxu0
        %v2738 = vadd.f32 %v2058, %v2737
        %v2739 = vpop.f32.mrb[0].mxu0
        %v2740 = vpop.f32.mrb[0].mxu0
        %v2741 = vadd.f32 %v2058, %v2740
        %v2742 = vpop.f32.mrb[0].mxu0
        %2743 = vmatprep.mubr.bf16.mxu0 0
        %2744 = vmatmul.mubr.bf16.gmra.mrb[0].mxu0 %v2683
        %v2745 = vpop.f32.mrb[0].mxu0
        %v2746 = vadd.f32 %v2058, %v2745
        %v2747 = vpop.f32.mrb[0].mxu0
        %v2748 = vpop.f32.mrb[0].mxu0
        %v2749 = vadd.f32 %v2058, %v2748
        %v2750 = vpop.f32.mrb[0].mxu0
        %2751 = vmatprep.mubr.bf16.mxu0 0
        %2752 = vmatmul.mubr.bf16.gmra.mrb[0].mxu0 %v2686
        %v2753 = vpop.f32.mrb[0].mxu0
        %v2754 = vadd.f32 %v2058, %v2753
        %v2755 = vpop.f32.mrb[0].mxu0
        %v2756 = vpop.f32.mrb[0].mxu0
        %v2757 = vadd.f32 %v2058, %v2756
        %v2758 = vpop.f32.mrb[0].mxu0
        %2759 = vmatprep.mubr.bf16.mxu0 0
        %2760 = vmatmul.mubr.bf16.gmra.mrb[0].mxu0 %v2689
        %v2761 = vpop.f32.mrb[0].mxu0
        %v2762 = vadd.f32 %v2058, %v2761
        %v2763 = vpop.f32.mrb[0].mxu0
        %v2764 = vpop.f32.mrb[0].mxu0
        %v2765 = vadd.f32 %v2058, %v2764
        %v2766 = vpop.f32.mrb[0].mxu0
        %2767 = vmatprep.mubr.bf16.mxu0 0
        %2768 = vmatmul.mubr.bf16.gmra.mrb[0].mxu0 %v2692
        %v2769 = vpop.f32.mrb[0].mxu0
        %v2770 = vadd.f32 %v2058, %v2769
        %v2771 = vpop.f32.mrb[0].mxu0
        %v2772 = vpop.f32.mrb[0].mxu0
        %v2773 = vadd.f32 %v2058, %v2772
        %v2774 = vpop.f32.mrb[0].mxu0
        %2775 = vmatprep.mubr.bf16.mxu0 0
        %2776 = vmatmul.mubr.bf16.gmra.mrb[0].mxu0 %v2695
        %v2777 = vpop.f32.mrb[0].mxu0
        %v2778 = vadd.f32 %v2058, %v2777
        %v2779 = vpop.f32.mrb[0].mxu0
        %v2780 = vpop.f32.mrb[0].mxu0
        %v2781 = vadd.f32 %v2058, %v2780
        %v2782 = vpop.f32.mrb[0].mxu0
        %2783 = vmatprep.mubr.bf16.mxu0 0
        %2784 = vmatmul.mubr.bf16.gmra.mrb[0].mxu0 %v2698
        %v2785 = vpop.f32.mrb[0].mxu0
        %v2786 = vadd.f32 %v2058, %v2785
        %v2787 = vpop.f32.mrb[0].mxu0
        %v2788 = vpop.f32.mrb[0].mxu0
        %v2789 = vadd.f32 %v2058, %v2788
        %v2790 = vpop.f32.mrb[0].mxu0
        %2791 = vmatprep.mubr.bf16.mxu0 0
        %2792 = vmatmul.mubr.bf16.gmra.mrb[0].mxu0 %v2701
        %v2793 = vpop.f32.mrb[0].mxu0
        %v2794 = vadd.f32 %v2058, %v2793
        %v2795 = vpop.f32.mrb[0].mxu0
        %v2796 = vpop.f32.mrb[0].mxu0
        %v2797 = vadd.f32 %v2058, %v2796
        %v2798 = vpop.f32.mrb[0].mxu0
        %2799 = vdwg.mxu0
        %v2800 = vpack.c.bf16 %v2741, %v2738
        %v2801 = vpack.c.bf16 %v2749, %v2746
        %v2802 = vpack.c.bf16 %v2757, %v2754
        %v2803 = vpack.c.bf16 %v2765, %v2762
        %v2804 = vpack.c.bf16 %v2773, %v2770
        %v2805 = vpack.c.bf16 %v2781, %v2778
        %v2806 = vpack.c.bf16 %v2789, %v2786
        %v2807 = vpack.c.bf16 %v2797, %v2794
        %v2808 = vld [vmem:[#allocation4 + $0x40] sm:$0xff]
        %v2809 = vld [vmem:[#allocation4 + $0x48] sm:$0xff]
        %v2810 = vld [vmem:[#allocation4 + $0x50] sm:$0xff]
        %v2811 = vld [vmem:[#allocation4 + $0x58] sm:$0xff]
        %v2812 = vld [vmem:[#allocation4 + $0x60] sm:$0xff]
        %v2813 = vld [vmem:[#allocation4 + $0x68] sm:$0xff]
        %v2814 = vld [vmem:[#allocation4 + $0x70] sm:$0xff]
        %v2815 = vld [vmem:[#allocation4 + $0x78] sm:$0xff]
        %v2817 = vsel %vm1807, %v2808, 0
        %v2820 = vsel %vm1807, %v2809, 0
        %v2823 = vsel %vm1807, %v2810, 0
        %v2826 = vsel %vm1807, %v2811, 0
        %v2829 = vsel %vm1807, %v2812, 0
        %v2832 = vsel %vm1807, %v2813, 0
        %v2835 = vsel %vm1807, %v2814, 0
        %v2838 = vsel %vm1807, %v2815, 0
        %2840 = vmatprep.subr.bf16.mxu0 0
        %2841 = vmatpush1.bf16.msra.mxu0 %v2252
        %2842 = vmatprep.subr.bf16.mxu0 0
        %2843 = vmatpush1.bf16.msra.mxu0 %v2253
        %2844 = vmatprep.subr.bf16.mxu0 0
        %2845 = vmatpush1.bf16.msra.mxu0 %v2254
        %2846 = vmatprep.subr.bf16.mxu0 0
        %2847 = vmatpush1.bf16.msra.mxu0 %v2255
        %2848 = vmatprep.subr.bf16.mxu0 0
        %2849 = vmatpush1.bf16.msra.mxu0 0
        %2850 = vmatprep.subr.bf16.mxu0 0
        %2851 = vmatpush1.bf16.msra.mxu0 0
        %2852 = vmatprep.subr.bf16.mxu0 0
        %2853 = vmatpush1.bf16.msra.mxu0 0
        %2854 = vmatprep.subr.bf16.mxu0 0
        %2855 = vmatpush1.bf16.msra.mxu0 0
        %2856 = vmatprep.subr.bf16.mxu0 0
        %2857 = vmatpush1.bf16.msra.mxu0 0
        %2858 = vmatprep.subr.bf16.mxu0 0
        %2859 = vmatpush1.bf16.msra.mxu0 0
        %2860 = vmatprep.subr.bf16.mxu0 0
        %2861 = vmatpush1.bf16.msra.mxu0 0
        %2862 = vmatprep.subr.bf16.mxu0 0
        %2863 = vmatpush1.bf16.msra.mxu0 0
        %2864 = vmatprep.subr.bf16.mxu0 0
        %2865 = vmatpush1.bf16.msra.mxu0 0
        %2866 = vmatprep.subr.bf16.mxu0 0
        %2867 = vmatpush1.bf16.msra.mxu0 0
        %2868 = vmatprep.subr.bf16.mxu0 0
        %2869 = vmatpush1.bf16.msra.mxu0 0
        %2870 = vmatprep.subr.bf16.mxu0 0
        %2871 = vmatpush1.bf16.msra.mxu0 0
        %2872 = vmatprep.mubr.bf16.mxu0 0
        %2873 = vmatmul.mubr.bf16.gmra.mrb[0].mxu0 %v2817
        %v2874 = vpop.f32.mrb[0].mxu0
        %v2875 = vadd.f32 %v2234, %v2874
        %v2876 = vpop.f32.mrb[0].mxu0
        %v2877 = vpop.f32.mrb[0].mxu0
        %v2878 = vadd.f32 %v2234, %v2877
        %v2879 = vpop.f32.mrb[0].mxu0
        %2880 = vmatprep.mubr.bf16.mxu0 0
        %2881 = vmatmul.mubr.bf16.gmra.mrb[0].mxu0 %v2820
        %v2882 = vpop.f32.mrb[0].mxu0
        %v2883 = vadd.f32 %v2234, %v2882
        %v2884 = vpop.f32.mrb[0].mxu0
        %v2885 = vpop.f32.mrb[0].mxu0
        %v2886 = vadd.f32 %v2234, %v2885
        %v2887 = vpop.f32.mrb[0].mxu0
        %2888 = vmatprep.mubr.bf16.mxu0 0
        %2889 = vmatmul.mubr.bf16.gmra.mrb[0].mxu0 %v2823
        %v2890 = vpop.f32.mrb[0].mxu0
        %v2891 = vadd.f32 %v2234, %v2890
        %v2892 = vpop.f32.mrb[0].mxu0
        %v2893 = vpop.f32.mrb[0].mxu0
        %v2894 = vadd.f32 %v2234, %v2893
        %v2895 = vpop.f32.mrb[0].mxu0
        %2896 = vmatprep.mubr.bf16.mxu0 0
        %2897 = vmatmul.mubr.bf16.gmra.mrb[0].mxu0 %v2826
        %v2898 = vpop.f32.mrb[0].mxu0
        %v2899 = vadd.f32 %v2234, %v2898
        %v2900 = vpop.f32.mrb[0].mxu0
        %v2901 = vpop.f32.mrb[0].mxu0
        %v2902 = vadd.f32 %v2234, %v2901
        %v2903 = vpop.f32.mrb[0].mxu0
        %2904 = vmatprep.mubr.bf16.mxu0 0
        %2905 = vmatmul.mubr.bf16.gmra.mrb[0].mxu0 %v2829
        %v2906 = vpop.f32.mrb[0].mxu0
        %v2907 = vadd.f32 %v2234, %v2906
        %v2908 = vpop.f32.mrb[0].mxu0
        %v2909 = vpop.f32.mrb[0].mxu0
        %v2910 = vadd.f32 %v2234, %v2909
        %v2911 = vpop.f32.mrb[0].mxu0
        %2912 = vmatprep.mubr.bf16.mxu0 0
        %2913 = vmatmul.mubr.bf16.gmra.mrb[0].mxu0 %v2832
        %v2914 = vpop.f32.mrb[0].mxu0
        %v2915 = vadd.f32 %v2234, %v2914
        %v2916 = vpop.f32.mrb[0].mxu0
        %v2917 = vpop.f32.mrb[0].mxu0
        %v2918 = vadd.f32 %v2234, %v2917
        %v2919 = vpop.f32.mrb[0].mxu0
        %2920 = vmatprep.mubr.bf16.mxu0 0
        %2921 = vmatmul.mubr.bf16.gmra.mrb[0].mxu0 %v2835
        %v2922 = vpop.f32.mrb[0].mxu0
        %v2923 = vadd.f32 %v2234, %v2922
        %v2924 = vpop.f32.mrb[0].mxu0
        %v2925 = vpop.f32.mrb[0].mxu0
        %v2926 = vadd.f32 %v2234, %v2925
        %v2927 = vpop.f32.mrb[0].mxu0
        %2928 = vmatprep.mubr.bf16.mxu0 0
        %2929 = vmatmul.mubr.bf16.gmra.mrb[0].mxu0 %v2838
        %v2930 = vpop.f32.mrb[0].mxu0
        %v2931 = vadd.f32 %v2234, %v2930
        %v2932 = vpop.f32.mrb[0].mxu0
        %v2933 = vpop.f32.mrb[0].mxu0
        %v2934 = vadd.f32 %v2234, %v2933
        %v2935 = vpop.f32.mrb[0].mxu0
        %2936 = vdwg.mxu0
        %v2937 = vpack.c.bf16 %v2878, %v2875
        %v2938 = vpack.c.bf16 %v2886, %v2883
        %v2939 = vpack.c.bf16 %v2894, %v2891
        %v2940 = vpack.c.bf16 %v2902, %v2899
        %v2941 = vpack.c.bf16 %v2910, %v2907
        %v2942 = vpack.c.bf16 %v2918, %v2915
        %v2943 = vpack.c.bf16 %v2926, %v2923
        %v2944 = vpack.c.bf16 %v2934, %v2931
        %v2946 = vsel %vm1807, %v2800, 0
        %v2949 = vsel %vm1807, %v2801, 0
        %v2952 = vsel %vm1807, %v2802, 0
        %v2955 = vsel %vm1807, %v2803, 0
        %v2958 = vsel %vm1807, %v2804, 0
        %v2961 = vsel %vm1807, %v2805, 0
        %v2964 = vsel %vm1807, %v2806, 0
        %v2967 = vsel %vm1807, %v2807, 0
        %2969 = vmatprep.subr.bf16.mxu0 0
        %2970 = vmatpush1.bf16.xpose.msra.mxu0 %v2946
        %2971 = vmatprep.subr.bf16.mxu0 0
        %2972 = vmatpush1.bf16.xpose.msra.mxu0 %v2949
        %2973 = vmatprep.subr.bf16.mxu0 0
        %2974 = vmatpush1.bf16.xpose.msra.mxu0 %v2952
        %2975 = vmatprep.subr.bf16.mxu0 0
        %2976 = vmatpush1.bf16.xpose.msra.mxu0 %v2955
        %2977 = vmatprep.subr.bf16.mxu0 0
        %2978 = vmatpush1.bf16.xpose.msra.mxu0 %v2958
        %2979 = vmatprep.subr.bf16.mxu0 0
        %2980 = vmatpush1.bf16.xpose.msra.mxu0 %v2961
        %2981 = vmatprep.subr.bf16.mxu0 0
        %2982 = vmatpush1.bf16.xpose.msra.mxu0 %v2964
        %2983 = vmatprep.subr.bf16.mxu0 0
        %2984 = vmatpush1.bf16.xpose.msra.mxu0 %v2967
        %2985 = vmatprep.subr.bf16.mxu0 0
        %2986 = vmatpush1.bf16.xpose.msra.mxu0 0
        %2987 = vmatprep.subr.bf16.mxu0 0
        %2988 = vmatpush1.bf16.xpose.msra.mxu0 0
        %2989 = vmatprep.subr.bf16.mxu0 0
        %2990 = vmatpush1.bf16.xpose.msra.mxu0 0
        %2991 = vmatprep.subr.bf16.mxu0 0
        %2992 = vmatpush1.bf16.xpose.msra.mxu0 0
        %2993 = vmatprep.subr.bf16.mxu0 0
        %2994 = vmatpush1.bf16.xpose.msra.mxu0 0
        %2995 = vmatprep.subr.bf16.mxu0 0
        %2996 = vmatpush1.bf16.xpose.msra.mxu0 0
        %2997 = vmatprep.subr.bf16.mxu0 0
        %2998 = vmatpush1.bf16.xpose.msra.mxu0 0
        %2999 = vmatprep.subr.bf16.mxu0 0
        %3000 = vmatpush1.bf16.xpose.msra.mxu0 0
        %3001 = vmatprep.mubr.bf16.mxu0 0
        %3002 = vmatmul.mubr.bf16.gmra.mrb[0].mxu0 %v2390
        %v3003 = vpop.f32.mrb[0].mxu0
        %v3004 = vadd.f32 0.0, %v3003
        %v3005 = vpop.f32.mrb[0].mxu0
        %v3006 = vpop.f32.mrb[0].mxu0
        %v3007 = vadd.f32 0.0, %v3006
        %v3008 = vpop.f32.mrb[0].mxu0
        %3009 = vmatprep.mubr.bf16.mxu0 0
        %3010 = vmatmul.mubr.bf16.gmra.mrb[0].mxu0 %v2393
        %v3011 = vpop.f32.mrb[0].mxu0
        %v3012 = vadd.f32 0.0, %v3011
        %v3013 = vpop.f32.mrb[0].mxu0
        %v3014 = vpop.f32.mrb[0].mxu0
        %v3015 = vadd.f32 0.0, %v3014
        %v3016 = vpop.f32.mrb[0].mxu0
        %3017 = vmatprep.mubr.bf16.mxu0 0
        %3018 = vmatmul.mubr.bf16.gmra.mrb[0].mxu0 %v2396
        %v3019 = vpop.f32.mrb[0].mxu0
        %v3020 = vadd.f32 0.0, %v3019
        %v3021 = vpop.f32.mrb[0].mxu0
        %v3022 = vpop.f32.mrb[0].mxu0
        %v3023 = vadd.f32 0.0, %v3022
        %v3024 = vpop.f32.mrb[0].mxu0
        %3025 = vmatprep.mubr.bf16.mxu0 0
        %3026 = vmatmul.mubr.bf16.gmra.mrb[0].mxu0 %v2399
        %v3027 = vpop.f32.mrb[0].mxu0
        %v3028 = vadd.f32 0.0, %v3027
        %v3029 = vpop.f32.mrb[0].mxu0
        %v3030 = vpop.f32.mrb[0].mxu0
        %v3031 = vadd.f32 0.0, %v3030
        %v3032 = vpop.f32.mrb[0].mxu0
        %3033 = vdwg.mxu0
        %3034 = vmax.xlane.f32.xlu0 %v3004
        %v3035 = vpop.xlane.xlu0 %3034
        %3036 = vmax.xlane.f32.xlu0 %v3007
        %v3037 = vpop.xlane.xlu0 %3036
        %3038 = vmax.xlane.f32.xlu0 %v3012
        %v3039 = vpop.xlane.xlu0 %3038
        %3040 = vmax.xlane.f32.xlu0 %v3015
        %v3041 = vpop.xlane.xlu0 %3040
        %3042 = vmax.xlane.f32.xlu0 %v3020
        %v3043 = vpop.xlane.xlu0 %3042
        %3044 = vmax.xlane.f32.xlu0 %v3023
        %v3045 = vpop.xlane.xlu0 %3044
        %3046 = vmax.xlane.f32.xlu0 %v3028
        %v3047 = vpop.xlane.xlu0 %3046
        %3048 = vmax.xlane.f32.xlu0 %v3031
        %v3049 = vpop.xlane.xlu0 %3048
        %v3050 = vmax.f32 %v2506, %v3035
        %v3051 = vmax.f32 %v2507, %v3037
        %v3052 = vmax.f32 %v2508, %v3039
        %v3053 = vmax.f32 %v2509, %v3041
        %v3054 = vmax.f32 %v2510, %v3043
        %v3055 = vmax.f32 %v2511, %v3045
        %v3056 = vmax.f32 %v2512, %v3047
        %v3057 = vmax.f32 %v2513, %v3049
        %v3058 = vsub.f32 %v2506, %v3050
        %v3059 = vsub.f32 %v2507, %v3051
        %v3060 = vsub.f32 %v2508, %v3052
        %v3061 = vsub.f32 %v2509, %v3053
        %v3062 = vsub.f32 %v2510, %v3054
        %v3063 = vsub.f32 %v2511, %v3055
        %v3064 = vsub.f32 %v2512, %v3056
        %v3065 = vsub.f32 %v2513, %v3057
        %v3066 = vmul.f32 %v3058, 1.442695
        %v3067 = vpow.pop %v3066
        %v3068 = vmul.f32 %v3059, 1.442695
        %v3069 = vpow.pop %v3068
        %v3070 = vmul.f32 %v3060, 1.442695
        %v3071 = vpow.pop %v3070
        %v3072 = vmul.f32 %v3061, 1.442695
        %v3073 = vpow.pop %v3072
        %v3074 = vmul.f32 %v3062, 1.442695
        %v3075 = vpow.pop %v3074
        %v3076 = vmul.f32 %v3063, 1.442695
        %v3077 = vpow.pop %v3076
        %v3078 = vmul.f32 %v3064, 1.442695
        %v3079 = vpow.pop %v3078
        %v3080 = vmul.f32 %v3065, 1.442695
        %v3081 = vpow.pop %v3080
        %v3082 = vsub.f32 %v3004, %v3050
        %v3083 = vsub.f32 %v3007, %v3051
        %v3084 = vsub.f32 %v3012, %v3052
        %v3085 = vsub.f32 %v3015, %v3053
        %v3086 = vsub.f32 %v3020, %v3054
        %v3087 = vsub.f32 %v3023, %v3055
        %v3088 = vsub.f32 %v3028, %v3056
        %v3089 = vsub.f32 %v3031, %v3057
        %v3090 = vmul.f32 %v3082, 1.442695
        %v3091 = vpow.pop %v3090
        %v3092 = vmul.f32 %v3083, 1.442695
        %v3093 = vpow.pop %v3092
        %v3094 = vmul.f32 %v3084, 1.442695
        %v3095 = vpow.pop %v3094
        %v3096 = vmul.f32 %v3085, 1.442695
        %v3097 = vpow.pop %v3096
        %v3098 = vmul.f32 %v3086, 1.442695
        %v3099 = vpow.pop %v3098
        %v3100 = vmul.f32 %v3087, 1.442695
        %v3101 = vpow.pop %v3100
        %v3102 = vmul.f32 %v3088, 1.442695
        %v3103 = vpow.pop %v3102
        %v3104 = vmul.f32 %v3089, 1.442695
        %v3105 = vpow.pop %v3104
        %v3106 = vmul.f32 %v3067, %v2586
        %v3107 = vmul.f32 %v3069, %v2587
        %v3108 = vmul.f32 %v3071, %v2588
        %v3109 = vmul.f32 %v3073, %v2589
        %v3110 = vmul.f32 %v3075, %v2590
        %v3111 = vmul.f32 %v3077, %v2591
        %v3112 = vmul.f32 %v3079, %v2592
        %v3113 = vmul.f32 %v3081, %v2593
        %3114 = vadd.xlane.f32.xlu0 %v3091
        %v3115 = vpop.xlane.xlu0 %3114
        %3116 = vadd.xlane.f32.xlu0 %v3093
        %v3117 = vpop.xlane.xlu0 %3116
        %3118 = vadd.xlane.f32.xlu0 %v3095
        %v3119 = vpop.xlane.xlu0 %3118
        %3120 = vadd.xlane.f32.xlu0 %v3097
        %v3121 = vpop.xlane.xlu0 %3120
        %3122 = vadd.xlane.f32.xlu0 %v3099
        %v3123 = vpop.xlane.xlu0 %3122
        %3124 = vadd.xlane.f32.xlu0 %v3101
        %v3125 = vpop.xlane.xlu0 %3124
        %3126 = vadd.xlane.f32.xlu0 %v3103
        %v3127 = vpop.xlane.xlu0 %3126
        %3128 = vadd.xlane.f32.xlu0 %v3105
        %v3129 = vpop.xlane.xlu0 %3128
        %v3130 = vadd.f32 %v3106, %v3115
        %v3131 = vadd.f32 %v3107, %v3117
        %v3132 = vadd.f32 %v3108, %v3119
        %v3133 = vadd.f32 %v3109, %v3121
        %v3134 = vadd.f32 %v3110, %v3123
        %v3135 = vadd.f32 %v3111, %v3125
        %v3136 = vadd.f32 %v3112, %v3127
        %v3137 = vadd.f32 %v3113, %v3129
        %v3138 = vmul.f32 %v3067, %v2663
        %v3139 = vmul.f32 %v3069, %v2664
        %v3140 = vmul.f32 %v3071, %v2665
        %v3141 = vmul.f32 %v3073, %v2666
        %v3142 = vmul.f32 %v3075, %v2667
        %v3143 = vmul.f32 %v3077, %v2668
        %v3144 = vmul.f32 %v3079, %v2669
        %v3145 = vmul.f32 %v3081, %v2670
        %v3146 = vpack.c.bf16 %v3093, %v3091
        %v3147 = vpack.c.bf16 %v3097, %v3095
        %v3148 = vpack.c.bf16 %v3101, %v3099
        %v3149 = vpack.c.bf16 %v3105, %v3103
        %3150 = vmatprep.subr.bf16.mxu0 0
        %3151 = vmatpush1.bf16.msra.mxu0 %v2937
        %3152 = vmatprep.subr.bf16.mxu0 0
        %3153 = vmatpush1.bf16.msra.mxu0 %v2938
        %3154 = vmatprep.subr.bf16.mxu0 0
        %3155 = vmatpush1.bf16.msra.mxu0 %v2939
        %3156 = vmatprep.subr.bf16.mxu0 0
        %3157 = vmatpush1.bf16.msra.mxu0 %v2940
        %3158 = vmatprep.subr.bf16.mxu0 0
        %3159 = vmatpush1.bf16.msra.mxu0 %v2941
        %3160 = vmatprep.subr.bf16.mxu0 0
        %3161 = vmatpush1.bf16.msra.mxu0 %v2942
        %3162 = vmatprep.subr.bf16.mxu0 0
        %3163 = vmatpush1.bf16.msra.mxu0 %v2943
        %3164 = vmatprep.subr.bf16.mxu0 0
        %3165 = vmatpush1.bf16.msra.mxu0 %v2944
        %3166 = vmatprep.subr.bf16.mxu0 0
        %3167 = vmatpush1.bf16.msra.mxu0 0
        %3168 = vmatprep.subr.bf16.mxu0 0
        %3169 = vmatpush1.bf16.msra.mxu0 0
        %3170 = vmatprep.subr.bf16.mxu0 0
        %3171 = vmatpush1.bf16.msra.mxu0 0
        %3172 = vmatprep.subr.bf16.mxu0 0
        %3173 = vmatpush1.bf16.msra.mxu0 0
        %3174 = vmatprep.subr.bf16.mxu0 0
        %3175 = vmatpush1.bf16.msra.mxu0 0
        %3176 = vmatprep.subr.bf16.mxu0 0
        %3177 = vmatpush1.bf16.msra.mxu0 0
        %3178 = vmatprep.subr.bf16.mxu0 0
        %3179 = vmatpush1.bf16.msra.mxu0 0
        %3180 = vmatprep.subr.bf16.mxu0 0
        %3181 = vmatpush1.bf16.msra.mxu0 0
        %3182 = vmatprep.mubr.bf16.mxu0 0
        %3183 = vmatmul.mubr.bf16.gmra.mrb[0].mxu0 %v3146
        %v3184 = vpop.f32.mrb[0].mxu0
        %v3185 = vadd.f32 0.0, %v3184
        %v3186 = vpop.f32.mrb[0].mxu0
        %v3187 = vpop.f32.mrb[0].mxu0
        %v3188 = vadd.f32 0.0, %v3187
        %v3189 = vpop.f32.mrb[0].mxu0
        %3190 = vmatprep.mubr.bf16.mxu0 0
        %3191 = vmatmul.mubr.bf16.gmra.mrb[0].mxu0 %v3147
        %v3192 = vpop.f32.mrb[0].mxu0
        %v3193 = vadd.f32 0.0, %v3192
        %v3194 = vpop.f32.mrb[0].mxu0
        %v3195 = vpop.f32.mrb[0].mxu0
        %v3196 = vadd.f32 0.0, %v3195
        %v3197 = vpop.f32.mrb[0].mxu0
        %3198 = vmatprep.mubr.bf16.mxu0 0
        %3199 = vmatmul.mubr.bf16.gmra.mrb[0].mxu0 %v3148
        %v3200 = vpop.f32.mrb[0].mxu0
        %v3201 = vadd.f32 0.0, %v3200
        %v3202 = vpop.f32.mrb[0].mxu0
        %v3203 = vpop.f32.mrb[0].mxu0
        %v3204 = vadd.f32 0.0, %v3203
        %v3205 = vpop.f32.mrb[0].mxu0
        %3206 = vmatprep.mubr.bf16.mxu0 0
        %3207 = vmatmul.mubr.bf16.gmra.mrb[0].mxu0 %v3149
        %v3208 = vpop.f32.mrb[0].mxu0
        %v3209 = vadd.f32 0.0, %v3208
        %v3210 = vpop.f32.mrb[0].mxu0
        %v3211 = vpop.f32.mrb[0].mxu0
        %v3212 = vadd.f32 0.0, %v3211
        %v3213 = vpop.f32.mrb[0].mxu0
        %3214 = vdwg.mxu0
        %v3215 = vadd.f32 %v3138, %v3185
        %v3216 = vadd.f32 %v3139, %v3188
        %v3217 = vadd.f32 %v3140, %v3193
        %v3218 = vadd.f32 %v3141, %v3196
        %v3219 = vadd.f32 %v3142, %v3201
        %v3220 = vadd.f32 %v3143, %v3204
        %v3221 = vadd.f32 %v3144, %v3209
        %v3222 = vadd.f32 %v3145, %v3212
        %v3223 = vrcp.pop %v3130
        %v3224 = vrcp.pop %v3131
        %v3225 = vrcp.pop %v3132
        %v3226 = vrcp.pop %v3133
        %v3227 = vrcp.pop %v3134
        %v3228 = vrcp.pop %v3135
        %v3229 = vrcp.pop %v3136
        %v3230 = vrcp.pop %v3137
        %v3231 = vmul.f32 %v3215, %v3223
        %v3232 = vmul.f32 %v3216, %v3224
        %v3233 = vmul.f32 %v3217, %v3225
        %v3234 = vmul.f32 %v3218, %v3226
        %v3235 = vmul.f32 %v3219, %v3227
        %v3236 = vmul.f32 %v3220, %v3228
        %v3237 = vmul.f32 %v3221, %v3229
        %v3238 = vmul.f32 %v3222, %v3230
        %v3239 = vpack.c.bf16 %v3232, %v3231
        %v3240 = vpack.c.bf16 %v3234, %v3233
        %v3241 = vpack.c.bf16 %v3236, %v3235
        %v3242 = vpack.c.bf16 %v3238, %v3237
        %v3243 = vld [vmem:[%s731] sm:$0xf]
        %v3244 = vld [vmem:[%s731 + $0x4] sm:$0xf]
        %v3245 = vld [vmem:[%s731 + $0x8] sm:$0xf]
        %v3246 = vld [vmem:[%s731 + $0xc] sm:$0xf]
        %v3247 = vld [vmem:[%s731 + $0x10] sm:$0xf]
        %v3248 = vld [vmem:[%s731 + $0x14] sm:$0xf]
        %v3249 = vld [vmem:[%s731 + $0x18] sm:$0xf]
        %v3250 = vld [vmem:[%s731 + $0x1c] sm:$0xf]
        %v3251 = vld [vmem:[%s734] sm:$0x1]
        %v3253 = vlaneseq
        %v3254 = vshrl.u32 %v3253, 7
        %v3255 = vsub.s32 0, %v3254
        %v3256 = vrot.slane %v3251, %v3255
        %v3266 = vunpack.c.l.b16 %v3243
        %v3267 = vunpack.c.l.b16 %v3244
        %v3268 = vunpack.c.l.b16 %v3245
        %v3269 = vunpack.c.l.b16 %v3246
        %v3270 = vunpack.c.l.b16 %v3247
        %v3271 = vunpack.c.l.b16 %v3248
        %v3272 = vunpack.c.l.b16 %v3249
        %v3273 = vunpack.c.l.b16 %v3250
        %v3274 = vpack.c.b16 %v3267, %v3266
        %v3275 = vpack.c.b16 %v3269, %v3268
        %v3276 = vpack.c.b16 %v3271, %v3270
        %v3277 = vpack.c.b16 %v3273, %v3272
        %v3283 = vsel %vm1807, %v3239, 0
        %v3286 = vsel %vm1807, %v3240, 0
        %v3289 = vsel %vm1807, %v3241, 0
        %v3292 = vsel %vm1807, %v3242, 0
        %3294 = vmatprep.subr.bf16.mxu0 0
        %3295 = vmatpush1.bf16.msra.mxu0 %v3274
        %3296 = vmatprep.subr.bf16.mxu0 0
        %3297 = vmatpush1.bf16.msra.mxu0 %v3275
        %3298 = vmatprep.subr.bf16.mxu0 0
        %3299 = vmatpush1.bf16.msra.mxu0 %v3276
        %3300 = vmatprep.subr.bf16.mxu0 0
        %3301 = vmatpush1.bf16.msra.mxu0 %v3277
        %3302 = vmatprep.subr.bf16.mxu0 0
        %3303 = vmatpush1.bf16.msra.mxu0 0
        %3304 = vmatprep.subr.bf16.mxu0 0
        %3305 = vmatpush1.bf16.msra.mxu0 0
        %3306 = vmatprep.subr.bf16.mxu0 0
        %3307 = vmatpush1.bf16.msra.mxu0 0
        %3308 = vmatprep.subr.bf16.mxu0 0
        %3309 = vmatpush1.bf16.msra.mxu0 0
        %3310 = vmatprep.subr.bf16.mxu0 0
        %3311 = vmatpush1.bf16.msra.mxu0 0
        %3312 = vmatprep.subr.bf16.mxu0 0
        %3313 = vmatpush1.bf16.msra.mxu0 0
        %3314 = vmatprep.subr.bf16.mxu0 0
        %3315 = vmatpush1.bf16.msra.mxu0 0
        %3316 = vmatprep.subr.bf16.mxu0 0
        %3317 = vmatpush1.bf16.msra.mxu0 0
        %3318 = vmatprep.subr.bf16.mxu0 0
        %3319 = vmatpush1.bf16.msra.mxu0 0
        %3320 = vmatprep.subr.bf16.mxu0 0
        %3321 = vmatpush1.bf16.msra.mxu0 0
        %3322 = vmatprep.subr.bf16.mxu0 0
        %3323 = vmatpush1.bf16.msra.mxu0 0
        %3324 = vmatprep.subr.bf16.mxu0 0
        %3325 = vmatpush1.bf16.msra.mxu0 0
        %3326 = vmatprep.mubr.bf16.mxu0 0
        %3327 = vmatmul.mubr.bf16.gmra.mrb[0].mxu0 %v3283
        %v3328 = vpop.f32.mrb[0].mxu0
        %v3329 = vadd.f32 %v3256, %v3328
        %v3330 = vpop.f32.mrb[0].mxu0
        %v3331 = vpop.f32.mrb[0].mxu0
        %v3332 = vadd.f32 %v3256, %v3331
        %v3333 = vpop.f32.mrb[0].mxu0
        %3334 = vmatprep.mubr.bf16.mxu0 0
        %3335 = vmatmul.mubr.bf16.gmra.mrb[0].mxu0 %v3286
        %v3336 = vpop.f32.mrb[0].mxu0
        %v3337 = vadd.f32 %v3256, %v3336
        %v3338 = vpop.f32.mrb[0].mxu0
        %v3339 = vpop.f32.mrb[0].mxu0
        %v3340 = vadd.f32 %v3256, %v3339
        %v3341 = vpop.f32.mrb[0].mxu0
        %3342 = vmatprep.mubr.bf16.mxu0 0
        %3343 = vmatmul.mubr.bf16.gmra.mrb[0].mxu0 %v3289
        %v3344 = vpop.f32.mrb[0].mxu0
        %v3345 = vadd.f32 %v3256, %v3344
        %v3346 = vpop.f32.mrb[0].mxu0
        %v3347 = vpop.f32.mrb[0].mxu0
        %v3348 = vadd.f32 %v3256, %v3347
        %v3349 = vpop.f32.mrb[0].mxu0
        %3350 = vmatprep.mubr.bf16.mxu0 0
        %3351 = vmatmul.mubr.bf16.gmra.mrb[0].mxu0 %v3292
        %v3352 = vpop.f32.mrb[0].mxu0
        %v3353 = vadd.f32 %v3256, %v3352
        %v3354 = vpop.f32.mrb[0].mxu0
        %v3355 = vpop.f32.mrb[0].mxu0
        %v3356 = vadd.f32 %v3256, %v3355
        %v3357 = vpop.f32.mrb[0].mxu0
        %3358 = vdwg.mxu0
        %v3359 = vadd.f32 %v1799, %v3329
        %v3360 = vadd.f32 %v1800, %v3332
        %v3361 = vadd.f32 %v1801, %v3337
        %v3362 = vadd.f32 %v1802, %v3340
        %v3363 = vadd.f32 %v1803, %v3345
        %v3364 = vadd.f32 %v1804, %v3348
        %v3365 = vadd.f32 %v1805, %v3353
        %v3366 = vadd.f32 %v1806, %v3356
        %v3367 = vsel %vm1807, %v3359, 0.0
        %3368 = vadd.xlane.f32.xlu0 %v3367
        %v3369 = vpop.xlane.xlu0 %3368
        %v3370 = vsel %vm1807, %v3360, 0.0
        %3371 = vadd.xlane.f32.xlu0 %v3370
        %v3372 = vpop.xlane.xlu0 %3371
        %v3373 = vsel %vm1807, %v3361, 0.0
        %3374 = vadd.xlane.f32.xlu0 %v3373
        %v3375 = vpop.xlane.xlu0 %3374
        %v3376 = vsel %vm1807, %v3362, 0.0
        %3377 = vadd.xlane.f32.xlu0 %v3376
        %v3378 = vpop.xlane.xlu0 %3377
        %v3379 = vsel %vm1807, %v3363, 0.0
        %3380 = vadd.xlane.f32.xlu0 %v3379
        %v3381 = vpop.xlane.xlu0 %3380
        %v3382 = vsel %vm1807, %v3364, 0.0
        %3383 = vadd.xlane.f32.xlu0 %v3382
        %v3384 = vpop.xlane.xlu0 %3383
        %v3385 = vsel %vm1807, %v3365, 0.0
        %3386 = vadd.xlane.f32.xlu0 %v3385
        %v3387 = vpop.xlane.xlu0 %3386
        %v3388 = vsel %vm1807, %v3366, 0.0
        %3389 = vadd.xlane.f32.xlu0 %v3388
        %v3390 = vpop.xlane.xlu0 %3389
        %v3391 = vmul.f32 %v3369, %v1832
        %v3392 = vmul.f32 %v3372, %v1832
        %v3393 = vmul.f32 %v3375, %v1832
        %v3394 = vmul.f32 %v3378, %v1832
        %v3395 = vmul.f32 %v3381, %v1832
        %v3396 = vmul.f32 %v3384, %v1832
        %v3397 = vmul.f32 %v3387, %v1832
        %v3398 = vmul.f32 %v3390, %v1832
        %v3399 = vsub.f32 %v3359, %v3391
        %v3400 = vsub.f32 %v3360, %v3392
        %v3401 = vsub.f32 %v3361, %v3393
        %v3402 = vsub.f32 %v3362, %v3394
        %v3403 = vsub.f32 %v3363, %v3395
        %v3404 = vsub.f32 %v3364, %v3396
        %v3405 = vsub.f32 %v3365, %v3397
        %v3406 = vsub.f32 %v3366, %v3398
        %v3407 = vmul.f32 %v3399, %v3399
        %v3408 = vmul.f32 %v3400, %v3400
        %v3409 = vmul.f32 %v3401, %v3401
        %v3410 = vmul.f32 %v3402, %v3402
        %v3411 = vmul.f32 %v3403, %v3403
        %v3412 = vmul.f32 %v3404, %v3404
        %v3413 = vmul.f32 %v3405, %v3405
        %v3414 = vmul.f32 %v3406, %v3406
        %v3415 = vsel %vm1807, %v3407, 0.0
        %3416 = vadd.xlane.f32.xlu0 %v3415
        %v3417 = vpop.xlane.xlu0 %3416
        %v3418 = vsel %vm1807, %v3408, 0.0
        %3419 = vadd.xlane.f32.xlu0 %v3418
        %v3420 = vpop.xlane.xlu0 %3419
        %v3421 = vsel %vm1807, %v3409, 0.0
        %3422 = vadd.xlane.f32.xlu0 %v3421
        %v3423 = vpop.xlane.xlu0 %3422
        %v3424 = vsel %vm1807, %v3410, 0.0
        %3425 = vadd.xlane.f32.xlu0 %v3424
        %v3426 = vpop.xlane.xlu0 %3425
        %v3427 = vsel %vm1807, %v3411, 0.0
        %3428 = vadd.xlane.f32.xlu0 %v3427
        %v3429 = vpop.xlane.xlu0 %3428
        %v3430 = vsel %vm1807, %v3412, 0.0
        %3431 = vadd.xlane.f32.xlu0 %v3430
        %v3432 = vpop.xlane.xlu0 %3431
        %v3433 = vsel %vm1807, %v3413, 0.0
        %3434 = vadd.xlane.f32.xlu0 %v3433
        %v3435 = vpop.xlane.xlu0 %3434
        %v3436 = vsel %vm1807, %v3414, 0.0
        %3437 = vadd.xlane.f32.xlu0 %v3436
        %v3438 = vpop.xlane.xlu0 %3437
        %v3439 = vmul.f32 %v3417, %v1832
        %v3440 = vmul.f32 %v3420, %v1832
        %v3441 = vmul.f32 %v3423, %v1832
        %v3442 = vmul.f32 %v3426, %v1832
        %v3443 = vmul.f32 %v3429, %v1832
        %v3444 = vmul.f32 %v3432, %v1832
        %v3445 = vmul.f32 %v3435, %v1832
        %v3446 = vmul.f32 %v3438, %v1832
        %v3447 = vadd.f32 %v3439, 1e-05
        %v3448 = vadd.f32 %v3440, 1e-05
        %v3449 = vadd.f32 %v3441, 1e-05
        %v3450 = vadd.f32 %v3442, 1e-05
        %v3451 = vadd.f32 %v3443, 1e-05
        %v3452 = vadd.f32 %v3444, 1e-05
        %v3453 = vadd.f32 %v3445, 1e-05
        %v3454 = vadd.f32 %v3446, 1e-05
        %v3455 = vrsqrt.pop %v3447
        %v3456 = vrsqrt.pop %v3448
        %v3457 = vrsqrt.pop %v3449
        %v3458 = vrsqrt.pop %v3450
        %v3459 = vrsqrt.pop %v3451
        %v3460 = vrsqrt.pop %v3452
        %v3461 = vrsqrt.pop %v3453
        %v3462 = vrsqrt.pop %v3454
        %v3463 = vmul.f32 %v3399, %v3455
        %v3464 = vmul.f32 %v3400, %v3456
        %v3465 = vmul.f32 %v3401, %v3457
        %v3466 = vmul.f32 %v3402, %v3458
        %v3467 = vmul.f32 %v3403, %v3459
        %v3468 = vmul.f32 %v3404, %v3460
        %v3469 = vmul.f32 %v3405, %v3461
        %v3470 = vmul.f32 %v3406, %v3462
        %v3471 = vpack.c.bf16 %v3464, %v3463
        %v3472 = vpack.c.bf16 %v3466, %v3465
        %v3473 = vpack.c.bf16 %v3468, %v3467
        %v3474 = vpack.c.bf16 %v3470, %v3469
        %v3475 = vld [vmem:[%s739] sm:$0xff]
        %v3476 = vld [vmem:[%s739 + $0x8] sm:$0xff]
        %v3477 = vld [vmem:[%s739 + $0x10] sm:$0xff]
        %v3478 = vld [vmem:[%s739 + $0x18] sm:$0xff]
        %v3479 = vld [vmem:[%s739 + $0x20] sm:$0xff]
        %v3480 = vld [vmem:[%s739 + $0x28] sm:$0xff]
        %v3481 = vld [vmem:[%s739 + $0x30] sm:$0xff]
        %v3482 = vld [vmem:[%s739 + $0x38] sm:$0xff]
        %v3483 = vld [vmem:[%s743] sm:$0x3]
        %v3485 = vlaneseq
        %v3486 = vshrl.u32 %v3485, 7
        %v3487 = vsub.s32 0, %v3486
        %v3488 = vrot.slane %v3483, %v3487
        %v3489 = vlaneseq
        %v3490 = vshrl.u32 %v3489, 7
        %v3491 = vsub.s32 1, %v3490
        %v3492 = vrot.slane %v3483, %v3491
        %v3503 = vunpack.c.l.b16 %v3475
        %v3504 = vunpack.c.h.b16 %v3475
        %v3505 = vunpack.c.l.b16 %v3476
        %v3506 = vunpack.c.h.b16 %v3476
        %v3507 = vunpack.c.l.b16 %v3477
        %v3508 = vunpack.c.h.b16 %v3477
        %v3509 = vunpack.c.l.b16 %v3478
        %v3510 = vunpack.c.h.b16 %v3478
        %v3511 = vunpack.c.l.b16 %v3479
        %v3512 = vunpack.c.h.b16 %v3479
        %v3513 = vunpack.c.l.b16 %v3480
        %v3514 = vunpack.c.h.b16 %v3480
        %v3515 = vunpack.c.l.b16 %v3481
        %v3516 = vunpack.c.h.b16 %v3481
        %v3517 = vunpack.c.l.b16 %v3482
        %v3518 = vunpack.c.h.b16 %v3482
        %v3519 = vpack.c.b16 %v3505, %v3503
        %v3520 = vpack.c.b16 %v3506, %v3504
        %v3521 = vpack.c.b16 %v3509, %v3507
        %v3522 = vpack.c.b16 %v3510, %v3508
        %v3523 = vpack.c.b16 %v3513, %v3511
        %v3524 = vpack.c.b16 %v3514, %v3512
        %v3525 = vpack.c.b16 %v3517, %v3515
        %v3526 = vpack.c.b16 %v3518, %v3516
        %v3536 = vsel %vm1807, %v3471, 0
        %v3539 = vsel %vm1807, %v3472, 0
        %v3542 = vsel %vm1807, %v3473, 0
        %v3545 = vsel %vm1807, %v3474, 0
        %3547 = vmatprep.subr.bf16.mxu0 %v3520
        %3548 = vmatpush1.bf16.msra.mxu0 %v3519
        %3549 = vmatprep.subr.bf16.mxu0 %v3522
        %3550 = vmatpush1.bf16.msra.mxu0 %v3521
        %3551 = vmatprep.subr.bf16.mxu0 %v3524
        %3552 = vmatpush1.bf16.msra.mxu0 %v3523
        %3553 = vmatprep.subr.bf16.mxu0 %v3526
        %3554 = vmatpush1.bf16.msra.mxu0 %v3525
        %3555 = vmatprep.subr.bf16.mxu0 0
        %3556 = vmatpush1.bf16.msra.mxu0 0
        %3557 = vmatprep.subr.bf16.mxu0 0
        %3558 = vmatpush1.bf16.msra.mxu0 0
        %3559 = vmatprep.subr.bf16.mxu0 0
        %3560 = vmatpush1.bf16.msra.mxu0 0
        %3561 = vmatprep.subr.bf16.mxu0 0
        %3562 = vmatpush1.bf16.msra.mxu0 0
        %3563 = vmatprep.subr.bf16.mxu0 0
        %3564 = vmatpush1.bf16.msra.mxu0 0
        %3565 = vmatprep.subr.bf16.mxu0 0
        %3566 = vmatpush1.bf16.msra.mxu0 0
        %3567 = vmatprep.subr.bf16.mxu0 0
        %3568 = vmatpush1.bf16.msra.mxu0 0
        %3569 = vmatprep.subr.bf16.mxu0 0
        %3570 = vmatpush1.bf16.msra.mxu0 0
        %3571 = vmatprep.subr.bf16.mxu0 0
        %3572 = vmatpush1.bf16.msra.mxu0 0
        %3573 = vmatprep.subr.bf16.mxu0 0
        %3574 = vmatpush1.bf16.msra.mxu0 0
        %3575 = vmatprep.subr.bf16.mxu0 0
        %3576 = vmatpush1.bf16.msra.mxu0 0
        %3577 = vmatprep.subr.bf16.mxu0 0
        %3578 = vmatpush1.bf16.msra.mxu0 0
        %3579 = vmatprep.mubr.bf16.mxu0 0
        %3580 = vmatmul.mubr.bf16.gmra.mrb[0].mxu0 %v3536
        %v3581 = vpop.f32.mrb[0].mxu0
        %v3582 = vadd.f32 %v3488, %v3581
        %v3583 = vpop.f32.mrb[0].mxu0
        %v3584 = vadd.f32 %v3492, %v3583
        %v3585 = vpop.f32.mrb[0].mxu0
        %v3586 = vadd.f32 %v3488, %v3585
        %v3587 = vpop.f32.mrb[0].mxu0
        %v3588 = vadd.f32 %v3492, %v3587
        %3589 = vmatprep.mubr.bf16.mxu0 0
        %3590 = vmatmul.mubr.bf16.gmra.mrb[0].mxu0 %v3539
        %v3591 = vpop.f32.mrb[0].mxu0
        %v3592 = vadd.f32 %v3488, %v3591
        %v3593 = vpop.f32.mrb[0].mxu0
        %v3594 = vadd.f32 %v3492, %v3593
        %v3595 = vpop.f32.mrb[0].mxu0
        %v3596 = vadd.f32 %v3488, %v3595
        %v3597 = vpop.f32.mrb[0].mxu0
        %v3598 = vadd.f32 %v3492, %v3597
        %3599 = vmatprep.mubr.bf16.mxu0 0
        %3600 = vmatmul.mubr.bf16.gmra.mrb[0].mxu0 %v3542
        %v3601 = vpop.f32.mrb[0].mxu0
        %v3602 = vadd.f32 %v3488, %v3601
        %v3603 = vpop.f32.mrb[0].mxu0
        %v3604 = vadd.f32 %v3492, %v3603
        %v3605 = vpop.f32.mrb[0].mxu0
        %v3606 = vadd.f32 %v3488, %v3605
        %v3607 = vpop.f32.mrb[0].mxu0
        %v3608 = vadd.f32 %v3492, %v3607
        %3609 = vmatprep.mubr.bf16.mxu0 0
        %3610 = vmatmul.mubr.bf16.gmra.mrb[0].mxu0 %v3545
        %v3611 = vpop.f32.mrb[0].mxu0
        %v3612 = vadd.f32 %v3488, %v3611
        %v3613 = vpop.f32.mrb[0].mxu0
        %v3614 = vadd.f32 %v3492, %v3613
        %v3615 = vpop.f32.mrb[0].mxu0
        %v3616 = vadd.f32 %v3488, %v3615
        %v3617 = vpop.f32.mrb[0].mxu0
        %v3618 = vadd.f32 %v3492, %v3617
        %3619 = vdwg.mxu0
        %v3620 = vmul.f32 %v3582, 0.5
        %v3621 = vmul.f32 %v3584, 0.5
        %v3622 = vmul.f32 %v3586, 0.5
        %v3623 = vmul.f32 %v3588, 0.5
        %v3624 = vmul.f32 %v3592, 0.5
        %v3625 = vmul.f32 %v3594, 0.5
        %v3626 = vmul.f32 %v3596, 0.5
        %v3627 = vmul.f32 %v3598, 0.5
        %v3628 = vmul.f32 %v3602, 0.5
        %v3629 = vmul.f32 %v3604, 0.5
        %v3630 = vmul.f32 %v3606, 0.5
        %v3631 = vmul.f32 %v3608, 0.5
        %v3632 = vmul.f32 %v3612, 0.5
        %v3633 = vmul.f32 %v3614, 0.5
        %v3634 = vmul.f32 %v3616, 0.5
        %v3635 = vmul.f32 %v3618, 0.5
        %v3636 = vmul.f32 %v3582, 0.70710677
        %v3637 = vmul.f32 %v3584, 0.70710677
        %v3638 = vmul.f32 %v3586, 0.70710677
        %v3639 = vmul.f32 %v3588, 0.70710677
        %v3640 = vmul.f32 %v3592, 0.70710677
        %v3641 = vmul.f32 %v3594, 0.70710677
        %v3642 = vmul.f32 %v3596, 0.70710677
        %v3643 = vmul.f32 %v3598, 0.70710677
        %v3644 = vmul.f32 %v3602, 0.70710677
        %v3645 = vmul.f32 %v3604, 0.70710677
        %v3646 = vmul.f32 %v3606, 0.70710677
        %v3647 = vmul.f32 %v3608, 0.70710677
        %v3648 = vmul.f32 %v3612, 0.70710677
        %v3649 = vmul.f32 %v3614, 0.70710677
        %v3650 = vmul.f32 %v3616, 0.70710677
        %v3651 = vmul.f32 %v3618, 0.70710677
        %v3652 = vand.u32 2147483647, %v3636
        %v3653 = vand.u32 2147483647, %v3637
        %v3654 = vand.u32 2147483647, %v3638
        %v3655 = vand.u32 2147483647, %v3639
        %v3656 = vand.u32 2147483647, %v3640
        %v3657 = vand.u32 2147483647, %v3641
        %v3658 = vand.u32 2147483647, %v3642
        %v3659 = vand.u32 2147483647, %v3643
        %v3660 = vand.u32 2147483647, %v3644
        %v3661 = vand.u32 2147483647, %v3645
        %v3662 = vand.u32 2147483647, %v3646
        %v3663 = vand.u32 2147483647, %v3647
        %v3664 = vand.u32 2147483647, %v3648
        %v3665 = vand.u32 2147483647, %v3649
        %v3666 = vand.u32 2147483647, %v3650
        %v3667 = vand.u32 2147483647, %v3651
        %v3668 = vmul.f32 %v3652, 0.3275911
        %v3669 = vmul.f32 %v3653, 0.3275911
        %v3670 = vmul.f32 %v3654, 0.3275911
        %v3671 = vmul.f32 %v3655, 0.3275911
        %v3672 = vmul.f32 %v3656, 0.3275911
        %v3673 = vmul.f32 %v3657, 0.3275911
        %v3674 = vmul.f32 %v3658, 0.3275911
        %v3675 = vmul.f32 %v3659, 0.3275911
        %v3676 = vmul.f32 %v3660, 0.3275911
        %v3677 = vmul.f32 %v3661, 0.3275911
        %v3678 = vmul.f32 %v3662, 0.3275911
        %v3679 = vmul.f32 %v3663, 0.3275911
        %v3680 = vmul.f32 %v3664, 0.3275911
        %v3681 = vmul.f32 %v3665, 0.3275911
        %v3682 = vmul.f32 %v3666, 0.3275911
        %v3683 = vmul.f32 %v3667, 0.3275911
        %v3684 = vadd.f32 %v3668, 1.0
        %v3685 = vadd.f32 %v3669, 1.0
        %v3686 = vadd.f32 %v3670, 1.0
        %v3687 = vadd.f32 %v3671, 1.0
        %v3688 = vadd.f32 %v3672, 1.0
        %v3689 = vadd.f32 %v3673, 1.0
        %v3690 = vadd.f32 %v3674, 1.0
        %v3691 = vadd.f32 %v3675, 1.0
        %v3692 = vadd.f32 %v3676, 1.0
        %v3693 = vadd.f32 %v3677, 1.0
        %v3694 = vadd.f32 %v3678, 1.0
        %v3695 = vadd.f32 %v3679, 1.0
        %v3696 = vadd.f32 %v3680, 1.0
        %v3697 = vadd.f32 %v3681, 1.0
        %v3698 = vadd.f32 %v3682, 1.0
        %v3699 = vadd.f32 %v3683, 1.0
        %v3700 = vrcp.pop %v3684
        %v3701 = vrcp.pop %v3685
        %v3702 = vrcp.pop %v3686
        %v3703 = vrcp.pop %v3687
        %v3704 = vrcp.pop %v3688
        %v3705 = vrcp.pop %v3689
        %v3706 = vrcp.pop %v3690
        %v3707 = vrcp.pop %v3691
        %v3708 = vrcp.pop %v3692
        %v3709 = vrcp.pop %v3693
        %v3710 = vrcp.pop %v3694
        %v3711 = vrcp.pop %v3695
        %v3712 = vrcp.pop %v3696
        %v3713 = vrcp.pop %v3697
        %v3714 = vrcp.pop %v3698
        %v3715 = vrcp.pop %v3699
        %v3716 = vmul.f32 %v3684, %v3700
        %v3717 = vmul.f32 %v3685, %v3701
        %v3718 = vmul.f32 %v3686, %v3702
        %v3719 = vmul.f32 %v3687, %v3703
        %v3720 = vmul.f32 %v3688, %v3704
        %v3721 = vmul.f32 %v3689, %v3705
        %v3722 = vmul.f32 %v3690, %v3706
        %v3723 = vmul.f32 %v3691, %v3707
        %v3724 = vmul.f32 %v3692, %v3708
        %v3725 = vmul.f32 %v3693, %v3709
        %v3726 = vmul.f32 %v3694, %v3710
        %v3727 = vmul.f32 %v3695, %v3711
        %v3728 = vmul.f32 %v3696, %v3712
        %v3729 = vmul.f32 %v3697, %v3713
        %v3730 = vmul.f32 %v3698, %v3714
        %v3731 = vmul.f32 %v3699, %v3715
        %v3732 = vsub.f32 2.0, %v3716
        %v3733 = vsub.f32 2.0, %v3717
        %v3734 = vsub.f32 2.0, %v3718
        %v3735 = vsub.f32 2.0, %v3719
        %v3736 = vsub.f32 2.0, %v3720
        %v3737 = vsub.f32 2.0, %v3721
        %v3738 = vsub.f32 2.0, %v3722
        %v3739 = vsub.f32 2.0, %v3723
        %v3740 = vsub.f32 2.0, %v3724
        %v3741 = vsub.f32 2.0, %v3725
        %v3742 = vsub.f32 2.0, %v3726
        %v3743 = vsub.f32 2.0, %v3727
        %v3744 = vsub.f32 2.0, %v3728
        %v3745 = vsub.f32 2.0, %v3729
        %v3746 = vsub.f32 2.0, %v3730
        %v3747 = vsub.f32 2.0, %v3731
        %v3748 = vmul.f32 %v3700, %v3732
        %v3749 = vmul.f32 %v3701, %v3733
        %v3750 = vmul.f32 %v3702, %v3734
        %v3751 = vmul.f32 %v3703, %v3735
        %v3752 = vmul.f32 %v3704, %v3736
        %v3753 = vmul.f32 %v3705, %v3737
        %v3754 = vmul.f32 %v3706, %v3738
        %v3755 = vmul.f32 %v3707, %v3739
        %v3756 = vmul.f32 %v3708, %v3740
        %v3757 = vmul.f32 %v3709, %v3741
        %v3758 = vmul.f32 %v3710, %v3742
        %v3759 = vmul.f32 %v3711, %v3743
        %v3760 = vmul.f32 %v3712, %v3744
        %v3761 = vmul.f32 %v3713, %v3745
        %v3762 = vmul.f32 %v3714, %v3746
        %v3763 = vmul.f32 %v3715, %v3747
        %v3764 = vmul.f32 %v3748, 1.0614054
        %v3765 = vmul.f32 %v3749, 1.0614054
        %v3766 = vmul.f32 %v3750, 1.0614054
        %v3767 = vmul.f32 %v3751, 1.0614054
        %v3768 = vmul.f32 %v3752, 1.0614054
        %v3769 = vmul.f32 %v3753, 1.0614054
        %v3770 = vmul.f32 %v3754, 1.0614054
        %v3771 = vmul.f32 %v3755, 1.0614054
        %v3772 = vmul.f32 %v3756, 1.0614054
        %v3773 = vmul.f32 %v3757, 1.0614054
        %v3774 = vmul.f32 %v3758, 1.0614054
        %v3775 = vmul.f32 %v3759, 1.0614054
        %v3776 = vmul.f32 %v3760, 1.0614054
        %v3777 = vmul.f32 %v3761, 1.0614054
        %v3778 = vmul.f32 %v3762, 1.0614054
        %v3779 = vmul.f32 %v3763, 1.0614054
        %v3780 = vadd.f32 %v3764, -1.4531521
        %v3781 = vadd.f32 %v3765, -1.4531521
        %v3782 = vadd.f32 %v3766, -1.4531521
        %v3783 = vadd.f32 %v3767, -1.4531521
        %v3784 = vadd.f32 %v3768, -1.4531521
        %v3785 = vadd.f32 %v3769, -1.4531521
        %v3786 = vadd.f32 %v3770, -1.4531521
        %v3787 = vadd.f32 %v3771, -1.4531521
        %v3788 = vadd.f32 %v3772, -1.4531521
        %v3789 = vadd.f32 %v3773, -1.4531521
        %v3790 = vadd.f32 %v3774, -1.4531521
        %v3791 = vadd.f32 %v3775, -1.4531521
        %v3792 = vadd.f32 %v3776, -1.4531521
        %v3793 = vadd.f32 %v3777, -1.4531521
        %v3794 = vadd.f32 %v3778, -1.4531521
        %v3795 = vadd.f32 %v3779, -1.4531521
        %v3796 = vmul.f32 %v3780, %v3748
        %v3797 = vmul.f32 %v3781, %v3749
        %v3798 = vmul.f32 %v3782, %v3750
        %v3799 = vmul.f32 %v3783, %v3751
        %v3800 = vmul.f32 %v3784, %v3752
        %v3801 = vmul.f32 %v3785, %v3753
        %v3802 = vmul.f32 %v3786, %v3754
        %v3803 = vmul.f32 %v3787, %v3755
        %v3804 = vmul.f32 %v3788, %v3756
        %v3805 = vmul.f32 %v3789, %v3757
        %v3806 = vmul.f32 %v3790, %v3758
        %v3807 = vmul.f32 %v3791, %v3759
        %v3808 = vmul.f32 %v3792, %v3760
        %v3809 = vmul.f32 %v3793, %v3761
        %v3810 = vmul.f32 %v3794, %v3762
        %v3811 = vmul.f32 %v3795, %v3763
        %v3812 = vadd.f32 %v3796, 1.4214138
        %v3813 = vadd.f32 %v3797, 1.4214138
        %v3814 = vadd.f32 %v3798, 1.4214138
        %v3815 = vadd.f32 %v3799, 1.4214138
        %v3816 = vadd.f32 %v3800, 1.4214138
        %v3817 = vadd.f32 %v3801, 1.4214138
        %v3818 = vadd.f32 %v3802, 1.4214138
        %v3819 = vadd.f32 %v3803, 1.4214138
        %v3820 = vadd.f32 %v3804, 1.4214138
        %v3821 = vadd.f32 %v3805, 1.4214138
        %v3822 = vadd.f32 %v3806, 1.4214138
        %v3823 = vadd.f32 %v3807, 1.4214138
        %v3824 = vadd.f32 %v3808, 1.4214138
        %v3825 = vadd.f32 %v3809, 1.4214138
        %v3826 = vadd.f32 %v3810, 1.4214138
        %v3827 = vadd.f32 %v3811, 1.4214138
        %v3828 = vmul.f32 %v3812, %v3748
        %v3829 = vmul.f32 %v3813, %v3749
        %v3830 = vmul.f32 %v3814, %v3750
        %v3831 = vmul.f32 %v3815, %v3751
        %v3832 = vmul.f32 %v3816, %v3752
        %v3833 = vmul.f32 %v3817, %v3753
        %v3834 = vmul.f32 %v3818, %v3754
        %v3835 = vmul.f32 %v3819, %v3755
        %v3836 = vmul.f32 %v3820, %v3756
        %v3837 = vmul.f32 %v3821, %v3757
        %v3838 = vmul.f32 %v3822, %v3758
        %v3839 = vmul.f32 %v3823, %v3759
        %v3840 = vmul.f32 %v3824, %v3760
        %v3841 = vmul.f32 %v3825, %v3761
        %v3842 = vmul.f32 %v3826, %v3762
        %v3843 = vmul.f32 %v3827, %v3763
        %v3844 = vadd.f32 %v3828, -0.28449672
        %v3845 = vadd.f32 %v3829, -0.28449672
        %v3846 = vadd.f32 %v3830, -0.28449672
        %v3847 = vadd.f32 %v3831, -0.28449672
        %v3848 = vadd.f32 %v3832, -0.28449672
        %v3849 = vadd.f32 %v3833, -0.28449672
        %v3850 = vadd.f32 %v3834, -0.28449672
        %v3851 = vadd.f32 %v3835, -0.28449672
        %v3852 = vadd.f32 %v3836, -0.28449672
        %v3853 = vadd.f32 %v3837, -0.28449672
        %v3854 = vadd.f32 %v3838, -0.28449672
        %v3855 = vadd.f32 %v3839, -0.28449672
        %v3856 = vadd.f32 %v3840, -0.28449672
        %v3857 = vadd.f32 %v3841, -0.28449672
        %v3858 = vadd.f32 %v3842, -0.28449672
        %v3859 = vadd.f32 %v3843, -0.28449672
        %v3860 = vmul.f32 %v3844, %v3748
        %v3861 = vmul.f32 %v3845, %v3749
        %v3862 = vmul.f32 %v3846, %v3750
        %v3863 = vmul.f32 %v3847, %v3751
        %v3864 = vmul.f32 %v3848, %v3752
        %v3865 = vmul.f32 %v3849, %v3753
        %v3866 = vmul.f32 %v3850, %v3754
        %v3867 = vmul.f32 %v3851, %v3755
        %v3868 = vmul.f32 %v3852, %v3756
        %v3869 = vmul.f32 %v3853, %v3757
        %v3870 = vmul.f32 %v3854, %v3758
        %v3871 = vmul.f32 %v3855, %v3759
        %v3872 = vmul.f32 %v3856, %v3760
        %v3873 = vmul.f32 %v3857, %v3761
        %v3874 = vmul.f32 %v3858, %v3762
        %v3875 = vmul.f32 %v3859, %v3763
        %v3876 = vadd.f32 %v3860, 0.2548296
        %v3877 = vadd.f32 %v3861, 0.2548296
        %v3878 = vadd.f32 %v3862, 0.2548296
        %v3879 = vadd.f32 %v3863, 0.2548296
        %v3880 = vadd.f32 %v3864, 0.2548296
        %v3881 = vadd.f32 %v3865, 0.2548296
        %v3882 = vadd.f32 %v3866, 0.2548296
        %v3883 = vadd.f32 %v3867, 0.2548296
        %v3884 = vadd.f32 %v3868, 0.2548296
        %v3885 = vadd.f32 %v3869, 0.2548296
        %v3886 = vadd.f32 %v3870, 0.2548296
        %v3887 = vadd.f32 %v3871, 0.2548296
        %v3888 = vadd.f32 %v3872, 0.2548296
        %v3889 = vadd.f32 %v3873, 0.2548296
        %v3890 = vadd.f32 %v3874, 0.2548296
        %v3891 = vadd.f32 %v3875, 0.2548296
        %v3892 = vmul.f32 %v3876, %v3748
        %v3893 = vmul.f32 %v3877, %v3749
        %v3894 = vmul.f32 %v3878, %v3750
        %v3895 = vmul.f32 %v3879, %v3751
        %v3896 = vmul.f32 %v3880, %v3752
        %v3897 = vmul.f32 %v3881, %v3753
        %v3898 = vmul.f32 %v3882, %v3754
        %v3899 = vmul.f32 %v3883, %v3755
        %v3900 = vmul.f32 %v3884, %v3756
        %v3901 = vmul.f32 %v3885, %v3757
        %v3902 = vmul.f32 %v3886, %v3758
        %v3903 = vmul.f32 %v3887, %v3759
        %v3904 = vmul.f32 %v3888, %v3760
        %v3905 = vmul.f32 %v3889, %v3761
        %v3906 = vmul.f32 %v3890, %v3762
        %v3907 = vmul.f32 %v3891, %v3763
        %v3908 = vsub.f32 0.0, %v3652
        %v3909 = vsub.f32 0.0, %v3653
        %v3910 = vsub.f32 0.0, %v3654
        %v3911 = vsub.f32 0.0, %v3655
        %v3912 = vsub.f32 0.0, %v3656
        %v3913 = vsub.f32 0.0, %v3657
        %v3914 = vsub.f32 0.0, %v3658
        %v3915 = vsub.f32 0.0, %v3659
        %v3916 = vsub.f32 0.0, %v3660
        %v3917 = vsub.f32 0.0, %v3661
        %v3918 = vsub.f32 0.0, %v3662
        %v3919 = vsub.f32 0.0, %v3663
        %v3920 = vsub.f32 0.0, %v3664
        %v3921 = vsub.f32 0.0, %v3665
        %v3922 = vsub.f32 0.0, %v3666
        %v3923 = vsub.f32 0.0, %v3667
        %v3924 = vmul.f32 %v3908, %v3652
        %v3925 = vmul.f32 %v3909, %v3653
        %v3926 = vmul.f32 %v3910, %v3654
        %v3927 = vmul.f32 %v3911, %v3655
        %v3928 = vmul.f32 %v3912, %v3656
        %v3929 = vmul.f32 %v3913, %v3657
        %v3930 = vmul.f32 %v3914, %v3658
        %v3931 = vmul.f32 %v3915, %v3659
        %v3932 = vmul.f32 %v3916, %v3660
        %v3933 = vmul.f32 %v3917, %v3661
        %v3934 = vmul.f32 %v3918, %v3662
        %v3935 = vmul.f32 %v3919, %v3663
        %v3936 = vmul.f32 %v3920, %v3664
        %v3937 = vmul.f32 %v3921, %v3665
        %v3938 = vmul.f32 %v3922, %v3666
        %v3939 = vmul.f32 %v3923, %v3667
        %v3940 = vmul.f32 %v3924, 1.442695
        %v3941 = vpow.pop %v3940
        %v3942 = vmul.f32 %v3925, 1.442695
        %v3943 = vpow.pop %v3942
        %v3944 = vmul.f32 %v3926, 1.442695
        %v3945 = vpow.pop %v3944
        %v3946 = vmul.f32 %v3927, 1.442695
        %v3947 = vpow.pop %v3946
        %v3948 = vmul.f32 %v3928, 1.442695
        %v3949 = vpow.pop %v3948
        %v3950 = vmul.f32 %v3929, 1.442695
        %v3951 = vpow.pop %v3950
        %v3952 = vmul.f32 %v3930, 1.442695
        %v3953 = vpow.pop %v3952
        %v3954 = vmul.f32 %v3931, 1.442695
        %v3955 = vpow.pop %v3954
        %v3956 = vmul.f32 %v3932, 1.442695
        %v3957 = vpow.pop %v3956
        %v3958 = vmul.f32 %v3933, 1.442695
        %v3959 = vpow.pop %v3958
        %v3960 = vmul.f32 %v3934, 1.442695
        %v3961 = vpow.pop %v3960
        %v3962 = vmul.f32 %v3935, 1.442695
        %v3963 = vpow.pop %v3962
        %v3964 = vmul.f32 %v3936, 1.442695
        %v3965 = vpow.pop %v3964
        %v3966 = vmul.f32 %v3937, 1.442695
        %v3967 = vpow.pop %v3966
        %v3968 = vmul.f32 %v3938, 1.442695
        %v3969 = vpow.pop %v3968
        %v3970 = vmul.f32 %v3939, 1.442695
        %v3971 = vpow.pop %v3970
        %v3972 = vmul.f32 %v3892, %v3941
        %v3973 = vmul.f32 %v3893, %v3943
        %v3974 = vmul.f32 %v3894, %v3945
        %v3975 = vmul.f32 %v3895, %v3947
        %v3976 = vmul.f32 %v3896, %v3949
        %v3977 = vmul.f32 %v3897, %v3951
        %v3978 = vmul.f32 %v3898, %v3953
        %v3979 = vmul.f32 %v3899, %v3955
        %v3980 = vmul.f32 %v3900, %v3957
        %v3981 = vmul.f32 %v3901, %v3959
        %v3982 = vmul.f32 %v3902, %v3961
        %v3983 = vmul.f32 %v3903, %v3963
        %v3984 = vmul.f32 %v3904, %v3965
        %v3985 = vmul.f32 %v3905, %v3967
        %v3986 = vmul.f32 %v3906, %v3969
        %v3987 = vmul.f32 %v3907, %v3971
        %v3988 = vsub.f32 1.0, %v3972
        %v3989 = vsub.f32 1.0, %v3973
        %v3990 = vsub.f32 1.0, %v3974
        %v3991 = vsub.f32 1.0, %v3975
        %v3992 = vsub.f32 1.0, %v3976
        %v3993 = vsub.f32 1.0, %v3977
        %v3994 = vsub.f32 1.0, %v3978
        %v3995 = vsub.f32 1.0, %v3979
        %v3996 = vsub.f32 1.0, %v3980
        %v3997 = vsub.f32 1.0, %v3981
        %v3998 = vsub.f32 1.0, %v3982
        %v3999 = vsub.f32 1.0, %v3983
        %v4000 = vsub.f32 1.0, %v3984
        %v4001 = vsub.f32 1.0, %v3985
        %v4002 = vsub.f32 1.0, %v3986
        %v4003 = vsub.f32 1.0, %v3987
        %vm4004 = vcmp.ge.f32.partialorder %v3636, 0.0
        %vm4005 = vcmp.ge.f32.partialorder %v3637, 0.0
        %vm4006 = vcmp.ge.f32.partialorder %v3638, 0.0
        %vm4007 = vcmp.ge.f32.partialorder %v3639, 0.0
        %vm4008 = vcmp.ge.f32.partialorder %v3640, 0.0
        %vm4009 = vcmp.ge.f32.partialorder %v3641, 0.0
        %vm4010 = vcmp.ge.f32.partialorder %v3642, 0.0
        %vm4011 = vcmp.ge.f32.partialorder %v3643, 0.0
        %vm4012 = vcmp.ge.f32.partialorder %v3644, 0.0
        %vm4013 = vcmp.ge.f32.partialorder %v3645, 0.0
        %vm4014 = vcmp.ge.f32.partialorder %v3646, 0.0
        %vm4015 = vcmp.ge.f32.partialorder %v3647, 0.0
        %vm4016 = vcmp.ge.f32.partialorder %v3648, 0.0
        %vm4017 = vcmp.ge.f32.partialorder %v3649, 0.0
        %vm4018 = vcmp.ge.f32.partialorder %v3650, 0.0
        %vm4019 = vcmp.ge.f32.partialorder %v3651, 0.0
        %v4020 = vsub.f32 0.0, %v3988
        %v4021 = vsub.f32 0.0, %v3989
        %v4022 = vsub.f32 0.0, %v3990
        %v4023 = vsub.f32 0.0, %v3991
        %v4024 = vsub.f32 0.0, %v3992
        %v4025 = vsub.f32 0.0, %v3993
        %v4026 = vsub.f32 0.0, %v3994
        %v4027 = vsub.f32 0.0, %v3995
        %v4028 = vsub.f32 0.0, %v3996
        %v4029 = vsub.f32 0.0, %v3997
        %v4030 = vsub.f32 0.0, %v3998
        %v4031 = vsub.f32 0.0, %v3999
        %v4032 = vsub.f32 0.0, %v4000
        %v4033 = vsub.f32 0.0, %v4001
        %v4034 = vsub.f32 0.0, %v4002
        %v4035 = vsub.f32 0.0, %v4003
        %v4036 = vsel %vm4004, %v3988, %v4020
        %v4037 = vsel %vm4005, %v3989, %v4021
        %v4038 = vsel %vm4006, %v3990, %v4022
        %v4039 = vsel %vm4007, %v3991, %v4023
        %v4040 = vsel %vm4008, %v3992, %v4024
        %v4041 = vsel %vm4009, %v3993, %v4025
        %v4042 = vsel %vm4010, %v3994, %v4026
        %v4043 = vsel %vm4011, %v3995, %v4027
        %v4044 = vsel %vm4012, %v3996, %v4028
        %v4045 = vsel %vm4013, %v3997, %v4029
        %v4046 = vsel %vm4014, %v3998, %v4030
        %v4047 = vsel %vm4015, %v3999, %v4031
        %v4048 = vsel %vm4016, %v4000, %v4032
        %v4049 = vsel %vm4017, %v4001, %v4033
        %v4050 = vsel %vm4018, %v4002, %v4034
        %v4051 = vsel %vm4019, %v4003, %v4035
        %v4052 = vadd.f32 %v4036, 1.0
        %v4053 = vadd.f32 %v4037, 1.0
        %v4054 = vadd.f32 %v4038, 1.0
        %v4055 = vadd.f32 %v4039, 1.0
        %v4056 = vadd.f32 %v4040, 1.0
        %v4057 = vadd.f32 %v4041, 1.0
        %v4058 = vadd.f32 %v4042, 1.0
        %v4059 = vadd.f32 %v4043, 1.0
        %v4060 = vadd.f32 %v4044, 1.0
        %v4061 = vadd.f32 %v4045, 1.0
        %v4062 = vadd.f32 %v4046, 1.0
        %v4063 = vadd.f32 %v4047, 1.0
        %v4064 = vadd.f32 %v4048, 1.0
        %v4065 = vadd.f32 %v4049, 1.0
        %v4066 = vadd.f32 %v4050, 1.0
        %v4067 = vadd.f32 %v4051, 1.0
        %v4068 = vmul.f32 %v3620, %v4052
        %v4069 = vmul.f32 %v3621, %v4053
        %v4070 = vmul.f32 %v3622, %v4054
        %v4071 = vmul.f32 %v3623, %v4055
        %v4072 = vmul.f32 %v3624, %v4056
        %v4073 = vmul.f32 %v3625, %v4057
        %v4074 = vmul.f32 %v3626, %v4058
        %v4075 = vmul.f32 %v3627, %v4059
        %v4076 = vmul.f32 %v3628, %v4060
        %v4077 = vmul.f32 %v3629, %v4061
        %v4078 = vmul.f32 %v3630, %v4062
        %v4079 = vmul.f32 %v3631, %v4063
        %v4080 = vmul.f32 %v3632, %v4064
        %v4081 = vmul.f32 %v3633, %v4065
        %v4082 = vmul.f32 %v3634, %v4066
        %v4083 = vmul.f32 %v3635, %v4067
        %v4084 = vpack.c.bf16 %v4070, %v4068
        %v4085 = vpack.c.bf16 %v4071, %v4069
        %v4086 = vpack.c.bf16 %v4074, %v4072
        %v4087 = vpack.c.bf16 %v4075, %v4073
        %v4088 = vpack.c.bf16 %v4078, %v4076
        %v4089 = vpack.c.bf16 %v4079, %v4077
        %v4090 = vpack.c.bf16 %v4082, %v4080
        %v4091 = vpack.c.bf16 %v4083, %v4081
        %v4092 = vld [vmem:[%s748] sm:$0xf]
        %v4093 = vld [vmem:[%s748 + $0x4] sm:$0xf]
        %v4094 = vld [vmem:[%s748 + $0x8] sm:$0xf]
        %v4095 = vld [vmem:[%s748 + $0xc] sm:$0xf]
        %v4096 = vld [vmem:[%s748 + $0x10] sm:$0xf]
        %v4097 = vld [vmem:[%s748 + $0x14] sm:$0xf]
        %v4098 = vld [vmem:[%s748 + $0x18] sm:$0xf]
        %v4099 = vld [vmem:[%s748 + $0x1c] sm:$0xf]
        %v4100 = vld [vmem:[%s748 + $0x20] sm:$0xf]
        %v4101 = vld [vmem:[%s748 + $0x24] sm:$0xf]
        %v4102 = vld [vmem:[%s748 + $0x28] sm:$0xf]
        %v4103 = vld [vmem:[%s748 + $0x2c] sm:$0xf]
        %v4104 = vld [vmem:[%s748 + $0x30] sm:$0xf]
        %v4105 = vld [vmem:[%s748 + $0x34] sm:$0xf]
        %v4106 = vld [vmem:[%s748 + $0x38] sm:$0xf]
        %v4107 = vld [vmem:[%s748 + $0x3c] sm:$0xf]
        %v4108 = vld [vmem:[%s748 + $0x40] sm:$0xf]
        %v4109 = vld [vmem:[%s748 + $0x44] sm:$0xf]
        %v4110 = vld [vmem:[%s748 + $0x48] sm:$0xf]
        %v4111 = vld [vmem:[%s748 + $0x4c] sm:$0xf]
        %v4112 = vld [vmem:[%s748 + $0x50] sm:$0xf]
        %v4113 = vld [vmem:[%s748 + $0x54] sm:$0xf]
        %v4114 = vld [vmem:[%s748 + $0x58] sm:$0xf]
        %v4115 = vld [vmem:[%s748 + $0x5c] sm:$0xf]
        %v4116 = vld [vmem:[%s748 + $0x60] sm:$0xf]
        %v4117 = vld [vmem:[%s748 + $0x64] sm:$0xf]
        %v4118 = vld [vmem:[%s748 + $0x68] sm:$0xf]
        %v4119 = vld [vmem:[%s748 + $0x6c] sm:$0xf]
        %v4120 = vld [vmem:[%s748 + $0x70] sm:$0xf]
        %v4121 = vld [vmem:[%s748 + $0x74] sm:$0xf]
        %v4122 = vld [vmem:[%s748 + $0x78] sm:$0xf]
        %v4123 = vld [vmem:[%s748 + $0x7c] sm:$0xf]
        %v4124 = vld [vmem:[%s751] sm:$0x1]
        %v4126 = vlaneseq
        %v4127 = vshrl.u32 %v4126, 7
        %v4128 = vsub.s32 0, %v4127
        %v4129 = vrot.slane %v4124, %v4128
        %v4163 = vunpack.c.l.b16 %v4092
        %v4164 = vunpack.c.l.b16 %v4093
        %v4165 = vunpack.c.l.b16 %v4094
        %v4166 = vunpack.c.l.b16 %v4095
        %v4167 = vunpack.c.l.b16 %v4096
        %v4168 = vunpack.c.l.b16 %v4097
        %v4169 = vunpack.c.l.b16 %v4098
        %v4170 = vunpack.c.l.b16 %v4099
        %v4171 = vunpack.c.l.b16 %v4100
        %v4172 = vunpack.c.l.b16 %v4101
        %v4173 = vunpack.c.l.b16 %v4102
        %v4174 = vunpack.c.l.b16 %v4103
        %v4175 = vunpack.c.l.b16 %v4104
        %v4176 = vunpack.c.l.b16 %v4105
        %v4177 = vunpack.c.l.b16 %v4106
        %v4178 = vunpack.c.l.b16 %v4107
        %v4179 = vunpack.c.l.b16 %v4108
        %v4180 = vunpack.c.l.b16 %v4109
        %v4181 = vunpack.c.l.b16 %v4110
        %v4182 = vunpack.c.l.b16 %v4111
        %v4183 = vunpack.c.l.b16 %v4112
        %v4184 = vunpack.c.l.b16 %v4113
        %v4185 = vunpack.c.l.b16 %v4114
        %v4186 = vunpack.c.l.b16 %v4115
        %v4187 = vunpack.c.l.b16 %v4116
        %v4188 = vunpack.c.l.b16 %v4117
        %v4189 = vunpack.c.l.b16 %v4118
        %v4190 = vunpack.c.l.b16 %v4119
        %v4191 = vunpack.c.l.b16 %v4120
        %v4192 = vunpack.c.l.b16 %v4121
        %v4193 = vunpack.c.l.b16 %v4122
        %v4194 = vunpack.c.l.b16 %v4123
        %v4195 = vpack.c.b16 %v4164, %v4163
        %v4196 = vpack.c.b16 %v4166, %v4165
        %v4197 = vpack.c.b16 %v4168, %v4167
        %v4198 = vpack.c.b16 %v4170, %v4169
        %v4199 = vpack.c.b16 %v4172, %v4171
        %v4200 = vpack.c.b16 %v4174, %v4173
        %v4201 = vpack.c.b16 %v4176, %v4175
        %v4202 = vpack.c.b16 %v4178, %v4177
        %v4203 = vpack.c.b16 %v4180, %v4179
        %v4204 = vpack.c.b16 %v4182, %v4181
        %v4205 = vpack.c.b16 %v4184, %v4183
        %v4206 = vpack.c.b16 %v4186, %v4185
        %v4207 = vpack.c.b16 %v4188, %v4187
        %v4208 = vpack.c.b16 %v4190, %v4189
        %v4209 = vpack.c.b16 %v4192, %v4191
        %v4210 = vpack.c.b16 %v4194, %v4193
        %4227 = vmatprep.subr.bf16.mxu0 0
        %4228 = vmatpush1.bf16.msra.mxu0 %v4195
        %4229 = vmatprep.subr.bf16.mxu0 0
        %4230 = vmatpush1.bf16.msra.mxu0 %v4196
        %4231 = vmatprep.subr.bf16.mxu0 0
        %4232 = vmatpush1.bf16.msra.mxu0 %v4197
        %4233 = vmatprep.subr.bf16.mxu0 0
        %4234 = vmatpush1.bf16.msra.mxu0 %v4198
        %4235 = vmatprep.subr.bf16.mxu0 0
        %4236 = vmatpush1.bf16.msra.mxu0 %v4199
        %4237 = vmatprep.subr.bf16.mxu0 0
        %4238 = vmatpush1.bf16.msra.mxu0 %v4200
        %4239 = vmatprep.subr.bf16.mxu0 0
        %4240 = vmatpush1.bf16.msra.mxu0 %v4201
        %4241 = vmatprep.subr.bf16.mxu0 0
        %4242 = vmatpush1.bf16.msra.mxu0 %v4202
        %4243 = vmatprep.subr.bf16.mxu0 0
        %4244 = vmatpush1.bf16.msra.mxu0 %v4203
        %4245 = vmatprep.subr.bf16.mxu0 0
        %4246 = vmatpush1.bf16.msra.mxu0 %v4204
        %4247 = vmatprep.subr.bf16.mxu0 0
        %4248 = vmatpush1.bf16.msra.mxu0 %v4205
        %4249 = vmatprep.subr.bf16.mxu0 0
        %4250 = vmatpush1.bf16.msra.mxu0 %v4206
        %4251 = vmatprep.subr.bf16.mxu0 0
        %4252 = vmatpush1.bf16.msra.mxu0 %v4207
        %4253 = vmatprep.subr.bf16.mxu0 0
        %4254 = vmatpush1.bf16.msra.mxu0 %v4208
        %4255 = vmatprep.subr.bf16.mxu0 0
        %4256 = vmatpush1.bf16.msra.mxu0 %v4209
        %4257 = vmatprep.subr.bf16.mxu0 0
        %4258 = vmatpush1.bf16.msra.mxu0 %v4210
        %4259 = vmatprep.mubr.bf16.mxu0 %v4085
        %4260 = vmatmul.mubr.bf16.gmra.mrb[0].mxu0 %v4084
        %v4261 = vpop.f32.mrb[0].mxu0
        %v4262 = vadd.f32 %v4129, %v4261
        %v4263 = vpop.f32.mrb[0].mxu0
        %v4264 = vpop.f32.mrb[0].mxu0
        %v4265 = vadd.f32 %v4129, %v4264
        %v4266 = vpop.f32.mrb[0].mxu0
        %4267 = vmatprep.mubr.bf16.mxu0 %v4087
        %4268 = vmatmul.mubr.bf16.gmra.mrb[0].mxu0 %v4086
        %v4269 = vpop.f32.mrb[0].mxu0
        %v4270 = vadd.f32 %v4129, %v4269
        %v4271 = vpop.f32.mrb[0].mxu0
        %v4272 = vpop.f32.mrb[0].mxu0
        %v4273 = vadd.f32 %v4129, %v4272
        %v4274 = vpop.f32.mrb[0].mxu0
        %4275 = vmatprep.mubr.bf16.mxu0 %v4089
        %4276 = vmatmul.mubr.bf16.gmra.mrb[0].mxu0 %v4088
        %v4277 = vpop.f32.mrb[0].mxu0
        %v4278 = vadd.f32 %v4129, %v4277
        %v4279 = vpop.f32.mrb[0].mxu0
        %v4280 = vpop.f32.mrb[0].mxu0
        %v4281 = vadd.f32 %v4129, %v4280
        %v4282 = vpop.f32.mrb[0].mxu0
        %4283 = vmatprep.mubr.bf16.mxu0 %v4091
        %4284 = vmatmul.mubr.bf16.gmra.mrb[0].mxu0 %v4090
        %v4285 = vpop.f32.mrb[0].mxu0
        %v4286 = vadd.f32 %v4129, %v4285
        %v4287 = vpop.f32.mrb[0].mxu0
        %v4288 = vpop.f32.mrb[0].mxu0
        %v4289 = vadd.f32 %v4129, %v4288
        %v4290 = vpop.f32.mrb[0].mxu0
        %4291 = vdwg.mxu0
        %v4292 = vadd.f32 %v3359, %v4262
        %v4293 = vadd.f32 %v3360, %v4265
        %v4294 = vadd.f32 %v3361, %v4270
        %v4295 = vadd.f32 %v3362, %v4273
        %v4296 = vadd.f32 %v3363, %v4278
        %v4297 = vadd.f32 %v3364, %v4281
        %v4298 = vadd.f32 %v3365, %v4286
        %v4299 = vadd.f32 %v3366, %v4289
        %4300 = vst.msk [vmem:[#allocation2] sm:$0xff] %vm1807, %v4292
        %4301 = vst.msk [vmem:[#allocation2 + $0x8] sm:$0xff] %vm1807, %v4293
        %4302 = vst.msk [vmem:[#allocation2 + $0x10] sm:$0xff] %vm1807, %v4294
        %4303 = vst.msk [vmem:[#allocation2 + $0x18] sm:$0xff] %vm1807, %v4295
        %4304 = vst.msk [vmem:[#allocation2 + $0x20] sm:$0xff] %vm1807, %v4296
        %4305 = vst.msk [vmem:[#allocation2 + $0x28] sm:$0xff] %vm1807, %v4297
        %4306 = vst.msk [vmem:[#allocation2 + $0x30] sm:$0xff] %vm1807, %v4298
        %4307 = vst.msk [vmem:[#allocation2 + $0x38] sm:$0xff] %vm1807, %v4299
        %p4308 = scmp.eq.s32.totalorder %s34, 1
        // Predicated region
        $region85: #{tmixer_forward.1} parent=79 // pred_check
          %p4309 = pneg %p4308
        $region86: #{tmixer_forward.1} parent=79 // pred_check_branch
          %4311 = sbr.rel (%p4309) target = $region88
        $region87: #{tmixer_forward.1} parent=79 // pred_region
          %4312 = vst.msk [vmem:[%s687] sm:$0xff] %vm1807, %v4292
          %4313 = vst.msk [vmem:[%s687 + $0x8] sm:$0xff] %vm1807, %v4293
          %4314 = vst.msk [vmem:[%s687 + $0x10] sm:$0xff] %vm1807, %v4294
          %4315 = vst.msk [vmem:[%s687 + $0x18] sm:$0xff] %vm1807, %v4295
          %4316 = vst.msk [vmem:[%s687 + $0x20] sm:$0xff] %vm1807, %v4296
          %4317 = vst.msk [vmem:[%s687 + $0x28] sm:$0xff] %vm1807, %v4297
          %4318 = vst.msk [vmem:[%s687 + $0x30] sm:$0xff] %vm1807, %v4298
          %4319 = vst.msk [vmem:[%s687 + $0x38] sm:$0xff] %vm1807, %v4299
        $region88: #{tmixer_forward.1} parent=79 // pred_fallthru
          _
        %s4320 = sand.u32 %s439, 1
        %s4321 = scalar_lea.sflag [#allocation6], %s4320
        %s4322 = sand.u32 %s439, 1
        %s4323 = smul.addr %s4322, 64
        %s4324 = scalar_lea.vmem [#allocation5], %s4323
        // Predicated region
        $region89: #{tmixer_forward.1} parent=79 // pred_check
          %p4325 = pneg %p449
        $region90: #{tmixer_forward.1} parent=79 // pred_check_branch
          %4327 = sbr.rel (%p4325) target = $region92
        $region91: #{tmixer_forward.1} parent=79 // pred_region
          %s4329 = ssub.s32 1024, 1024
          %4330 = vsyncadd %s4321, %s4329
          %s4331 = smul.addr %s33, 8
          %s4332 = smul.addr %s4331, 128
          %s4333 = scalar_lea.hbm %s15, %s4332
          %s4334 = sshll.u32 %s4324, 4
          %s4335 = int_to_ptr.vmem [resolvable:$true] %s4334
          %4340 = dma.vmem_to_hbm [thread:$0]  %s4335, 1024, %s4333, %s4321, 128, 128, 8
        $region92: #{tmixer_forward.1} parent=79 // pred_fallthru
          _
      $region80: #{tmixer_forward.1} parent=5 // pred_fallthru
        _
      %p4341 = scmp.le.s32.totalorder 2, %s24
      // Predicated region
      $region93: #{tmixer_forward.1} parent=5 // pred_check
        %p4342 = pneg %p4341
      $region94: #{tmixer_forward.1} parent=5 // pred_check_branch
        %4344 = sbr.rel (%p4342) target = $region96
      $region95: #{tmixer_forward.1} parent=5 // pred_region
        %s4345 = ssub.s32 %s24, 2
        // Predicated region
        $region97: #{tmixer_forward.1} parent=95 // pred_check
          %p4346 = pneg %p455
        $region98: #{tmixer_forward.1} parent=95 // pred_check_branch
          %4348 = sbr.rel (%p4346) target = $region100
        $region99: #{tmixer_forward.1} parent=95 // pred_region
          %s4349 = sand.u32 %s440, 1
          %s4350 = scalar_lea.sflag [#allocation6], %s4349
          %s4351 = sand.u32 %s440, 1
          %s4352 = smul.addr %s4351, 64
          %s4353 = scalar_lea.vmem [#allocation5], %s4352
          %4354 = dma.done %s4350, 1024
        $region100: #{tmixer_forward.1} parent=95 // pred_fallthru
          _
      $region96: #{tmixer_forward.1} parent=5 // pred_fallthru
        _
    $region6: #{tmixer_forward.1} parent=1 // loop_footer
      %s28 = sadd.s32 1, %s24
    $region7: #{tmixer_forward.1} parent=1 // loop_footer_branch
      %23 = sbr.rel target = $region3
    $region8: #{tmixer_forward.1} parent=1 // loop_exit
      _
    %4355 = vsyncpa [#allocation6], 1
    %s4356 = scalar_lea.sflag [#allocation6], 1
    %4357 = vsyncpa %s4356, 1

</llo_original>
